<compile_context>
chip_gen: v7x
topology: tpu7x:2x2x1
jax: 0.10.0
libtpu: 0.0.40
codegen_flags: <defaults>
</compile_context>

<pallas_src>
import functools

import jax
import jax.numpy as jnp
from jax.experimental import pallas as pl
from jax.experimental.pallas import tpu as pltpu


def _round_up(x, m):
    return (x + m - 1) // m * m


def _choose_tm(m):
    """M-tile size: big enough to amortize per-step overhead, >=2 grid steps when
    there is enough work (lets v7x shard the M axis across its two TensorCores)."""
    mr = _round_up(m, 8)
    if mr <= 512:
        return mr
    if mr <= 4096:
        return 512
    return 1024


# ----------------------------------------------------------------------------
# Pallas kernels
# ----------------------------------------------------------------------------
def _mm_bias_act_kernel(x_ref, w_ref, b_ref, o_ref, *, apply_relu):
    acc = jnp.dot(x_ref[...], w_ref[...], preferred_element_type=jnp.float32)
    acc = acc + b_ref[...]                       # (1, Np) broadcast over rows
    if apply_relu:
        acc = jnp.maximum(acc, 0.0)
    o_ref[...] = acc.astype(o_ref.dtype)


def _conv_pool4_kernel(x0_ref, x1_ref, x2_ref, x3_ref, w_ref, b_ref, o_ref):
    """Fused conv + bias + ReLU + MaxPool2d(2,2): the four inputs are the im2col
    matrices of the four pooling-window corners; one weight tile feeds four dots."""
    w = w_ref[...]
    acc = jnp.dot(x0_ref[...], w, preferred_element_type=jnp.float32)
    acc = jnp.maximum(acc, jnp.dot(x1_ref[...], w, preferred_element_type=jnp.float32))
    acc = jnp.maximum(acc, jnp.dot(x2_ref[...], w, preferred_element_type=jnp.float32))
    acc = jnp.maximum(acc, jnp.dot(x3_ref[...], w, preferred_element_type=jnp.float32))
    acc = jnp.maximum(acc + b_ref[...], 0.0)     # max/ReLU commute; bias shared
    o_ref[...] = acc.astype(o_ref.dtype)


# ----------------------------------------------------------------------------
# Pallas wrappers
# ----------------------------------------------------------------------------
def _pallas_matmul(kernel, xs, wmat, bias, out_dtype):
    """Shared pallas_call builder.  xs: list of (M, K) bf16 activation matrices that
    all share the (K, Np) bf16 weight and (1, Np) f32 bias."""
    M, K = xs[0].shape
    Kp, Np = wmat.shape
    assert K == Kp, (K, Kp)
    tm = _choose_tm(M)
    Mp = _round_up(M, tm)
    if Mp != M:  # pad only the M remainder (K is already 128-aligned for every layer)
        xs = [jnp.pad(x, ((0, Mp - M), (0, 0))) for x in xs]

    x_spec = pl.BlockSpec((tm, Kp), lambda i: (i, 0))
    out = pl.pallas_call(
        kernel,
        out_shape=jax.ShapeDtypeStruct((Mp, Np), out_dtype),
        grid=(Mp // tm,),
        in_specs=[x_spec] * len(xs) + [
            pl.BlockSpec((Kp, Np), lambda i: (0, 0)),   # weight resident across M
            pl.BlockSpec((1, Np), lambda i: (0, 0)),    # bias resident across M
        ],
        out_specs=pl.BlockSpec((tm, Np), lambda i: (i, 0)),
        compiler_params=pltpu.CompilerParams(dimension_semantics=("parallel",)),
    )(*xs, wmat, bias)
    return out  # (Mp, Np); caller slices the valid rows / output channels


def matmul_bias_act(x, wmat, bias, *, apply_relu, out_dtype):
    return _pallas_matmul(
        functools.partial(_mm_bias_act_kernel, apply_relu=apply_relu),
        [x], wmat, bias, out_dtype)


# ----------------------------------------------------------------------------
# im2col + conv layer (NHWC)
# ----------------------------------------------------------------------------
def _im2col_nhwc(x, kh, kw, stride, nh, nw, h0=0, w0=0):
    """(B,H,W,C) -> (B*nh*nw, kh*kw*C).  Patch (i,j) starts at (h0+i*stride,
    w0+j*stride).  K is ordered (kh, kw, C) to match the prepped weight layout."""
    B, H, W, C = x.shape
    pats = []
    for i in range(kh):
        for j in range(kw):
            pats.append(x[:, h0 + i: h0 + i + stride * nh: stride,
                             w0 + j: w0 + j + stride * nw: stride, :])
    p = jnp.stack(pats, axis=3)                  # (B, nh, nw, kh*kw, C)
    return p.reshape(B * nh * nw, kh * kw * C)


def conv2d_relu(x, wmat, bias, kh, kw, stride, out_c, *, fuse_pool2):
    """PyTorch-semantics Conv2d (no padding) + ReLU on NHWC input; optionally fused
    with a following MaxPool2d(2, stride=2)."""
    B, H, W, _ = x.shape
    ho = (H - kh) // stride + 1
    wo = (W - kw) // stride + 1
    if fuse_pool2:
        hp, wp2 = ho // 2, wo // 2
        # pooled(hp,wp) = max over conv positions (2hp+dh, 2wp+dw), dh,dw in {0,1}
        xs = [_im2col_nhwc(x, kh, kw, 2 * stride, hp, wp2, dh * stride, dw * stride)
              for dh in (0, 1) for dw in (0, 1)]
        y = _pallas_matmul(_conv_pool4_kernel, xs, wmat, bias, jnp.bfloat16)
        m = B * hp * wp2
        return y[:m, :out_c].reshape(B, hp, wp2, out_c)
    cols = _im2col_nhwc(x, kh, kw, stride, ho, wo)
    y = matmul_bias_act(cols, wmat, bias, apply_relu=True, out_dtype=jnp.bfloat16)
    m = B * ho * wo
    return y[:m, :out_c].reshape(B, ho, wo, out_c)


# ----------------------------------------------------------------------------
# Parameters (PyTorch layout) + one-time prep
# ----------------------------------------------------------------------------
def init_params(key, n_actions):
    ks = jax.random.split(key, 10)

    def u(k, shape, fan_in):
        bound = 1.0 / float(fan_in) ** 0.5
        return jax.random.uniform(k, shape, jnp.float32, -bound, bound)

    return {
        "c1_w": u(ks[0], (16, 4, 8, 8), 4 * 8 * 8),
        "c1_b": u(ks[1], (16,), 4 * 8 * 8),
        "c2_w": u(ks[2], (32, 16, 4, 4), 16 * 4 * 4),
        "c2_b": u(ks[3], (32,), 16 * 4 * 4),
        "c3_w": u(ks[4], (64, 32, 2, 2), 32 * 2 * 2),
        "c3_b": u(ks[5], (64,), 32 * 2 * 2),
        "l1_w": u(ks[6], (512, 768), 768),
        "l1_b": u(ks[7], (512,), 768),
        "l2_w": u(ks[8], (n_actions, 512), 512),
        "l2_b": u(ks[9], (n_actions,), 512),
    }


def _prep_matmul_weight(w_kn, b_n):
    """(K, N) f32 weight + (N,) bias -> (K, Np) bf16 + (1, Np) f32 (N padded to 128)."""
    K, N = w_kn.shape
    Np = _round_up(N, 128)
    wp = jnp.zeros((K, Np), jnp.bfloat16).at[:, :N].set(w_kn.astype(jnp.bfloat16))
    bp = jnp.zeros((1, Np), jnp.float32).at[0, :N].set(b_n.astype(jnp.float32))
    return wp, bp


def prepare_params(p):
    """One-time weight prep, hoisted out of the forward path: reorder to the
    im2col/NHWC K layout, transpose, cast to bf16, pad the lane (N) dim to 128."""
    out = {}
    for name in ("c1", "c2", "c3"):
        w = p[name + "_w"]                                        # (O, C, kh, kw)
        O, C, kh, kw = w.shape
        w_kn = w.transpose(2, 3, 1, 0).reshape(kh * kw * C, O)    # K ordered (kh,kw,C)
        out[name] = _prep_matmul_weight(w_kn, p[name + "_b"])
    # Linear1 consumes the NHWC flatten (h, w, c); PyTorch flattens NCHW (c, h, w),
    # so permute its input columns once here to preserve exact module semantics.
    l1 = p["l1_w"].reshape(512, 64, 4, 3).transpose(0, 2, 3, 1).reshape(512, 768)
    out["l1"] = _prep_matmul_weight(l1.T, p["l1_b"])
    out["l2"] = _prep_matmul_weight(p["l2_w"].T, p["l2_b"])
    return out


# ----------------------------------------------------------------------------
# DQN forward
# ----------------------------------------------------------------------------
def dqn_forward(prep, x_nchw, n_actions):
    B = x_nchw.shape[0]
    x = x_nchw.astype(jnp.bfloat16).transpose(0, 2, 3, 1)             # NHWC, bf16
    x = conv2d_relu(x, *prep["c1"], 8, 8, 4, 16, fuse_pool2=True)     # (B, 25, 19, 16)
    x = conv2d_relu(x, *prep["c2"], 4, 4, 2, 32, fuse_pool2=True)     # (B, 5, 4, 32)
    x = conv2d_relu(x, *prep["c3"], 2, 2, 1, 64, fuse_pool2=False)    # (B, 4, 3, 64)
    x = x.reshape(B, 4 * 3 * 64)                                      # NHWC flatten
    x = matmul_bias_act(x, *prep["l1"], apply_relu=True,
                        out_dtype=jnp.bfloat16)[:B, :512]             # (B, 512)
    x = matmul_bias_act(x, *prep["l2"], apply_relu=False,
                        out_dtype=jnp.float32)[:B, :n_actions]        # (B, n_actions)
    return x


if __name__ == "__main__":
    N_ACTIONS = 6  # stand-in for env.action_space.n
    key = jax.random.PRNGKey(0)
    pkey, xkey = jax.random.split(key)
    params = init_params(pkey, N_ACTIONS)
    prep = prepare_params(params)          # hoisted: runs once, not per forward
    # 210x160 raw Atari frame with 4 stacked channels; batch = 2.
    x = jax.random.uniform(xkey, (2, 4, 210, 160), jnp.float32)
    fwd = jax.jit(lambda p, xx: dqn_forward(p, xx, N_ACTIONS))
    y = jax.block_until_ready(fwd(prep, x))
    assert y.shape == (2, N_ACTIONS) and y.dtype == jnp.float32
    print("KERNEL_OK")
</pallas_src>

<mosaic_0001>
module attributes {stable_mosaic.version = 11 : i64} {
  func.func @_conv_pool4_kernel(%arg0: i32, %arg1: memref<512x256xbf16, #tpu.memory_space<vmem>>, %arg2: memref<512x256xbf16, #tpu.memory_space<vmem>>, %arg3: memref<512x256xbf16, #tpu.memory_space<vmem>>, %arg4: memref<512x256xbf16, #tpu.memory_space<vmem>>, %arg5: memref<256x128xbf16, #tpu.memory_space<vmem>>, %arg6: memref<1x128xf32, #tpu.memory_space<vmem>>, %arg7: memref<512x128xbf16, #tpu.memory_space<vmem>>) attributes {dimension_semantics = [#tpu.dimension_semantics<parallel>], iteration_bounds = array<i64: 2>, scalar_prefetch = 0 : i64, scratch_operands = 0 : i64, tpu.core_type = #tpu.core_type<tc>, window_params = [{transform_indices = @transform_0, window_bounds = array<i64: 512, 256>}, {transform_indices = @transform_1, window_bounds = array<i64: 512, 256>}, {transform_indices = @transform_2, window_bounds = array<i64: 512, 256>}, {transform_indices = @transform_3, window_bounds = array<i64: 512, 256>}, {pipeline_mode = #tpu.pipeline_mode<synchronous>, transform_indices = @transform_4, window_bounds = array<i64: 256, 128>}, {pipeline_mode = #tpu.pipeline_mode<synchronous>, transform_indices = @transform_5, window_bounds = array<i64: 1, 128>}, {transform_indices = @transform_6, window_bounds = array<i64: 512, 128>}]} {
    %c0 = arith.constant 0 : index
    %c0_0 = arith.constant 0 : index
    %0 = vector.load %arg5[%c0, %c0_0] : memref<256x128xbf16, #tpu.memory_space<vmem>>, vector<256x128xbf16>
    %c0_1 = arith.constant 0 : index
    %c0_2 = arith.constant 0 : index
    %1 = vector.load %arg1[%c0_1, %c0_2] : memref<512x256xbf16, #tpu.memory_space<vmem>>, vector<512x256xbf16>
    %cst = arith.constant dense<0.000000e+00> : vector<512x128xf32>
    %2 = tpu.matmul %1, %0, %cst {dimension_numbers = #tpu.dot_dimension_numbers<[1], [0], [0], [1], [0, 0, 1, 1], [], []>} : vector<512x256xbf16>, vector<256x128xbf16>, vector<512x128xf32> -> vector<512x128xf32>
    %c0_3 = arith.constant 0 : index
    %c0_4 = arith.constant 0 : index
    %3 = vector.load %arg2[%c0_3, %c0_4] : memref<512x256xbf16, #tpu.memory_space<vmem>>, vector<512x256xbf16>
    %cst_5 = arith.constant dense<0.000000e+00> : vector<512x128xf32>
    %4 = tpu.matmul %3, %0, %cst_5 {dimension_numbers = #tpu.dot_dimension_numbers<[1], [0], [0], [1], [0, 0, 1, 1], [], []>} : vector<512x256xbf16>, vector<256x128xbf16>, vector<512x128xf32> -> vector<512x128xf32>
    %5 = arith.maximumf %2, %4 : vector<512x128xf32>
    %c0_6 = arith.constant 0 : index
    %c0_7 = arith.constant 0 : index
    %6 = vector.load %arg3[%c0_6, %c0_7] : memref<512x256xbf16, #tpu.memory_space<vmem>>, vector<512x256xbf16>
    %cst_8 = arith.constant dense<0.000000e+00> : vector<512x128xf32>
    %7 = tpu.matmul %6, %0, %cst_8 {dimension_numbers = #tpu.dot_dimension_numbers<[1], [0], [0], [1], [0, 0, 1, 1], [], []>} : vector<512x256xbf16>, vector<256x128xbf16>, vector<512x128xf32> -> vector<512x128xf32>
    %8 = arith.maximumf %5, %7 : vector<512x128xf32>
    %c0_9 = arith.constant 0 : index
    %c0_10 = arith.constant 0 : index
    %9 = vector.load %arg4[%c0_9, %c0_10] : memref<512x256xbf16, #tpu.memory_space<vmem>>, vector<512x256xbf16>
    %cst_11 = arith.constant dense<0.000000e+00> : vector<512x128xf32>
    %10 = tpu.matmul %9, %0, %cst_11 {dimension_numbers = #tpu.dot_dimension_numbers<[1], [0], [0], [1], [0, 0, 1, 1], [], []>} : vector<512x256xbf16>, vector<256x128xbf16>, vector<512x128xf32> -> vector<512x128xf32>
    %11 = arith.maximumf %8, %10 : vector<512x128xf32>
    %c0_12 = arith.constant 0 : index
    %c0_13 = arith.constant 0 : index
    %12 = vector.load %arg6[%c0_12, %c0_13] : memref<1x128xf32, #tpu.memory_space<vmem>>, vector<1x128xf32>
    %13 = vector.broadcast %12 : vector<1x128xf32> to vector<512x128xf32>
    %14 = arith.addf %11, %13 : vector<512x128xf32>
    %cst_14 = arith.constant 0.000000e+00 : f32
    %15 = vector.broadcast %cst_14 : f32 to vector<512x128xf32>
    %16 = arith.maximumf %14, %15 : vector<512x128xf32>
    %17 = arith.truncf %16 : vector<512x128xf32> to vector<512x128xbf16>
    %c0_15 = arith.constant 0 : index
    %c0_16 = arith.constant 0 : index
    %18 = vector.load %arg7[%c0_15, %c0_16] : memref<512x128xbf16, #tpu.memory_space<vmem>>, vector<512x128xbf16>
    tpu.vector_store %arg7[%c0_15, %c0_16], %17 {strides = array<i32>} : memref<512x128xbf16, #tpu.memory_space<vmem>>, vector<512x128xbf16>,
    return
  }
  func.func @transform_0(%arg0: i32) -> (i32, i32) {
    %c0_i32 = arith.constant 0 : i32
    %c0_i32_0 = arith.constant 0 : i32
    return %arg0, %c0_i32 : i32, i32
  }
  func.func @transform_1(%arg0: i32) -> (i32, i32) {
    %c0_i32 = arith.constant 0 : i32
    %c0_i32_0 = arith.constant 0 : i32
    return %arg0, %c0_i32 : i32, i32
  }
  func.func @transform_2(%arg0: i32) -> (i32, i32) {
    %c0_i32 = arith.constant 0 : i32
    %c0_i32_0 = arith.constant 0 : i32
    return %arg0, %c0_i32 : i32, i32
  }
  func.func @transform_3(%arg0: i32) -> (i32, i32) {
    %c0_i32 = arith.constant 0 : i32
    %c0_i32_0 = arith.constant 0 : i32
    return %arg0, %c0_i32 : i32, i32
  }
  func.func @transform_4(%arg0: i32) -> (i32, i32) {
    %c0_i32 = arith.constant 0 : i32
    %c0_i32_0 = arith.constant 0 : i32
    %c0_i32_1 = arith.constant 0 : i32
    return %c0_i32, %c0_i32_0 : i32, i32
  }
  func.func @transform_5(%arg0: i32) -> (i32, i32) {
    %c0_i32 = arith.constant 0 : i32
    %c0_i32_0 = arith.constant 0 : i32
    %c0_i32_1 = arith.constant 0 : i32
    return %c0_i32, %c0_i32_0 : i32, i32
  }
  func.func @transform_6(%arg0: i32) -> (i32, i32) {
    %c0_i32 = arith.constant 0 : i32
    %c0_i32_0 = arith.constant 0 : i32
    return %arg0, %c0_i32 : i32, i32
  }
}

module attributes {stable_mosaic.version = 11 : i64} {
  func.func @_conv_pool4_kernel(%arg0: i32, %arg1: memref<40x256xbf16, #tpu.memory_space<vmem>>, %arg2: memref<40x256xbf16, #tpu.memory_space<vmem>>, %arg3: memref<40x256xbf16, #tpu.memory_space<vmem>>, %arg4: memref<40x256xbf16, #tpu.memory_space<vmem>>, %arg5: memref<256x128xbf16, #tpu.memory_space<vmem>>, %arg6: memref<1x128xf32, #tpu.memory_space<vmem>>, %arg7: memref<40x128xbf16, #tpu.memory_space<vmem>>) attributes {dimension_semantics = [#tpu.dimension_semantics<parallel>], iteration_bounds = array<i64: 1>, scalar_prefetch = 0 : i64, scratch_operands = 0 : i64, tpu.core_type = #tpu.core_type<tc>, window_params = [{transform_indices = @transform_0, window_bounds = array<i64: 40, 256>}, {transform_indices = @transform_1, window_bounds = array<i64: 40, 256>}, {transform_indices = @transform_2, window_bounds = array<i64: 40, 256>}, {transform_indices = @transform_3, window_bounds = array<i64: 40, 256>}, {pipeline_mode = #tpu.pipeline_mode<synchronous>, transform_indices = @transform_4, window_bounds = array<i64: 256, 128>}, {pipeline_mode = #tpu.pipeline_mode<synchronous>, transform_indices = @transform_5, window_bounds = array<i64: 1, 128>}, {transform_indices = @transform_6, window_bounds = array<i64: 40, 128>}]} {
    %c0 = arith.constant 0 : index
    %c0_0 = arith.constant 0 : index
    %0 = vector.load %arg5[%c0, %c0_0] : memref<256x128xbf16, #tpu.memory_space<vmem>>, vector<256x128xbf16>
    %c0_1 = arith.constant 0 : index
    %c0_2 = arith.constant 0 : index
    %1 = vector.load %arg1[%c0_1, %c0_2] : memref<40x256xbf16, #tpu.memory_space<vmem>>, vector<40x256xbf16>
    %cst = arith.constant dense<0.000000e+00> : vector<40x128xf32>
    %2 = tpu.matmul %1, %0, %cst {dimension_numbers = #tpu.dot_dimension_numbers<[1], [0], [0], [1], [0, 0, 1, 1], [], []>} : vector<40x256xbf16>, vector<256x128xbf16>, vector<40x128xf32> -> vector<40x128xf32>
    %c0_3 = arith.constant 0 : index
    %c0_4 = arith.constant 0 : index
    %3 = vector.load %arg2[%c0_3, %c0_4] : memref<40x256xbf16, #tpu.memory_space<vmem>>, vector<40x256xbf16>
    %cst_5 = arith.constant dense<0.000000e+00> : vector<40x128xf32>
    %4 = tpu.matmul %3, %0, %cst_5 {dimension_numbers = #tpu.dot_dimension_numbers<[1], [0], [0], [1], [0, 0, 1, 1], [], []>} : vector<40x256xbf16>, vector<256x128xbf16>, vector<40x128xf32> -> vector<40x128xf32>
    %5 = arith.maximumf %2, %4 : vector<40x128xf32>
    %c0_6 = arith.constant 0 : index
    %c0_7 = arith.constant 0 : index
    %6 = vector.load %arg3[%c0_6, %c0_7] : memref<40x256xbf16, #tpu.memory_space<vmem>>, vector<40x256xbf16>
    %cst_8 = arith.constant dense<0.000000e+00> : vector<40x128xf32>
    %7 = tpu.matmul %6, %0, %cst_8 {dimension_numbers = #tpu.dot_dimension_numbers<[1], [0], [0], [1], [0, 0, 1, 1], [], []>} : vector<40x256xbf16>, vector<256x128xbf16>, vector<40x128xf32> -> vector<40x128xf32>
    %8 = arith.maximumf %5, %7 : vector<40x128xf32>
    %c0_9 = arith.constant 0 : index
    %c0_10 = arith.constant 0 : index
    %9 = vector.load %arg4[%c0_9, %c0_10] : memref<40x256xbf16, #tpu.memory_space<vmem>>, vector<40x256xbf16>
    %cst_11 = arith.constant dense<0.000000e+00> : vector<40x128xf32>
    %10 = tpu.matmul %9, %0, %cst_11 {dimension_numbers = #tpu.dot_dimension_numbers<[1], [0], [0], [1], [0, 0, 1, 1], [], []>} : vector<40x256xbf16>, vector<256x128xbf16>, vector<40x128xf32> -> vector<40x128xf32>
    %11 = arith.maximumf %8, %10 : vector<40x128xf32>
    %c0_12 = arith.constant 0 : index
    %c0_13 = arith.constant 0 : index
    %12 = vector.load %arg6[%c0_12, %c0_13] : memref<1x128xf32, #tpu.memory_space<vmem>>, vector<1x128xf32>
    %13 = vector.broadcast %12 : vector<1x128xf32> to vector<40x128xf32>
    %14 = arith.addf %11, %13 : vector<40x128xf32>
    %cst_14 = arith.constant 0.000000e+00 : f32
    %15 = vector.broadcast %cst_14 : f32 to vector<40x128xf32>
    %16 = arith.maximumf %14, %15 : vector<40x128xf32>
    %17 = arith.truncf %16 : vector<40x128xf32> to vector<40x128xbf16>
    %c0_15 = arith.constant 0 : index
    %c0_16 = arith.constant 0 : index
    %18 = vector.load %arg7[%c0_15, %c0_16] : memref<40x128xbf16, #tpu.memory_space<vmem>>, vector<40x128xbf16>
    tpu.vector_store %arg7[%c0_15, %c0_16], %17 {strides = array<i32>} : memref<40x128xbf16, #tpu.memory_space<vmem>>, vector<40x128xbf16>,
    return
  }
  func.func @transform_0(%arg0: i32) -> (i32, i32) {
    %c0_i32 = arith.constant 0 : i32
    %c0_i32_0 = arith.constant 0 : i32
    return %arg0, %c0_i32 : i32, i32
  }
  func.func @transform_1(%arg0: i32) -> (i32, i32) {
    %c0_i32 = arith.constant 0 : i32
    %c0_i32_0 = arith.constant 0 : i32
    return %arg0, %c0_i32 : i32, i32
  }
  func.func @transform_2(%arg0: i32) -> (i32, i32) {
    %c0_i32 = arith.constant 0 : i32
    %c0_i32_0 = arith.constant 0 : i32
    return %arg0, %c0_i32 : i32, i32
  }
  func.func @transform_3(%arg0: i32) -> (i32, i32) {
    %c0_i32 = arith.constant 0 : i32
    %c0_i32_0 = arith.constant 0 : i32
    return %arg0, %c0_i32 : i32, i32
  }
  func.func @transform_4(%arg0: i32) -> (i32, i32) {
    %c0_i32 = arith.constant 0 : i32
    %c0_i32_0 = arith.constant 0 : i32
    %c0_i32_1 = arith.constant 0 : i32
    return %c0_i32, %c0_i32_0 : i32, i32
  }
  func.func @transform_5(%arg0: i32) -> (i32, i32) {
    %c0_i32 = arith.constant 0 : i32
    %c0_i32_0 = arith.constant 0 : i32
    %c0_i32_1 = arith.constant 0 : i32
    return %c0_i32, %c0_i32_0 : i32, i32
  }
  func.func @transform_6(%arg0: i32) -> (i32, i32) {
    %c0_i32 = arith.constant 0 : i32
    %c0_i32_0 = arith.constant 0 : i32
    return %arg0, %c0_i32 : i32, i32
  }
}

module attributes {stable_mosaic.version = 11 : i64} {
  func.func @_mm_bias_act_kernel(%arg0: i32, %arg1: memref<24x128xbf16, #tpu.memory_space<vmem>>, %arg2: memref<128x128xbf16, #tpu.memory_space<vmem>>, %arg3: memref<1x128xf32, #tpu.memory_space<vmem>>, %arg4: memref<24x128xbf16, #tpu.memory_space<vmem>>) attributes {dimension_semantics = [#tpu.dimension_semantics<parallel>], iteration_bounds = array<i64: 1>, scalar_prefetch = 0 : i64, scratch_operands = 0 : i64, tpu.core_type = #tpu.core_type<tc>, window_params = [{transform_indices = @transform_0, window_bounds = array<i64: 24, 128>}, {pipeline_mode = #tpu.pipeline_mode<synchronous>, transform_indices = @transform_1, window_bounds = array<i64: 128, 128>}, {pipeline_mode = #tpu.pipeline_mode<synchronous>, transform_indices = @transform_2, window_bounds = array<i64: 1, 128>}, {transform_indices = @transform_3, window_bounds = array<i64: 24, 128>}]} {
    %c0 = arith.constant 0 : index
    %c0_0 = arith.constant 0 : index
    %0 = vector.load %arg1[%c0, %c0_0] : memref<24x128xbf16, #tpu.memory_space<vmem>>, vector<24x128xbf16>
    %c0_1 = arith.constant 0 : index
    %c0_2 = arith.constant 0 : index
    %1 = vector.load %arg2[%c0_1, %c0_2] : memref<128x128xbf16, #tpu.memory_space<vmem>>, vector<128x128xbf16>
    %cst = arith.constant dense<0.000000e+00> : vector<24x128xf32>
    %2 = tpu.matmul %0, %1, %cst {dimension_numbers = #tpu.dot_dimension_numbers<[1], [0], [0], [1], [0, 0, 1, 1], [], []>} : vector<24x128xbf16>, vector<128x128xbf16>, vector<24x128xf32> -> vector<24x128xf32>
    %c0_3 = arith.constant 0 : index
    %c0_4 = arith.constant 0 : index
    %3 = vector.load %arg3[%c0_3, %c0_4] : memref<1x128xf32, #tpu.memory_space<vmem>>, vector<1x128xf32>
    %4 = vector.broadcast %3 : vector<1x128xf32> to vector<24x128xf32>
    %5 = arith.addf %2, %4 : vector<24x128xf32>
    %cst_5 = arith.constant 0.000000e+00 : f32
    %6 = vector.broadcast %cst_5 : f32 to vector<24x128xf32>
    %7 = arith.maximumf %5, %6 : vector<24x128xf32>
    %8 = arith.truncf %7 : vector<24x128xf32> to vector<24x128xbf16>
    %c0_6 = arith.constant 0 : index
    %c0_7 = arith.constant 0 : index
    %9 = vector.load %arg4[%c0_6, %c0_7] : memref<24x128xbf16, #tpu.memory_space<vmem>>, vector<24x128xbf16>
    tpu.vector_store %arg4[%c0_6, %c0_7], %8 {strides = array<i32>} : memref<24x128xbf16, #tpu.memory_space<vmem>>, vector<24x128xbf16>,
    return
  }
  func.func @transform_0(%arg0: i32) -> (i32, i32) {
    %c0_i32 = arith.constant 0 : i32
    %c0_i32_0 = arith.constant 0 : i32
    return %arg0, %c0_i32 : i32, i32
  }
  func.func @transform_1(%arg0: i32) -> (i32, i32) {
    %c0_i32 = arith.constant 0 : i32
    %c0_i32_0 = arith.constant 0 : i32
    %c0_i32_1 = arith.constant 0 : i32
    return %c0_i32, %c0_i32_0 : i32, i32
  }
  func.func @transform_2(%arg0: i32) -> (i32, i32) {
    %c0_i32 = arith.constant 0 : i32
    %c0_i32_0 = arith.constant 0 : i32
    %c0_i32_1 = arith.constant 0 : i32
    return %c0_i32, %c0_i32_0 : i32, i32
  }
  func.func @transform_3(%arg0: i32) -> (i32, i32) {
    %c0_i32 = arith.constant 0 : i32
    %c0_i32_0 = arith.constant 0 : i32
    return %arg0, %c0_i32 : i32, i32
  }
}

module attributes {stable_mosaic.version = 11 : i64} {
  func.func @_mm_bias_act_kernel(%arg0: i32, %arg1: memref<8x768xbf16, #tpu.memory_space<vmem>>, %arg2: memref<768x512xbf16, #tpu.memory_space<vmem>>, %arg3: memref<1x512xf32, #tpu.memory_space<vmem>>, %arg4: memref<8x512xbf16, #tpu.memory_space<vmem>>) attributes {dimension_semantics = [#tpu.dimension_semantics<parallel>], iteration_bounds = array<i64: 1>, scalar_prefetch = 0 : i64, scratch_operands = 0 : i64, tpu.core_type = #tpu.core_type<tc>, window_params = [{transform_indices = @transform_0, window_bounds = array<i64: 8, 768>}, {pipeline_mode = #tpu.pipeline_mode<synchronous>, transform_indices = @transform_1, window_bounds = array<i64: 768, 512>}, {pipeline_mode = #tpu.pipeline_mode<synchronous>, transform_indices = @transform_2, window_bounds = array<i64: 1, 512>}, {transform_indices = @transform_3, window_bounds = array<i64: 8, 512>}]} {
    %c0 = arith.constant 0 : index
    %c0_0 = arith.constant 0 : index
    %0 = vector.load %arg1[%c0, %c0_0] : memref<8x768xbf16, #tpu.memory_space<vmem>>, vector<8x768xbf16>
    %c0_1 = arith.constant 0 : index
    %c0_2 = arith.constant 0 : index
    %1 = vector.load %arg2[%c0_1, %c0_2] : memref<768x512xbf16, #tpu.memory_space<vmem>>, vector<768x512xbf16>
    %cst = arith.constant dense<0.000000e+00> : vector<8x512xf32>
    %2 = tpu.matmul %0, %1, %cst {dimension_numbers = #tpu.dot_dimension_numbers<[1], [0], [0], [1], [0, 0, 1, 1], [], []>} : vector<8x768xbf16>, vector<768x512xbf16>, vector<8x512xf32> -> vector<8x512xf32>
    %c0_3 = arith.constant 0 : index
    %c0_4 = arith.constant 0 : index
    %3 = vector.load %arg3[%c0_3, %c0_4] : memref<1x512xf32, #tpu.memory_space<vmem>>, vector<1x512xf32>
    %4 = vector.broadcast %3 : vector<1x512xf32> to vector<8x512xf32>
    %5 = arith.addf %2, %4 : vector<8x512xf32>
    %cst_5 = arith.constant 0.000000e+00 : f32
    %6 = vector.broadcast %cst_5 : f32 to vector<8x512xf32>
    %7 = arith.maximumf %5, %6 : vector<8x512xf32>
    %8 = arith.truncf %7 : vector<8x512xf32> to vector<8x512xbf16>
    %c0_6 = arith.constant 0 : index
    %c0_7 = arith.constant 0 : index
    %9 = vector.load %arg4[%c0_6, %c0_7] : memref<8x512xbf16, #tpu.memory_space<vmem>>, vector<8x512xbf16>
    tpu.vector_store %arg4[%c0_6, %c0_7], %8 {strides = array<i32>} : memref<8x512xbf16, #tpu.memory_space<vmem>>, vector<8x512xbf16>,
    return
  }
  func.func @transform_0(%arg0: i32) -> (i32, i32) {
    %c0_i32 = arith.constant 0 : i32
    %c0_i32_0 = arith.constant 0 : i32
    return %arg0, %c0_i32 : i32, i32
  }
  func.func @transform_1(%arg0: i32) -> (i32, i32) {
    %c0_i32 = arith.constant 0 : i32
    %c0_i32_0 = arith.constant 0 : i32
    %c0_i32_1 = arith.constant 0 : i32
    return %c0_i32, %c0_i32_0 : i32, i32
  }
  func.func @transform_2(%arg0: i32) -> (i32, i32) {
    %c0_i32 = arith.constant 0 : i32
    %c0_i32_0 = arith.constant 0 : i32
    %c0_i32_1 = arith.constant 0 : i32
    return %c0_i32, %c0_i32_0 : i32, i32
  }
  func.func @transform_3(%arg0: i32) -> (i32, i32) {
    %c0_i32 = arith.constant 0 : i32
    %c0_i32_0 = arith.constant 0 : i32
    return %arg0, %c0_i32 : i32, i32
  }
}

module attributes {stable_mosaic.version = 11 : i64} {
  func.func @_mm_bias_act_kernel(%arg0: i32, %arg1: memref<8x512xbf16, #tpu.memory_space<vmem>>, %arg2: memref<512x128xbf16, #tpu.memory_space<vmem>>, %arg3: memref<1x128xf32, #tpu.memory_space<vmem>>, %arg4: memref<8x128xf32, #tpu.memory_space<vmem>>) attributes {dimension_semantics = [#tpu.dimension_semantics<parallel>], iteration_bounds = array<i64: 1>, scalar_prefetch = 0 : i64, scratch_operands = 0 : i64, tpu.core_type = #tpu.core_type<tc>, window_params = [{transform_indices = @transform_0, window_bounds = array<i64: 8, 512>}, {pipeline_mode = #tpu.pipeline_mode<synchronous>, transform_indices = @transform_1, window_bounds = array<i64: 512, 128>}, {pipeline_mode = #tpu.pipeline_mode<synchronous>, transform_indices = @transform_2, window_bounds = array<i64: 1, 128>}, {transform_indices = @transform_3, window_bounds = array<i64: 8, 128>}]} {
    %c0 = arith.constant 0 : index
    %c0_0 = arith.constant 0 : index
    %0 = vector.load %arg1[%c0, %c0_0] : memref<8x512xbf16, #tpu.memory_space<vmem>>, vector<8x512xbf16>
    %c0_1 = arith.constant 0 : index
    %c0_2 = arith.constant 0 : index
    %1 = vector.load %arg2[%c0_1, %c0_2] : memref<512x128xbf16, #tpu.memory_space<vmem>>, vector<512x128xbf16>
    %cst = arith.constant dense<0.000000e+00> : vector<8x128xf32>
    %2 = tpu.matmul %0, %1, %cst {dimension_numbers = #tpu.dot_dimension_numbers<[1], [0], [0], [1], [0, 0, 1, 1], [], []>} : vector<8x512xbf16>, vector<512x128xbf16>, vector<8x128xf32> -> vector<8x128xf32>
    %c0_3 = arith.constant 0 : index
    %c0_4 = arith.constant 0 : index
    %3 = vector.load %arg3[%c0_3, %c0_4] : memref<1x128xf32, #tpu.memory_space<vmem>>, vector<1x128xf32>
    %4 = vector.broadcast %3 : vector<1x128xf32> to vector<8x128xf32>
    %5 = arith.addf %2, %4 : vector<8x128xf32>
    %c0_5 = arith.constant 0 : index
    %c0_6 = arith.constant 0 : index
    %6 = vector.load %arg4[%c0_5, %c0_6] : memref<8x128xf32, #tpu.memory_space<vmem>>, vector<8x128xf32>
    tpu.vector_store %arg4[%c0_5, %c0_6], %5 {strides = array<i32>} : memref<8x128xf32, #tpu.memory_space<vmem>>, vector<8x128xf32>,
    return
  }
  func.func @transform_0(%arg0: i32) -> (i32, i32) {
    %c0_i32 = arith.constant 0 : i32
    %c0_i32_0 = arith.constant 0 : i32
    return %arg0, %c0_i32 : i32, i32
  }
  func.func @transform_1(%arg0: i32) -> (i32, i32) {
    %c0_i32 = arith.constant 0 : i32
    %c0_i32_0 = arith.constant 0 : i32
    %c0_i32_1 = arith.constant 0 : i32
    return %c0_i32, %c0_i32_0 : i32, i32
  }
  func.func @transform_2(%arg0: i32) -> (i32, i32) {
    %c0_i32 = arith.constant 0 : i32
    %c0_i32_0 = arith.constant 0 : i32
    %c0_i32_1 = arith.constant 0 : i32
    return %c0_i32, %c0_i32_0 : i32, i32
  }
  func.func @transform_3(%arg0: i32) -> (i32, i32) {
    %c0_i32 = arith.constant 0 : i32
    %c0_i32_0 = arith.constant 0 : i32
    return %arg0, %c0_i32 : i32, i32
  }
}

</mosaic_0001>

<llo_original>
// kernel: _lambda_.5
$region0: #{_lambda_.5}
  #allocation0 [shape = 'u32[]', space=smem, size = 0x4, offset = 0x4, fixed_abs, tag = 'smem constant byte address 0x4 - core index']
  #allocation1 [shape = 'u32[144,128]{1,0:T(1,128)}', space=vmem, size = 0x12000, scoped, tag = 'internal scratch']
  %s0 = inlined_call_operand.vmem [shape: bf16[1024,256], index: 0, kind: input, shape index: {}]
  %s1 = inlined_call_operand.vmem [shape: bf16[1024,256], index: 1, kind: input, shape index: {}]
  %s2 = inlined_call_operand.vmem [shape: bf16[1024,256], index: 2, kind: input, shape index: {}]
  %s3 = inlined_call_operand.vmem [shape: bf16[1024,256], index: 3, kind: input, shape index: {}]
  %s4 = inlined_call_operand.vmem [shape: bf16[256,128], index: 4, kind: input, shape index: {}]
  %s5 = inlined_call_operand.vmem [shape: f32[1,128], index: 5, kind: input, shape index: {}]
  %s6 = inlined_call_operand.vmem [shape: bf16[1024,128], index: 6, kind: output, shape index: {}]
  %s7 = sld [smem:[#allocation0]]
  $region57: #{_lambda_.5} parent=0
    _
  %s9 = ssub.s32 1, %s7
  %s10 = scalar_select 0, %s9, %s7
  loop: start=0, step=1, limit=4
  $region2: #{_lambda_.5} parent=0 // loop_pre_header
    _
  $region3: #{_lambda_.5} parent=0 // loop_header
    %s12 = sphi 0, %s16
    %p13 = scmp.ge.s32.totalorder %s12, 4
    %s22 = sphi 0, %s24
    %s25 = sphi 0, %s22
    %s26 = sphi 0, %s25
    %s42 = sphi 0, %s26
    %s48 = sphi 0, %s50
    %s51 = sphi 0, %s48
    %s52 = sphi 0, %s51
    %s68 = sphi 0, %s52
    %s74 = sphi 0, %s76
    %s77 = sphi 0, %s74
    %s78 = sphi 0, %s77
    %s94 = sphi 0, %s78
    %s100 = sphi 0, %s102
    %s103 = sphi 0, %s100
    %s104 = sphi 0, %s103
    %s120 = sphi 0, %s104
    %s124 = sphi 0, %s124
    %s126 = sphi 0, %s124
    %s127 = sphi 0, %s126
    %s141 = sphi 0, %s127
    %s145 = sphi 0, %s145
    %s147 = sphi 0, %s145
    %s148 = sphi 0, %s147
    %s162 = sphi 0, %s148
    %s168 = sphi 0, %s170
    %s171 = sphi 0, %s168
    %s172 = sphi 0, %s171
    %s188 = sphi 0, %s172
  $region4: #{_lambda_.5} parent=0 // loop_header_branch
    %15 = sbr.rel (%p13) target = $region8
  $region5: #{_lambda_.5} parent=0 // loop_body
    %s17 = ssub.s32 %s12, 1
    %s18 = ssub.s32 %s12, 2
    %s19 = sadd.s32 %s12, 1
    %s20 = ssub.s32 %s12, %s19
    %p21 = scmp.eq.s32.totalorder %s20, 0
    %s23 = sadd.s32 %s22, 1
    %s24 = scalar_select %p21, %s22, %s23
    %p27 = pneg %p21
    %p28 = scmp.eq.s32.totalorder %s12, 1
    %p29 = por %p27, %p28
    %p30 = scmp.ne.s32.totalorder %s22, %s25
    %p31 = scmp.eq.s32.totalorder %s12, 0
    %p32 = por %p30, %p31
    %p33 = scmp.ne.s32.totalorder %s22, %s25
    %p34 = scmp.eq.s32.totalorder %s17, 1
    %p35 = por %p33, %p34
    %p36 = scmp.ne.s32.totalorder %s25, %s26
    %p37 = scmp.eq.s32.totalorder %s17, 0
    %p38 = por %p36, %p37
    %p39 = scmp.ne.s32.totalorder %s25, %s26
    %p40 = scmp.eq.s32.totalorder %s18, 1
    %p41 = por %p39, %p40
    %p43 = scmp.ne.s32.totalorder %s26, %s42
    %p44 = scmp.eq.s32.totalorder %s18, 0
    %p45 = por %p43, %p44
    %s46 = ssub.s32 %s12, %s19
    %p47 = scmp.eq.s32.totalorder %s46, 0
    %s49 = sadd.s32 %s48, 1
    %s50 = scalar_select %p47, %s48, %s49
    %p53 = pneg %p47
    %p54 = scmp.eq.s32.totalorder %s12, 1
    %p55 = por %p53, %p54
    %p56 = scmp.ne.s32.totalorder %s48, %s51
    %p57 = scmp.eq.s32.totalorder %s12, 0
    %p58 = por %p56, %p57
    %p59 = scmp.ne.s32.totalorder %s48, %s51
    %p60 = scmp.eq.s32.totalorder %s17, 1
    %p61 = por %p59, %p60
    %p62 = scmp.ne.s32.totalorder %s51, %s52
    %p63 = scmp.eq.s32.totalorder %s17, 0
    %p64 = por %p62, %p63
    %p65 = scmp.ne.s32.totalorder %s51, %s52
    %p66 = scmp.eq.s32.totalorder %s18, 1
    %p67 = por %p65, %p66
    %p69 = scmp.ne.s32.totalorder %s52, %s68
    %p70 = scmp.eq.s32.totalorder %s18, 0
    %p71 = por %p69, %p70
    %s72 = ssub.s32 %s12, %s19
    %p73 = scmp.eq.s32.totalorder %s72, 0
    %s75 = sadd.s32 %s74, 1
    %s76 = scalar_select %p73, %s74, %s75
    %p79 = pneg %p73
    %p80 = scmp.eq.s32.totalorder %s12, 1
    %p81 = por %p79, %p80
    %p82 = scmp.ne.s32.totalorder %s74, %s77
    %p83 = scmp.eq.s32.totalorder %s12, 0
    %p84 = por %p82, %p83
    %p85 = scmp.ne.s32.totalorder %s74, %s77
    %p86 = scmp.eq.s32.totalorder %s17, 1
    %p87 = por %p85, %p86
    %p88 = scmp.ne.s32.totalorder %s77, %s78
    %p89 = scmp.eq.s32.totalorder %s17, 0
    %p90 = por %p88, %p89
    %p91 = scmp.ne.s32.totalorder %s77, %s78
    %p92 = scmp.eq.s32.totalorder %s18, 1
    %p93 = por %p91, %p92
    %p95 = scmp.ne.s32.totalorder %s78, %s94
    %p96 = scmp.eq.s32.totalorder %s18, 0
    %p97 = por %p95, %p96
    %s98 = ssub.s32 %s12, %s19
    %p99 = scmp.eq.s32.totalorder %s98, 0
    %s101 = sadd.s32 %s100, 1
    %s102 = scalar_select %p99, %s100, %s101
    %p105 = pneg %p99
    %p106 = scmp.eq.s32.totalorder %s12, 1
    %p107 = por %p105, %p106
    %p108 = scmp.ne.s32.totalorder %s100, %s103
    %p109 = scmp.eq.s32.totalorder %s12, 0
    %p110 = por %p108, %p109
    %p111 = scmp.ne.s32.totalorder %s100, %s103
    %p112 = scmp.eq.s32.totalorder %s17, 1
    %p113 = por %p111, %p112
    %p114 = scmp.ne.s32.totalorder %s103, %s104
    %p115 = scmp.eq.s32.totalorder %s17, 0
    %p116 = por %p114, %p115
    %p117 = scmp.ne.s32.totalorder %s103, %s104
    %p118 = scmp.eq.s32.totalorder %s18, 1
    %p119 = por %p117, %p118
    %p121 = scmp.ne.s32.totalorder %s104, %s120
    %p122 = scmp.eq.s32.totalorder %s18, 0
    %p123 = por %p121, %p122
    %s125 = sadd.s32 %s124, 1
    %p128 = scmp.eq.s32.totalorder %s12, 1
    %p129 = scmp.ne.s32.totalorder %s124, %s126
    %p130 = scmp.eq.s32.totalorder %s12, 0
    %p131 = por %p129, %p130
    %p132 = scmp.ne.s32.totalorder %s124, %s126
    %p133 = scmp.eq.s32.totalorder %s17, 1
    %p134 = por %p132, %p133
    %p135 = scmp.ne.s32.totalorder %s126, %s127
    %p136 = scmp.eq.s32.totalorder %s17, 0
    %p137 = por %p135, %p136
    %p138 = scmp.ne.s32.totalorder %s126, %s127
    %p139 = scmp.eq.s32.totalorder %s18, 1
    %p140 = por %p138, %p139
    %p142 = scmp.ne.s32.totalorder %s127, %s141
    %p143 = scmp.eq.s32.totalorder %s18, 0
    %p144 = por %p142, %p143
    %s146 = sadd.s32 %s145, 1
    %p149 = scmp.eq.s32.totalorder %s12, 1
    %p150 = scmp.ne.s32.totalorder %s145, %s147
    %p151 = scmp.eq.s32.totalorder %s12, 0
    %p152 = por %p150, %p151
    %p153 = scmp.ne.s32.totalorder %s145, %s147
    %p154 = scmp.eq.s32.totalorder %s17, 1
    %p155 = por %p153, %p154
    %p156 = scmp.ne.s32.totalorder %s147, %s148
    %p157 = scmp.eq.s32.totalorder %s17, 0
    %p158 = por %p156, %p157
    %p159 = scmp.ne.s32.totalorder %s147, %s148
    %p160 = scmp.eq.s32.totalorder %s18, 1
    %p161 = por %p159, %p160
    %p163 = scmp.ne.s32.totalorder %s148, %s162
    %p164 = scmp.eq.s32.totalorder %s18, 0
    %p165 = por %p163, %p164
    %s166 = ssub.s32 %s12, %s19
    %p167 = scmp.eq.s32.totalorder %s166, 0
    %s169 = sadd.s32 %s168, 1
    %s170 = scalar_select %p167, %s168, %s169
    %p173 = pneg %p167
    %p174 = scmp.eq.s32.totalorder %s12, 1
    %p175 = por %p173, %p174
    %p176 = scmp.ne.s32.totalorder %s168, %s171
    %p177 = scmp.eq.s32.totalorder %s12, 0
    %p178 = por %p176, %p177
    %p179 = scmp.ne.s32.totalorder %s168, %s171
    %p180 = scmp.eq.s32.totalorder %s17, 1
    %p181 = por %p179, %p180
    %p182 = scmp.ne.s32.totalorder %s171, %s172
    %p183 = scmp.eq.s32.totalorder %s17, 0
    %p184 = por %p182, %p183
    %p185 = scmp.ne.s32.totalorder %s171, %s172
    %p186 = scmp.eq.s32.totalorder %s18, 1
    %p187 = por %p185, %p186
    %p189 = scmp.ne.s32.totalorder %s172, %s188
    %p190 = scmp.eq.s32.totalorder %s18, 0
    %p191 = por %p189, %p190
    %p192 = scmp.le.s32.totalorder 1, %s12
    %p193 = scmp.lt.s32.totalorder %s12, 3
    %p194 = pnand %p192, %p193
    %p195 = pneg %p194
    // Predicated region
    $region9: #{_lambda_.5} parent=5 // pred_check
      _
    $region10: #{_lambda_.5} parent=5 // pred_check_branch
      %197 = sbr.rel (%p194) target = $region12
    $region11: #{_lambda_.5} parent=5 // pred_region
      %s198 = ssub.s32 %s12, 1
      // Predicated region
      $region13: #{_lambda_.5} parent=11 // pred_check
        %p199 = pneg %p137
      $region14: #{_lambda_.5} parent=11 // pred_check_branch
        %201 = sbr.rel (%p199) target = $region16
      $region15: #{_lambda_.5} parent=11 // pred_region
        _
      $region16: #{_lambda_.5} parent=11 // pred_fallthru
        _
      // Predicated region
      $region17: #{_lambda_.5} parent=11 // pred_check
        %p202 = pneg %p158
      $region18: #{_lambda_.5} parent=11 // pred_check_branch
        %204 = sbr.rel (%p202) target = $region20
      $region19: #{_lambda_.5} parent=11 // pred_region
        _
      $region20: #{_lambda_.5} parent=11 // pred_fallthru
        _
    $region12: #{_lambda_.5} parent=5 // pred_fallthru
      _
    %p205 = scmp.lt.s32.totalorder %s12, 2
    // Predicated region
    $region21: #{_lambda_.5} parent=5 // pred_check
      %p206 = pneg %p205
    $region22: #{_lambda_.5} parent=5 // pred_check_branch
      %208 = sbr.rel (%p206) target = $region24
    $region23: #{_lambda_.5} parent=5 // pred_region
      // Predicated region
      $region25: #{_lambda_.5} parent=23 // pred_check
        %p209 = pneg %p32
      $region26: #{_lambda_.5} parent=23 // pred_check_branch
        %211 = sbr.rel (%p209) target = $region28
      $region27: #{_lambda_.5} parent=23 // pred_region
        %s212 = smul.u32 64, %s12
        %p213 = scmp.lt.s32.totalorder %s212, 127
        %s214 = scalar_select %p213, %s212, 127
        %s215 = smul.addr %s214, 2
        %s216 = smul.addr %s215, 4
        %s217 = scalar_lea.vmem %s0, %s216
        %s218 = smul.u32 64, %s12
      $region28: #{_lambda_.5} parent=23 // pred_fallthru
        _
      // Predicated region
      $region29: #{_lambda_.5} parent=23 // pred_check
        %p219 = pneg %p58
      $region30: #{_lambda_.5} parent=23 // pred_check_branch
        %221 = sbr.rel (%p219) target = $region32
      $region31: #{_lambda_.5} parent=23 // pred_region
        %s222 = smul.u32 64, %s12
        %p223 = scmp.lt.s32.totalorder %s222, 127
        %s224 = scalar_select %p223, %s222, 127
        %s225 = smul.addr %s224, 2
        %s226 = smul.addr %s225, 4
        %s227 = scalar_lea.vmem %s1, %s226
        %s228 = smul.u32 64, %s12
      $region32: #{_lambda_.5} parent=23 // pred_fallthru
        _
      // Predicated region
      $region33: #{_lambda_.5} parent=23 // pred_check
        %p229 = pneg %p84
      $region34: #{_lambda_.5} parent=23 // pred_check_branch
        %231 = sbr.rel (%p229) target = $region36
      $region35: #{_lambda_.5} parent=23 // pred_region
        %s232 = smul.u32 64, %s12
        %p233 = scmp.lt.s32.totalorder %s232, 127
        %s234 = scalar_select %p233, %s232, 127
        %s235 = smul.addr %s234, 2
        %s236 = smul.addr %s235, 4
        %s237 = scalar_lea.vmem %s2, %s236
        %s238 = smul.u32 64, %s12
      $region36: #{_lambda_.5} parent=23 // pred_fallthru
        _
      // Predicated region
      $region37: #{_lambda_.5} parent=23 // pred_check
        %p239 = pneg %p110
      $region38: #{_lambda_.5} parent=23 // pred_check_branch
        %241 = sbr.rel (%p239) target = $region40
      $region39: #{_lambda_.5} parent=23 // pred_region
        %s242 = smul.u32 64, %s12
        %p243 = scmp.lt.s32.totalorder %s242, 127
        %s244 = scalar_select %p243, %s242, 127
        %s245 = smul.addr %s244, 2
        %s246 = smul.addr %s245, 4
        %s247 = scalar_lea.vmem %s3, %s246
        %s248 = smul.u32 64, %s12
      $region40: #{_lambda_.5} parent=23 // pred_fallthru
        _
    $region24: #{_lambda_.5} parent=5 // pred_fallthru
      _
    %p249 = scmp.le.s32.totalorder 1, %s12
    %p250 = scmp.lt.s32.totalorder %s12, 3
    %p251 = pnand %p249, %p250
    %p252 = pneg %p251
    // Predicated region
    $region41: #{_lambda_.5} parent=5 // pred_check
      _
    $region42: #{_lambda_.5} parent=5 // pred_check_branch
      %254 = sbr.rel (%p251) target = $region44
    $region43: #{_lambda_.5} parent=5 // pred_region
      %s255 = ssub.s32 %s12, 1
      %s256 = smul.u32 64, %s17
      %p257 = scmp.lt.s32.totalorder %s256, 127
      %s258 = scalar_select %p257, %s256, 127
      %s259 = smul.addr %s258, 2
      %s260 = smul.addr %s259, 4
      %s261 = scalar_lea.vmem %s0, %s260
      %p262 = pneg %p38
      %p263 = pneg %p35
      %s264 = smul.u32 64, %s17
      %p265 = scmp.lt.s32.totalorder %s264, 127
      %s266 = scalar_select %p265, %s264, 127
      %s267 = smul.addr %s266, 2
      %s268 = smul.addr %s267, 4
      %s269 = scalar_lea.vmem %s1, %s268
      %p270 = pneg %p64
      %p271 = pneg %p61
      %s272 = smul.u32 64, %s17
      %p273 = scmp.lt.s32.totalorder %s272, 127
      %s274 = scalar_select %p273, %s272, 127
      %s275 = smul.addr %s274, 2
      %s276 = smul.addr %s275, 4
      %s277 = scalar_lea.vmem %s2, %s276
      %p278 = pneg %p90
      %p279 = pneg %p87
      %s280 = smul.u32 64, %s17
      %p281 = scmp.lt.s32.totalorder %s280, 127
      %s282 = scalar_select %p281, %s280, 127
      %s283 = smul.addr %s282, 2
      %s284 = smul.addr %s283, 4
      %s285 = scalar_lea.vmem %s3, %s284
      %p286 = pneg %p116
      %p287 = pneg %p113
      %p288 = pneg %p137
      %p289 = pneg %p134
      %p290 = pneg %p158
      %p291 = pneg %p155
      %p292 = pneg %p184
      %p293 = pneg %p181
      %s294 = smul.u32 64, %s17
      %p295 = scmp.lt.s32.totalorder %s294, 127
      %s296 = scalar_select %p295, %s294, 127
      %s297 = smul.addr %s296, 4
      %s298 = scalar_lea.vmem %s6, %s297
      %s299 = smul.u32 64, %s17
      %p300 = scmp.lt.s32.totalorder %s299, 127
      %s301 = scalar_select %p300, %s299, 127
      %s302 = smul.addr %s301, 2
      %s303 = smul.addr %s302, 4
      %s304 = scalar_lea.vmem %s0, %s303
      %s305 = smul.u32 64, %s17
      %s306 = smul.u32 64, %s17
      %p307 = scmp.lt.s32.totalorder %s306, 127
      %s308 = scalar_select %p307, %s306, 127
      %s309 = smul.addr %s308, 2
      %s310 = smul.addr %s309, 4
      %s311 = scalar_lea.vmem %s1, %s310
      %s312 = smul.u32 64, %s17
      %s313 = smul.u32 64, %s17
      %p314 = scmp.lt.s32.totalorder %s313, 127
      %s315 = scalar_select %p314, %s313, 127
      %s316 = smul.addr %s315, 2
      %s317 = smul.addr %s316, 4
      %s318 = scalar_lea.vmem %s2, %s317
      %s319 = smul.u32 64, %s17
      %s320 = smul.u32 64, %s17
      %p321 = scmp.lt.s32.totalorder %s320, 127
      %s322 = scalar_select %p321, %s320, 127
      %s323 = smul.addr %s322, 2
      %s324 = smul.addr %s323, 4
      %s325 = scalar_lea.vmem %s3, %s324
      %s326 = smul.u32 64, %s17
      %s327 = smul.u32 64, %s17
      %p328 = scmp.lt.s32.totalorder %s327, 127
      %s329 = scalar_select %p328, %s327, 127
      %s330 = smul.addr %s329, 4
      %s331 = scalar_lea.vmem %s6, %s330
      %s332 = smul.u32 64, %s17
      %v334 = vld [vmem:[%s4] sm:$0xf]
      %v335 = vld [vmem:[%s4 + $0x4] sm:$0xf]
      %v336 = vld [vmem:[%s4 + $0x8] sm:$0xf]
      %v337 = vld [vmem:[%s4 + $0xc] sm:$0xf]
      %v338 = vld [vmem:[%s4 + $0x10] sm:$0xf]
      %v339 = vld [vmem:[%s4 + $0x14] sm:$0xf]
      %v340 = vld [vmem:[%s4 + $0x18] sm:$0xf]
      %v341 = vld [vmem:[%s4 + $0x1c] sm:$0xf]
      %v342 = vld [vmem:[%s4 + $0x20] sm:$0xf]
      %v343 = vld [vmem:[%s4 + $0x24] sm:$0xf]
      %v344 = vld [vmem:[%s4 + $0x28] sm:$0xf]
      %v345 = vld [vmem:[%s4 + $0x2c] sm:$0xf]
      %v346 = vld [vmem:[%s4 + $0x30] sm:$0xf]
      %v347 = vld [vmem:[%s4 + $0x34] sm:$0xf]
      %v348 = vld [vmem:[%s4 + $0x38] sm:$0xf]
      %v349 = vld [vmem:[%s4 + $0x3c] sm:$0xf]
      %v350 = vld [vmem:[%s4 + $0x40] sm:$0xf]
      %v351 = vld [vmem:[%s4 + $0x44] sm:$0xf]
      %v352 = vld [vmem:[%s4 + $0x48] sm:$0xf]
      %v353 = vld [vmem:[%s4 + $0x4c] sm:$0xf]
      %v354 = vld [vmem:[%s4 + $0x50] sm:$0xf]
      %v355 = vld [vmem:[%s4 + $0x54] sm:$0xf]
      %v356 = vld [vmem:[%s4 + $0x58] sm:$0xf]
      %v357 = vld [vmem:[%s4 + $0x5c] sm:$0xf]
      %v358 = vld [vmem:[%s4 + $0x60] sm:$0xf]
      %v359 = vld [vmem:[%s4 + $0x64] sm:$0xf]
      %v360 = vld [vmem:[%s4 + $0x68] sm:$0xf]
      %v361 = vld [vmem:[%s4 + $0x6c] sm:$0xf]
      %v362 = vld [vmem:[%s4 + $0x70] sm:$0xf]
      %v363 = vld [vmem:[%s4 + $0x74] sm:$0xf]
      %v364 = vld [vmem:[%s4 + $0x78] sm:$0xf]
      %v365 = vld [vmem:[%s4 + $0x7c] sm:$0xf]
      %v366 = vld [vmem:[%s304] sm:$0xff]
      %v367 = vld [vmem:[%s304 + $0x8] sm:$0xff]
      %v368 = vld [vmem:[%s304 + $0x10] sm:$0xff]
      %v369 = vld [vmem:[%s304 + $0x18] sm:$0xff]
      %v370 = vld [vmem:[%s304 + $0x20] sm:$0xff]
      %v371 = vld [vmem:[%s304 + $0x28] sm:$0xff]
      %v372 = vld [vmem:[%s304 + $0x30] sm:$0xff]
      %v373 = vld [vmem:[%s304 + $0x38] sm:$0xff]
      %v374 = vld [vmem:[%s304 + $0x40] sm:$0xff]
      %v375 = vld [vmem:[%s304 + $0x48] sm:$0xff]
      %v376 = vld [vmem:[%s304 + $0x50] sm:$0xff]
      %v377 = vld [vmem:[%s304 + $0x58] sm:$0xff]
      %v378 = vld [vmem:[%s304 + $0x60] sm:$0xff]
      %v379 = vld [vmem:[%s304 + $0x68] sm:$0xff]
      %v380 = vld [vmem:[%s304 + $0x70] sm:$0xff]
      %v381 = vld [vmem:[%s304 + $0x78] sm:$0xff]
      %v382 = vld [vmem:[%s304 + $0x80] sm:$0xff]
      %v383 = vld [vmem:[%s304 + $0x88] sm:$0xff]
      %v384 = vld [vmem:[%s304 + $0x90] sm:$0xff]
      %v385 = vld [vmem:[%s304 + $0x98] sm:$0xff]
      %v386 = vld [vmem:[%s304 + $0xa0] sm:$0xff]
      %v387 = vld [vmem:[%s304 + $0xa8] sm:$0xff]
      %v388 = vld [vmem:[%s304 + $0xb0] sm:$0xff]
      %v389 = vld [vmem:[%s304 + $0xb8] sm:$0xff]
      %v390 = vld [vmem:[%s304 + $0xc0] sm:$0xff]
      %v391 = vld [vmem:[%s304 + $0xc8] sm:$0xff]
      %v392 = vld [vmem:[%s304 + $0xd0] sm:$0xff]
      %v393 = vld [vmem:[%s304 + $0xd8] sm:$0xff]
      %v394 = vld [vmem:[%s304 + $0xe0] sm:$0xff]
      %v395 = vld [vmem:[%s304 + $0xe8] sm:$0xff]
      %v396 = vld [vmem:[%s304 + $0xf0] sm:$0xff]
      %v397 = vld [vmem:[%s304 + $0xf8] sm:$0xff]
      %v398 = vld [vmem:[%s304 + $0x100] sm:$0xff]
      %v399 = vld [vmem:[%s304 + $0x108] sm:$0xff]
      %v400 = vld [vmem:[%s304 + $0x110] sm:$0xff]
      %v401 = vld [vmem:[%s304 + $0x118] sm:$0xff]
      %v402 = vld [vmem:[%s304 + $0x120] sm:$0xff]
      %v403 = vld [vmem:[%s304 + $0x128] sm:$0xff]
      %v404 = vld [vmem:[%s304 + $0x130] sm:$0xff]
      %v405 = vld [vmem:[%s304 + $0x138] sm:$0xff]
      %v406 = vld [vmem:[%s304 + $0x140] sm:$0xff]
      %v407 = vld [vmem:[%s304 + $0x148] sm:$0xff]
      %v408 = vld [vmem:[%s304 + $0x150] sm:$0xff]
      %v409 = vld [vmem:[%s304 + $0x158] sm:$0xff]
      %v410 = vld [vmem:[%s304 + $0x160] sm:$0xff]
      %v411 = vld [vmem:[%s304 + $0x168] sm:$0xff]
      %v412 = vld [vmem:[%s304 + $0x170] sm:$0xff]
      %v413 = vld [vmem:[%s304 + $0x178] sm:$0xff]
      %v414 = vld [vmem:[%s304 + $0x180] sm:$0xff]
      %v415 = vld [vmem:[%s304 + $0x188] sm:$0xff]
      %v416 = vld [vmem:[%s304 + $0x190] sm:$0xff]
      %v417 = vld [vmem:[%s304 + $0x198] sm:$0xff]
      %v418 = vld [vmem:[%s304 + $0x1a0] sm:$0xff]
      %v419 = vld [vmem:[%s304 + $0x1a8] sm:$0xff]
      %v420 = vld [vmem:[%s304 + $0x1b0] sm:$0xff]
      %v421 = vld [vmem:[%s304 + $0x1b8] sm:$0xff]
      %v422 = vld [vmem:[%s304 + $0x1c0] sm:$0xff]
      %v423 = vld [vmem:[%s304 + $0x1c8] sm:$0xff]
      %v424 = vld [vmem:[%s304 + $0x1d0] sm:$0xff]
      %v425 = vld [vmem:[%s304 + $0x1d8] sm:$0xff]
      %v426 = vld [vmem:[%s304 + $0x1e0] sm:$0xff]
      %v427 = vld [vmem:[%s304 + $0x1e8] sm:$0xff]
      %v428 = vld [vmem:[%s304 + $0x1f0] sm:$0xff]
      %v429 = vld [vmem:[%s304 + $0x1f8] sm:$0xff]
      %v494 = vunpack.c.l.b16 %v366
      %v495 = vunpack.c.h.b16 %v366
      %v496 = vunpack.c.l.b16 %v367
      %v497 = vunpack.c.h.b16 %v367
      %v498 = vunpack.c.l.b16 %v368
      %v499 = vunpack.c.h.b16 %v368
      %v500 = vunpack.c.l.b16 %v369
      %v501 = vunpack.c.h.b16 %v369
      %v502 = vunpack.c.l.b16 %v370
      %v503 = vunpack.c.h.b16 %v370
      %v504 = vunpack.c.l.b16 %v371
      %v505 = vunpack.c.h.b16 %v371
      %v506 = vunpack.c.l.b16 %v372
      %v507 = vunpack.c.h.b16 %v372
      %v508 = vunpack.c.l.b16 %v373
      %v509 = vunpack.c.h.b16 %v373
      %v510 = vunpack.c.l.b16 %v374
      %v511 = vunpack.c.h.b16 %v374
      %v512 = vunpack.c.l.b16 %v375
      %v513 = vunpack.c.h.b16 %v375
      %v514 = vunpack.c.l.b16 %v376
      %v515 = vunpack.c.h.b16 %v376
      %v516 = vunpack.c.l.b16 %v377
      %v517 = vunpack.c.h.b16 %v377
      %v518 = vunpack.c.l.b16 %v378
      %v519 = vunpack.c.h.b16 %v378
      %v520 = vunpack.c.l.b16 %v379
      %v521 = vunpack.c.h.b16 %v379
      %v522 = vunpack.c.l.b16 %v380
      %v523 = vunpack.c.h.b16 %v380
      %v524 = vunpack.c.l.b16 %v381
      %v525 = vunpack.c.h.b16 %v381
      %v526 = vunpack.c.l.b16 %v382
      %v527 = vunpack.c.h.b16 %v382
      %v528 = vunpack.c.l.b16 %v383
      %v529 = vunpack.c.h.b16 %v383
      %v530 = vunpack.c.l.b16 %v384
      %v531 = vunpack.c.h.b16 %v384
      %v532 = vunpack.c.l.b16 %v385
      %v533 = vunpack.c.h.b16 %v385
      %v534 = vunpack.c.l.b16 %v386
      %v535 = vunpack.c.h.b16 %v386
      %v536 = vunpack.c.l.b16 %v387
      %v537 = vunpack.c.h.b16 %v387
      %v538 = vunpack.c.l.b16 %v388
      %v539 = vunpack.c.h.b16 %v388
      %v540 = vunpack.c.l.b16 %v389
      %v541 = vunpack.c.h.b16 %v389
      %v542 = vunpack.c.l.b16 %v390
      %v543 = vunpack.c.h.b16 %v390
      %v544 = vunpack.c.l.b16 %v391
      %v545 = vunpack.c.h.b16 %v391
      %v546 = vunpack.c.l.b16 %v392
      %v547 = vunpack.c.h.b16 %v392
      %v548 = vunpack.c.l.b16 %v393
      %v549 = vunpack.c.h.b16 %v393
      %v550 = vunpack.c.l.b16 %v394
      %v551 = vunpack.c.h.b16 %v394
      %v552 = vunpack.c.l.b16 %v395
      %v553 = vunpack.c.h.b16 %v395
      %v554 = vunpack.c.l.b16 %v396
      %v555 = vunpack.c.h.b16 %v396
      %v556 = vunpack.c.l.b16 %v397
      %v557 = vunpack.c.h.b16 %v397
      %v558 = vunpack.c.l.b16 %v398
      %v559 = vunpack.c.h.b16 %v398
      %v560 = vunpack.c.l.b16 %v399
      %v561 = vunpack.c.h.b16 %v399
      %v562 = vunpack.c.l.b16 %v400
      %v563 = vunpack.c.h.b16 %v400
      %v564 = vunpack.c.l.b16 %v401
      %v565 = vunpack.c.h.b16 %v401
      %v566 = vunpack.c.l.b16 %v402
      %v567 = vunpack.c.h.b16 %v402
      %v568 = vunpack.c.l.b16 %v403
      %v569 = vunpack.c.h.b16 %v403
      %v570 = vunpack.c.l.b16 %v404
      %v571 = vunpack.c.h.b16 %v404
      %v572 = vunpack.c.l.b16 %v405
      %v573 = vunpack.c.h.b16 %v405
      %v574 = vunpack.c.l.b16 %v406
      %v575 = vunpack.c.h.b16 %v406
      %v576 = vunpack.c.l.b16 %v407
      %v577 = vunpack.c.h.b16 %v407
      %v578 = vunpack.c.l.b16 %v408
      %v579 = vunpack.c.h.b16 %v408
      %v580 = vunpack.c.l.b16 %v409
      %v581 = vunpack.c.h.b16 %v409
      %v582 = vunpack.c.l.b16 %v410
      %v583 = vunpack.c.h.b16 %v410
      %v584 = vunpack.c.l.b16 %v411
      %v585 = vunpack.c.h.b16 %v411
      %v586 = vunpack.c.l.b16 %v412
      %v587 = vunpack.c.h.b16 %v412
      %v588 = vunpack.c.l.b16 %v413
      %v589 = vunpack.c.h.b16 %v413
      %v590 = vunpack.c.l.b16 %v414
      %v591 = vunpack.c.h.b16 %v414
      %v592 = vunpack.c.l.b16 %v415
      %v593 = vunpack.c.h.b16 %v415
      %v594 = vunpack.c.l.b16 %v416
      %v595 = vunpack.c.h.b16 %v416
      %v596 = vunpack.c.l.b16 %v417
      %v597 = vunpack.c.h.b16 %v417
      %v598 = vunpack.c.l.b16 %v418
      %v599 = vunpack.c.h.b16 %v418
      %v600 = vunpack.c.l.b16 %v419
      %v601 = vunpack.c.h.b16 %v419
      %v602 = vunpack.c.l.b16 %v420
      %v603 = vunpack.c.h.b16 %v420
      %v604 = vunpack.c.l.b16 %v421
      %v605 = vunpack.c.h.b16 %v421
      %v606 = vunpack.c.l.b16 %v422
      %v607 = vunpack.c.h.b16 %v422
      %v608 = vunpack.c.l.b16 %v423
      %v609 = vunpack.c.h.b16 %v423
      %v610 = vunpack.c.l.b16 %v424
      %v611 = vunpack.c.h.b16 %v424
      %v612 = vunpack.c.l.b16 %v425
      %v613 = vunpack.c.h.b16 %v425
      %v614 = vunpack.c.l.b16 %v426
      %v615 = vunpack.c.h.b16 %v426
      %v616 = vunpack.c.l.b16 %v427
      %v617 = vunpack.c.h.b16 %v427
      %v618 = vunpack.c.l.b16 %v428
      %v619 = vunpack.c.h.b16 %v428
      %v620 = vunpack.c.l.b16 %v429
      %v621 = vunpack.c.h.b16 %v429
      %v622 = vpack.c.b16 %v496, %v494
      %v623 = vpack.c.b16 %v497, %v495
      %v624 = vpack.c.b16 %v500, %v498
      %v625 = vpack.c.b16 %v501, %v499
      %v626 = vpack.c.b16 %v504, %v502
      %v627 = vpack.c.b16 %v505, %v503
      %v628 = vpack.c.b16 %v508, %v506
      %v629 = vpack.c.b16 %v509, %v507
      %v630 = vpack.c.b16 %v512, %v510
      %v631 = vpack.c.b16 %v513, %v511
      %v632 = vpack.c.b16 %v516, %v514
      %v633 = vpack.c.b16 %v517, %v515
      %v634 = vpack.c.b16 %v520, %v518
      %v635 = vpack.c.b16 %v521, %v519
      %v636 = vpack.c.b16 %v524, %v522
      %v637 = vpack.c.b16 %v525, %v523
      %v638 = vpack.c.b16 %v528, %v526
      %v639 = vpack.c.b16 %v529, %v527
      %v640 = vpack.c.b16 %v532, %v530
      %v641 = vpack.c.b16 %v533, %v531
      %v642 = vpack.c.b16 %v536, %v534
      %v643 = vpack.c.b16 %v537, %v535
      %v644 = vpack.c.b16 %v540, %v538
      %v645 = vpack.c.b16 %v541, %v539
      %v646 = vpack.c.b16 %v544, %v542
      %v647 = vpack.c.b16 %v545, %v543
      %v648 = vpack.c.b16 %v548, %v546
      %v649 = vpack.c.b16 %v549, %v547
      %v650 = vpack.c.b16 %v552, %v550
      %v651 = vpack.c.b16 %v553, %v551
      %v652 = vpack.c.b16 %v556, %v554
      %v653 = vpack.c.b16 %v557, %v555
      %v654 = vpack.c.b16 %v560, %v558
      %v655 = vpack.c.b16 %v561, %v559
      %v656 = vpack.c.b16 %v564, %v562
      %v657 = vpack.c.b16 %v565, %v563
      %v658 = vpack.c.b16 %v568, %v566
      %v659 = vpack.c.b16 %v569, %v567
      %v660 = vpack.c.b16 %v572, %v570
      %v661 = vpack.c.b16 %v573, %v571
      %v662 = vpack.c.b16 %v576, %v574
      %v663 = vpack.c.b16 %v577, %v575
      %v664 = vpack.c.b16 %v580, %v578
      %v665 = vpack.c.b16 %v581, %v579
      %v666 = vpack.c.b16 %v584, %v582
      %v667 = vpack.c.b16 %v585, %v583
      %v668 = vpack.c.b16 %v588, %v586
      %v669 = vpack.c.b16 %v589, %v587
      %v670 = vpack.c.b16 %v592, %v590
      %v671 = vpack.c.b16 %v593, %v591
      %v672 = vpack.c.b16 %v596, %v594
      %v673 = vpack.c.b16 %v597, %v595
      %v674 = vpack.c.b16 %v600, %v598
      %v675 = vpack.c.b16 %v601, %v599
      %v676 = vpack.c.b16 %v604, %v602
      %v677 = vpack.c.b16 %v605, %v603
      %v678 = vpack.c.b16 %v608, %v606
      %v679 = vpack.c.b16 %v609, %v607
      %v680 = vpack.c.b16 %v612, %v610
      %v681 = vpack.c.b16 %v613, %v611
      %v682 = vpack.c.b16 %v616, %v614
      %v683 = vpack.c.b16 %v617, %v615
      %v684 = vpack.c.b16 %v620, %v618
      %v685 = vpack.c.b16 %v621, %v619
      %v782 = vunpack.c.l.b16 %v334
      %v783 = vunpack.c.l.b16 %v335
      %v784 = vunpack.c.l.b16 %v336
      %v785 = vunpack.c.l.b16 %v337
      %v786 = vunpack.c.l.b16 %v338
      %v787 = vunpack.c.l.b16 %v339
      %v788 = vunpack.c.l.b16 %v340
      %v789 = vunpack.c.l.b16 %v341
      %v790 = vunpack.c.l.b16 %v342
      %v791 = vunpack.c.l.b16 %v343
      %v792 = vunpack.c.l.b16 %v344
      %v793 = vunpack.c.l.b16 %v345
      %v794 = vunpack.c.l.b16 %v346
      %v795 = vunpack.c.l.b16 %v347
      %v796 = vunpack.c.l.b16 %v348
      %v797 = vunpack.c.l.b16 %v349
      %v798 = vunpack.c.l.b16 %v350
      %v799 = vunpack.c.l.b16 %v351
      %v800 = vunpack.c.l.b16 %v352
      %v801 = vunpack.c.l.b16 %v353
      %v802 = vunpack.c.l.b16 %v354
      %v803 = vunpack.c.l.b16 %v355
      %v804 = vunpack.c.l.b16 %v356
      %v805 = vunpack.c.l.b16 %v357
      %v806 = vunpack.c.l.b16 %v358
      %v807 = vunpack.c.l.b16 %v359
      %v808 = vunpack.c.l.b16 %v360
      %v809 = vunpack.c.l.b16 %v361
      %v810 = vunpack.c.l.b16 %v362
      %v811 = vunpack.c.l.b16 %v363
      %v812 = vunpack.c.l.b16 %v364
      %v813 = vunpack.c.l.b16 %v365
      %v814 = vpack.c.b16 %v783, %v782
      %v815 = vpack.c.b16 %v785, %v784
      %v816 = vpack.c.b16 %v787, %v786
      %v817 = vpack.c.b16 %v789, %v788
      %v818 = vpack.c.b16 %v791, %v790
      %v819 = vpack.c.b16 %v793, %v792
      %v820 = vpack.c.b16 %v795, %v794
      %v821 = vpack.c.b16 %v797, %v796
      %v822 = vpack.c.b16 %v799, %v798
      %v823 = vpack.c.b16 %v801, %v800
      %v824 = vpack.c.b16 %v803, %v802
      %v825 = vpack.c.b16 %v805, %v804
      %v826 = vpack.c.b16 %v807, %v806
      %v827 = vpack.c.b16 %v809, %v808
      %v828 = vpack.c.b16 %v811, %v810
      %v829 = vpack.c.b16 %v813, %v812
      %846 = vmatprep.subr.bf16.mxu0 0
      %847 = vmatpush1.bf16.msra.mxu0 %v814
      %848 = vmatprep.subr.bf16.mxu0 0
      %849 = vmatpush1.bf16.msra.mxu0 %v815
      %850 = vmatprep.subr.bf16.mxu0 0
      %851 = vmatpush1.bf16.msra.mxu0 %v816
      %852 = vmatprep.subr.bf16.mxu0 0
      %853 = vmatpush1.bf16.msra.mxu0 %v817
      %854 = vmatprep.subr.bf16.mxu0 0
      %855 = vmatpush1.bf16.msra.mxu0 %v818
      %856 = vmatprep.subr.bf16.mxu0 0
      %857 = vmatpush1.bf16.msra.mxu0 %v819
      %858 = vmatprep.subr.bf16.mxu0 0
      %859 = vmatpush1.bf16.msra.mxu0 %v820
      %860 = vmatprep.subr.bf16.mxu0 0
      %861 = vmatpush1.bf16.msra.mxu0 %v821
      %862 = vmatprep.subr.bf16.mxu0 0
      %863 = vmatpush1.bf16.msra.mxu0 %v822
      %864 = vmatprep.subr.bf16.mxu0 0
      %865 = vmatpush1.bf16.msra.mxu0 %v823
      %866 = vmatprep.subr.bf16.mxu0 0
      %867 = vmatpush1.bf16.msra.mxu0 %v824
      %868 = vmatprep.subr.bf16.mxu0 0
      %869 = vmatpush1.bf16.msra.mxu0 %v825
      %870 = vmatprep.subr.bf16.mxu0 0
      %871 = vmatpush1.bf16.msra.mxu0 %v826
      %872 = vmatprep.subr.bf16.mxu0 0
      %873 = vmatpush1.bf16.msra.mxu0 %v827
      %874 = vmatprep.subr.bf16.mxu0 0
      %875 = vmatpush1.bf16.msra.mxu0 %v828
      %876 = vmatprep.subr.bf16.mxu0 0
      %877 = vmatpush1.bf16.msra.mxu0 %v829
      %878 = vmatprep.mubr.bf16.mxu0 %v623
      %879 = vmatmul.mubr.bf16.gmra.mrb[0].mxu0 %v622
      %v880 = vpop.f32.mrb[0].mxu0
      %v881 = vadd.f32 0.0, %v880
      %v882 = vpop.f32.mrb[0].mxu0
      %v883 = vpop.f32.mrb[0].mxu0
      %v884 = vadd.f32 0.0, %v883
      %v885 = vpop.f32.mrb[0].mxu0
      %886 = vmatprep.mubr.bf16.mxu0 %v625
      %887 = vmatmul.mubr.bf16.gmra.mrb[0].mxu0 %v624
      %v888 = vpop.f32.mrb[0].mxu0
      %v889 = vadd.f32 0.0, %v888
      %v890 = vpop.f32.mrb[0].mxu0
      %v891 = vpop.f32.mrb[0].mxu0
      %v892 = vadd.f32 0.0, %v891
      %v893 = vpop.f32.mrb[0].mxu0
      %894 = vmatprep.mubr.bf16.mxu0 %v627
      %895 = vmatmul.mubr.bf16.gmra.mrb[0].mxu0 %v626
      %v896 = vpop.f32.mrb[0].mxu0
      %v897 = vadd.f32 0.0, %v896
      %v898 = vpop.f32.mrb[0].mxu0
      %v899 = vpop.f32.mrb[0].mxu0
      %v900 = vadd.f32 0.0, %v899
      %v901 = vpop.f32.mrb[0].mxu0
      %902 = vmatprep.mubr.bf16.mxu0 %v629
      %903 = vmatmul.mubr.bf16.gmra.mrb[0].mxu0 %v628
      %v904 = vpop.f32.mrb[0].mxu0
      %v905 = vadd.f32 0.0, %v904
      %v906 = vpop.f32.mrb[0].mxu0
      %v907 = vpop.f32.mrb[0].mxu0
      %v908 = vadd.f32 0.0, %v907
      %v909 = vpop.f32.mrb[0].mxu0
      %910 = vmatprep.mubr.bf16.mxu0 %v631
      %911 = vmatmul.mubr.bf16.gmra.mrb[0].mxu0 %v630
      %v912 = vpop.f32.mrb[0].mxu0
      %v913 = vadd.f32 0.0, %v912
      %v914 = vpop.f32.mrb[0].mxu0
      %v915 = vpop.f32.mrb[0].mxu0
      %v916 = vadd.f32 0.0, %v915
      %v917 = vpop.f32.mrb[0].mxu0
      %918 = vmatprep.mubr.bf16.mxu0 %v633
      %919 = vmatmul.mubr.bf16.gmra.mrb[0].mxu0 %v632
      %v920 = vpop.f32.mrb[0].mxu0
      %v921 = vadd.f32 0.0, %v920
      %v922 = vpop.f32.mrb[0].mxu0
      %v923 = vpop.f32.mrb[0].mxu0
      %v924 = vadd.f32 0.0, %v923
      %v925 = vpop.f32.mrb[0].mxu0
      %926 = vmatprep.mubr.bf16.mxu0 %v635
      %927 = vmatmul.mubr.bf16.gmra.mrb[0].mxu0 %v634
      %v928 = vpop.f32.mrb[0].mxu0
      %v929 = vadd.f32 0.0, %v928
      %v930 = vpop.f32.mrb[0].mxu0
      %v931 = vpop.f32.mrb[0].mxu0
      %v932 = vadd.f32 0.0, %v931
      %v933 = vpop.f32.mrb[0].mxu0
      %934 = vmatprep.mubr.bf16.mxu0 %v637
      %935 = vmatmul.mubr.bf16.gmra.mrb[0].mxu0 %v636
      %v936 = vpop.f32.mrb[0].mxu0
      %v937 = vadd.f32 0.0, %v936
      %v938 = vpop.f32.mrb[0].mxu0
      %v939 = vpop.f32.mrb[0].mxu0
      %v940 = vadd.f32 0.0, %v939
      %v941 = vpop.f32.mrb[0].mxu0
      %942 = vmatprep.mubr.bf16.mxu0 %v639
      %943 = vmatmul.mubr.bf16.gmra.mrb[0].mxu0 %v638
      %v944 = vpop.f32.mrb[0].mxu0
      %v945 = vadd.f32 0.0, %v944
      %v946 = vpop.f32.mrb[0].mxu0
      %v947 = vpop.f32.mrb[0].mxu0
      %v948 = vadd.f32 0.0, %v947
      %v949 = vpop.f32.mrb[0].mxu0
      %950 = vmatprep.mubr.bf16.mxu0 %v641
      %951 = vmatmul.mubr.bf16.gmra.mrb[0].mxu0 %v640
      %v952 = vpop.f32.mrb[0].mxu0
      %v953 = vadd.f32 0.0, %v952
      %v954 = vpop.f32.mrb[0].mxu0
      %v955 = vpop.f32.mrb[0].mxu0
      %v956 = vadd.f32 0.0, %v955
      %v957 = vpop.f32.mrb[0].mxu0
      %958 = vmatprep.mubr.bf16.mxu0 %v643
      %959 = vmatmul.mubr.bf16.gmra.mrb[0].mxu0 %v642
      %v960 = vpop.f32.mrb[0].mxu0
      %v961 = vadd.f32 0.0, %v960
      %v962 = vpop.f32.mrb[0].mxu0
      %v963 = vpop.f32.mrb[0].mxu0
      %v964 = vadd.f32 0.0, %v963
      %v965 = vpop.f32.mrb[0].mxu0
      %966 = vmatprep.mubr.bf16.mxu0 %v645
      %967 = vmatmul.mubr.bf16.gmra.mrb[0].mxu0 %v644
      %v968 = vpop.f32.mrb[0].mxu0
      %v969 = vadd.f32 0.0, %v968
      %v970 = vpop.f32.mrb[0].mxu0
      %v971 = vpop.f32.mrb[0].mxu0
      %v972 = vadd.f32 0.0, %v971
      %v973 = vpop.f32.mrb[0].mxu0
      %974 = vmatprep.mubr.bf16.mxu0 %v647
      %975 = vmatmul.mubr.bf16.gmra.mrb[0].mxu0 %v646
      %v976 = vpop.f32.mrb[0].mxu0
      %v977 = vadd.f32 0.0, %v976
      %v978 = vpop.f32.mrb[0].mxu0
      %v979 = vpop.f32.mrb[0].mxu0
      %v980 = vadd.f32 0.0, %v979
      %v981 = vpop.f32.mrb[0].mxu0
      %982 = vmatprep.mubr.bf16.mxu0 %v649
      %983 = vmatmul.mubr.bf16.gmra.mrb[0].mxu0 %v648
      %v984 = vpop.f32.mrb[0].mxu0
      %v985 = vadd.f32 0.0, %v984
      %v986 = vpop.f32.mrb[0].mxu0
      %v987 = vpop.f32.mrb[0].mxu0
      %v988 = vadd.f32 0.0, %v987
      %v989 = vpop.f32.mrb[0].mxu0
      %990 = vmatprep.mubr.bf16.mxu0 %v651
      %991 = vmatmul.mubr.bf16.gmra.mrb[0].mxu0 %v650
      %v992 = vpop.f32.mrb[0].mxu0
      %v993 = vadd.f32 0.0, %v992
      %v994 = vpop.f32.mrb[0].mxu0
      %v995 = vpop.f32.mrb[0].mxu0
      %v996 = vadd.f32 0.0, %v995
      %v997 = vpop.f32.mrb[0].mxu0
      %998 = vmatprep.mubr.bf16.mxu0 %v653
      %999 = vmatmul.mubr.bf16.gmra.mrb[0].mxu0 %v652
      %v1000 = vpop.f32.mrb[0].mxu0
      %v1001 = vadd.f32 0.0, %v1000
      %v1002 = vpop.f32.mrb[0].mxu0
      %v1003 = vpop.f32.mrb[0].mxu0
      %v1004 = vadd.f32 0.0, %v1003
      %v1005 = vpop.f32.mrb[0].mxu0
      %1006 = vmatprep.mubr.bf16.mxu0 %v655
      %1007 = vmatmul.mubr.bf16.gmra.mrb[0].mxu0 %v654
      %v1008 = vpop.f32.mrb[0].mxu0
      %v1009 = vadd.f32 0.0, %v1008
      %v1010 = vpop.f32.mrb[0].mxu0
      %v1011 = vpop.f32.mrb[0].mxu0
      %v1012 = vadd.f32 0.0, %v1011
      %v1013 = vpop.f32.mrb[0].mxu0
      %1014 = vmatprep.mubr.bf16.mxu0 %v657
      %1015 = vmatmul.mubr.bf16.gmra.mrb[0].mxu0 %v656
      %v1016 = vpop.f32.mrb[0].mxu0
      %v1017 = vadd.f32 0.0, %v1016
      %v1018 = vpop.f32.mrb[0].mxu0
      %v1019 = vpop.f32.mrb[0].mxu0
      %v1020 = vadd.f32 0.0, %v1019
      %v1021 = vpop.f32.mrb[0].mxu0
      %1022 = vmatprep.mubr.bf16.mxu0 %v659
      %1023 = vmatmul.mubr.bf16.gmra.mrb[0].mxu0 %v658
      %v1024 = vpop.f32.mrb[0].mxu0
      %v1025 = vadd.f32 0.0, %v1024
      %v1026 = vpop.f32.mrb[0].mxu0
      %v1027 = vpop.f32.mrb[0].mxu0
      %v1028 = vadd.f32 0.0, %v1027
      %v1029 = vpop.f32.mrb[0].mxu0
      %1030 = vmatprep.mubr.bf16.mxu0 %v661
      %1031 = vmatmul.mubr.bf16.gmra.mrb[0].mxu0 %v660
      %v1032 = vpop.f32.mrb[0].mxu0
      %v1033 = vadd.f32 0.0, %v1032
      %v1034 = vpop.f32.mrb[0].mxu0
      %v1035 = vpop.f32.mrb[0].mxu0
      %v1036 = vadd.f32 0.0, %v1035
      %v1037 = vpop.f32.mrb[0].mxu0
      %1038 = vmatprep.mubr.bf16.mxu0 %v663
      %1039 = vmatmul.mubr.bf16.gmra.mrb[0].mxu0 %v662
      %v1040 = vpop.f32.mrb[0].mxu0
      %v1041 = vadd.f32 0.0, %v1040
      %v1042 = vpop.f32.mrb[0].mxu0
      %v1043 = vpop.f32.mrb[0].mxu0
      %v1044 = vadd.f32 0.0, %v1043
      %v1045 = vpop.f32.mrb[0].mxu0
      %1046 = vmatprep.mubr.bf16.mxu0 %v665
      %1047 = vmatmul.mubr.bf16.gmra.mrb[0].mxu0 %v664
      %v1048 = vpop.f32.mrb[0].mxu0
      %v1049 = vadd.f32 0.0, %v1048
      %v1050 = vpop.f32.mrb[0].mxu0
      %v1051 = vpop.f32.mrb[0].mxu0
      %v1052 = vadd.f32 0.0, %v1051
      %v1053 = vpop.f32.mrb[0].mxu0
      %1054 = vmatprep.mubr.bf16.mxu0 %v667
      %1055 = vmatmul.mubr.bf16.gmra.mrb[0].mxu0 %v666
      %v1056 = vpop.f32.mrb[0].mxu0
      %v1057 = vadd.f32 0.0, %v1056
      %v1058 = vpop.f32.mrb[0].mxu0
      %v1059 = vpop.f32.mrb[0].mxu0
      %v1060 = vadd.f32 0.0, %v1059
      %v1061 = vpop.f32.mrb[0].mxu0
      %1062 = vmatprep.mubr.bf16.mxu0 %v669
      %1063 = vmatmul.mubr.bf16.gmra.mrb[0].mxu0 %v668
      %v1064 = vpop.f32.mrb[0].mxu0
      %v1065 = vadd.f32 0.0, %v1064
      %v1066 = vpop.f32.mrb[0].mxu0
      %v1067 = vpop.f32.mrb[0].mxu0
      %v1068 = vadd.f32 0.0, %v1067
      %v1069 = vpop.f32.mrb[0].mxu0
      %1070 = vmatprep.mubr.bf16.mxu0 %v671
      %1071 = vmatmul.mubr.bf16.gmra.mrb[0].mxu0 %v670
      %v1072 = vpop.f32.mrb[0].mxu0
      %v1073 = vadd.f32 0.0, %v1072
      %v1074 = vpop.f32.mrb[0].mxu0
      %v1075 = vpop.f32.mrb[0].mxu0
      %v1076 = vadd.f32 0.0, %v1075
      %v1077 = vpop.f32.mrb[0].mxu0
      %1078 = vmatprep.mubr.bf16.mxu0 %v673
      %1079 = vmatmul.mubr.bf16.gmra.mrb[0].mxu0 %v672
      %v1080 = vpop.f32.mrb[0].mxu0
      %v1081 = vadd.f32 0.0, %v1080
      %v1082 = vpop.f32.mrb[0].mxu0
      %v1083 = vpop.f32.mrb[0].mxu0
      %v1084 = vadd.f32 0.0, %v1083
      %v1085 = vpop.f32.mrb[0].mxu0
      %1086 = vmatprep.mubr.bf16.mxu0 %v675
      %1087 = vmatmul.mubr.bf16.gmra.mrb[0].mxu0 %v674
      %v1088 = vpop.f32.mrb[0].mxu0
      %v1089 = vadd.f32 0.0, %v1088
      %v1090 = vpop.f32.mrb[0].mxu0
      %v1091 = vpop.f32.mrb[0].mxu0
      %v1092 = vadd.f32 0.0, %v1091
      %v1093 = vpop.f32.mrb[0].mxu0
      %1094 = vmatprep.mubr.bf16.mxu0 %v677
      %1095 = vmatmul.mubr.bf16.gmra.mrb[0].mxu0 %v676
      %v1096 = vpop.f32.mrb[0].mxu0
      %v1097 = vadd.f32 0.0, %v1096
      %v1098 = vpop.f32.mrb[0].mxu0
      %v1099 = vpop.f32.mrb[0].mxu0
      %v1100 = vadd.f32 0.0, %v1099
      %v1101 = vpop.f32.mrb[0].mxu0
      %1102 = vmatprep.mubr.bf16.mxu0 %v679
      %1103 = vmatmul.mubr.bf16.gmra.mrb[0].mxu0 %v678
      %v1104 = vpop.f32.mrb[0].mxu0
      %v1105 = vadd.f32 0.0, %v1104
      %v1106 = vpop.f32.mrb[0].mxu0
      %v1107 = vpop.f32.mrb[0].mxu0
      %v1108 = vadd.f32 0.0, %v1107
      %v1109 = vpop.f32.mrb[0].mxu0
      %1110 = vmatprep.mubr.bf16.mxu0 %v681
      %1111 = vmatmul.mubr.bf16.gmra.mrb[0].mxu0 %v680
      %v1112 = vpop.f32.mrb[0].mxu0
      %v1113 = vadd.f32 0.0, %v1112
      %v1114 = vpop.f32.mrb[0].mxu0
      %v1115 = vpop.f32.mrb[0].mxu0
      %v1116 = vadd.f32 0.0, %v1115
      %v1117 = vpop.f32.mrb[0].mxu0
      %1118 = vmatprep.mubr.bf16.mxu0 %v683
      %1119 = vmatmul.mubr.bf16.gmra.mrb[0].mxu0 %v682
      %v1120 = vpop.f32.mrb[0].mxu0
      %v1121 = vadd.f32 0.0, %v1120
      %v1122 = vpop.f32.mrb[0].mxu0
      %v1123 = vpop.f32.mrb[0].mxu0
      %v1124 = vadd.f32 0.0, %v1123
      %v1125 = vpop.f32.mrb[0].mxu0
      %1126 = vmatprep.mubr.bf16.mxu0 %v685
      %1127 = vmatmul.mubr.bf16.gmra.mrb[0].mxu0 %v684
      %v1128 = vpop.f32.mrb[0].mxu0
      %v1129 = vadd.f32 0.0, %v1128
      %v1130 = vpop.f32.mrb[0].mxu0
      %v1131 = vpop.f32.mrb[0].mxu0
      %v1132 = vadd.f32 0.0, %v1131
      %v1133 = vpop.f32.mrb[0].mxu0
      %1134 = vdwg.mxu0
      %v1135 = vld [vmem:[%s311] sm:$0xff]
      %v1136 = vld [vmem:[%s311 + $0x8] sm:$0xff]
      %v1137 = vld [vmem:[%s311 + $0x10] sm:$0xff]
      %v1138 = vld [vmem:[%s311 + $0x18] sm:$0xff]
      %v1139 = vld [vmem:[%s311 + $0x20] sm:$0xff]
      %v1140 = vld [vmem:[%s311 + $0x28] sm:$0xff]
      %v1141 = vld [vmem:[%s311 + $0x30] sm:$0xff]
      %v1142 = vld [vmem:[%s311 + $0x38] sm:$0xff]
      %v1143 = vld [vmem:[%s311 + $0x40] sm:$0xff]
      %v1144 = vld [vmem:[%s311 + $0x48] sm:$0xff]
      %v1145 = vld [vmem:[%s311 + $0x50] sm:$0xff]
      %v1146 = vld [vmem:[%s311 + $0x58] sm:$0xff]
      %v1147 = vld [vmem:[%s311 + $0x60] sm:$0xff]
      %v1148 = vld [vmem:[%s311 + $0x68] sm:$0xff]
      %v1149 = vld [vmem:[%s311 + $0x70] sm:$0xff]
      %v1150 = vld [vmem:[%s311 + $0x78] sm:$0xff]
      %v1151 = vld [vmem:[%s311 + $0x80] sm:$0xff]
      %v1152 = vld [vmem:[%s311 + $0x88] sm:$0xff]
      %v1153 = vld [vmem:[%s311 + $0x90] sm:$0xff]
      %v1154 = vld [vmem:[%s311 + $0x98] sm:$0xff]
      %v1155 = vld [vmem:[%s311 + $0xa0] sm:$0xff]
      %v1156 = vld [vmem:[%s311 + $0xa8] sm:$0xff]
      %v1157 = vld [vmem:[%s311 + $0xb0] sm:$0xff]
      %v1158 = vld [vmem:[%s311 + $0xb8] sm:$0xff]
      %v1159 = vld [vmem:[%s311 + $0xc0] sm:$0xff]
      %v1160 = vld [vmem:[%s311 + $0xc8] sm:$0xff]
      %v1161 = vld [vmem:[%s311 + $0xd0] sm:$0xff]
      %v1162 = vld [vmem:[%s311 + $0xd8] sm:$0xff]
      %v1163 = vld [vmem:[%s311 + $0xe0] sm:$0xff]
      %v1164 = vld [vmem:[%s311 + $0xe8] sm:$0xff]
      %v1165 = vld [vmem:[%s311 + $0xf0] sm:$0xff]
      %v1166 = vld [vmem:[%s311 + $0xf8] sm:$0xff]
      %v1167 = vld [vmem:[%s311 + $0x100] sm:$0xff]
      %v1168 = vld [vmem:[%s311 + $0x108] sm:$0xff]
      %v1169 = vld [vmem:[%s311 + $0x110] sm:$0xff]
      %v1170 = vld [vmem:[%s311 + $0x118] sm:$0xff]
      %v1171 = vld [vmem:[%s311 + $0x120] sm:$0xff]
      %v1172 = vld [vmem:[%s311 + $0x128] sm:$0xff]
      %v1173 = vld [vmem:[%s311 + $0x130] sm:$0xff]
      %v1174 = vld [vmem:[%s311 + $0x138] sm:$0xff]
      %v1175 = vld [vmem:[%s311 + $0x140] sm:$0xff]
      %v1176 = vld [vmem:[%s311 + $0x148] sm:$0xff]
      %v1177 = vld [vmem:[%s311 + $0x150] sm:$0xff]
      %v1178 = vld [vmem:[%s311 + $0x158] sm:$0xff]
      %v1179 = vld [vmem:[%s311 + $0x160] sm:$0xff]
      %v1180 = vld [vmem:[%s311 + $0x168] sm:$0xff]
      %v1181 = vld [vmem:[%s311 + $0x170] sm:$0xff]
      %v1182 = vld [vmem:[%s311 + $0x178] sm:$0xff]
      %v1183 = vld [vmem:[%s311 + $0x180] sm:$0xff]
      %v1184 = vld [vmem:[%s311 + $0x188] sm:$0xff]
      %v1185 = vld [vmem:[%s311 + $0x190] sm:$0xff]
      %v1186 = vld [vmem:[%s311 + $0x198] sm:$0xff]
      %v1187 = vld [vmem:[%s311 + $0x1a0] sm:$0xff]
      %v1188 = vld [vmem:[%s311 + $0x1a8] sm:$0xff]
      %v1189 = vld [vmem:[%s311 + $0x1b0] sm:$0xff]
      %v1190 = vld [vmem:[%s311 + $0x1b8] sm:$0xff]
      %v1191 = vld [vmem:[%s311 + $0x1c0] sm:$0xff]
      %v1192 = vld [vmem:[%s311 + $0x1c8] sm:$0xff]
      %v1193 = vld [vmem:[%s311 + $0x1d0] sm:$0xff]
      %v1194 = vld [vmem:[%s311 + $0x1d8] sm:$0xff]
      %v1195 = vld [vmem:[%s311 + $0x1e0] sm:$0xff]
      %v1196 = vld [vmem:[%s311 + $0x1e8] sm:$0xff]
      %v1197 = vld [vmem:[%s311 + $0x1f0] sm:$0xff]
      %v1198 = vld [vmem:[%s311 + $0x1f8] sm:$0xff]
      %v1263 = vunpack.c.l.b16 %v1135
      %v1264 = vunpack.c.h.b16 %v1135
      %v1265 = vunpack.c.l.b16 %v1136
      %v1266 = vunpack.c.h.b16 %v1136
      %v1267 = vunpack.c.l.b16 %v1137
      %v1268 = vunpack.c.h.b16 %v1137
      %v1269 = vunpack.c.l.b16 %v1138
      %v1270 = vunpack.c.h.b16 %v1138
      %v1271 = vunpack.c.l.b16 %v1139
      %v1272 = vunpack.c.h.b16 %v1139
      %v1273 = vunpack.c.l.b16 %v1140
      %v1274 = vunpack.c.h.b16 %v1140
      %v1275 = vunpack.c.l.b16 %v1141
      %v1276 = vunpack.c.h.b16 %v1141
      %v1277 = vunpack.c.l.b16 %v1142
      %v1278 = vunpack.c.h.b16 %v1142
      %v1279 = vunpack.c.l.b16 %v1143
      %v1280 = vunpack.c.h.b16 %v1143
      %v1281 = vunpack.c.l.b16 %v1144
      %v1282 = vunpack.c.h.b16 %v1144
      %v1283 = vunpack.c.l.b16 %v1145
      %v1284 = vunpack.c.h.b16 %v1145
      %v1285 = vunpack.c.l.b16 %v1146
      %v1286 = vunpack.c.h.b16 %v1146
      %v1287 = vunpack.c.l.b16 %v1147
      %v1288 = vunpack.c.h.b16 %v1147
      %v1289 = vunpack.c.l.b16 %v1148
      %v1290 = vunpack.c.h.b16 %v1148
      %v1291 = vunpack.c.l.b16 %v1149
      %v1292 = vunpack.c.h.b16 %v1149
      %v1293 = vunpack.c.l.b16 %v1150
      %v1294 = vunpack.c.h.b16 %v1150
      %v1295 = vunpack.c.l.b16 %v1151
      %v1296 = vunpack.c.h.b16 %v1151
      %v1297 = vunpack.c.l.b16 %v1152
      %v1298 = vunpack.c.h.b16 %v1152
      %v1299 = vunpack.c.l.b16 %v1153
      %v1300 = vunpack.c.h.b16 %v1153
      %v1301 = vunpack.c.l.b16 %v1154
      %v1302 = vunpack.c.h.b16 %v1154
      %v1303 = vunpack.c.l.b16 %v1155
      %v1304 = vunpack.c.h.b16 %v1155
      %v1305 = vunpack.c.l.b16 %v1156
      %v1306 = vunpack.c.h.b16 %v1156
      %v1307 = vunpack.c.l.b16 %v1157
      %v1308 = vunpack.c.h.b16 %v1157
      %v1309 = vunpack.c.l.b16 %v1158
      %v1310 = vunpack.c.h.b16 %v1158
      %v1311 = vunpack.c.l.b16 %v1159
      %v1312 = vunpack.c.h.b16 %v1159
      %v1313 = vunpack.c.l.b16 %v1160
      %v1314 = vunpack.c.h.b16 %v1160
      %v1315 = vunpack.c.l.b16 %v1161
      %v1316 = vunpack.c.h.b16 %v1161
      %v1317 = vunpack.c.l.b16 %v1162
      %v1318 = vunpack.c.h.b16 %v1162
      %v1319 = vunpack.c.l.b16 %v1163
      %v1320 = vunpack.c.h.b16 %v1163
      %v1321 = vunpack.c.l.b16 %v1164
      %v1322 = vunpack.c.h.b16 %v1164
      %v1323 = vunpack.c.l.b16 %v1165
      %v1324 = vunpack.c.h.b16 %v1165
      %v1325 = vunpack.c.l.b16 %v1166
      %v1326 = vunpack.c.h.b16 %v1166
      %v1327 = vunpack.c.l.b16 %v1167
      %v1328 = vunpack.c.h.b16 %v1167
      %v1329 = vunpack.c.l.b16 %v1168
      %v1330 = vunpack.c.h.b16 %v1168
      %v1331 = vunpack.c.l.b16 %v1169
      %v1332 = vunpack.c.h.b16 %v1169
      %v1333 = vunpack.c.l.b16 %v1170
      %v1334 = vunpack.c.h.b16 %v1170
      %v1335 = vunpack.c.l.b16 %v1171
      %v1336 = vunpack.c.h.b16 %v1171
      %v1337 = vunpack.c.l.b16 %v1172
      %v1338 = vunpack.c.h.b16 %v1172
      %v1339 = vunpack.c.l.b16 %v1173
      %v1340 = vunpack.c.h.b16 %v1173
      %v1341 = vunpack.c.l.b16 %v1174
      %v1342 = vunpack.c.h.b16 %v1174
      %v1343 = vunpack.c.l.b16 %v1175
      %v1344 = vunpack.c.h.b16 %v1175
      %v1345 = vunpack.c.l.b16 %v1176
      %v1346 = vunpack.c.h.b16 %v1176
      %v1347 = vunpack.c.l.b16 %v1177
      %v1348 = vunpack.c.h.b16 %v1177
      %v1349 = vunpack.c.l.b16 %v1178
      %v1350 = vunpack.c.h.b16 %v1178
      %v1351 = vunpack.c.l.b16 %v1179
      %v1352 = vunpack.c.h.b16 %v1179
      %v1353 = vunpack.c.l.b16 %v1180
      %v1354 = vunpack.c.h.b16 %v1180
      %v1355 = vunpack.c.l.b16 %v1181
      %v1356 = vunpack.c.h.b16 %v1181
      %v1357 = vunpack.c.l.b16 %v1182
      %v1358 = vunpack.c.h.b16 %v1182
      %v1359 = vunpack.c.l.b16 %v1183
      %v1360 = vunpack.c.h.b16 %v1183
      %v1361 = vunpack.c.l.b16 %v1184
      %v1362 = vunpack.c.h.b16 %v1184
      %v1363 = vunpack.c.l.b16 %v1185
      %v1364 = vunpack.c.h.b16 %v1185
      %v1365 = vunpack.c.l.b16 %v1186
      %v1366 = vunpack.c.h.b16 %v1186
      %v1367 = vunpack.c.l.b16 %v1187
      %v1368 = vunpack.c.h.b16 %v1187
      %v1369 = vunpack.c.l.b16 %v1188
      %v1370 = vunpack.c.h.b16 %v1188
      %v1371 = vunpack.c.l.b16 %v1189
      %v1372 = vunpack.c.h.b16 %v1189
      %v1373 = vunpack.c.l.b16 %v1190
      %v1374 = vunpack.c.h.b16 %v1190
      %v1375 = vunpack.c.l.b16 %v1191
      %v1376 = vunpack.c.h.b16 %v1191
      %v1377 = vunpack.c.l.b16 %v1192
      %v1378 = vunpack.c.h.b16 %v1192
      %v1379 = vunpack.c.l.b16 %v1193
      %v1380 = vunpack.c.h.b16 %v1193
      %v1381 = vunpack.c.l.b16 %v1194
      %v1382 = vunpack.c.h.b16 %v1194
      %v1383 = vunpack.c.l.b16 %v1195
      %v1384 = vunpack.c.h.b16 %v1195
      %v1385 = vunpack.c.l.b16 %v1196
      %v1386 = vunpack.c.h.b16 %v1196
      %v1387 = vunpack.c.l.b16 %v1197
      %v1388 = vunpack.c.h.b16 %v1197
      %v1389 = vunpack.c.l.b16 %v1198
      %v1390 = vunpack.c.h.b16 %v1198
      %v1391 = vpack.c.b16 %v1265, %v1263
      %v1392 = vpack.c.b16 %v1266, %v1264
      %v1393 = vpack.c.b16 %v1269, %v1267
      %v1394 = vpack.c.b16 %v1270, %v1268
      %v1395 = vpack.c.b16 %v1273, %v1271
      %v1396 = vpack.c.b16 %v1274, %v1272
      %v1397 = vpack.c.b16 %v1277, %v1275
      %v1398 = vpack.c.b16 %v1278, %v1276
      %v1399 = vpack.c.b16 %v1281, %v1279
      %v1400 = vpack.c.b16 %v1282, %v1280
      %v1401 = vpack.c.b16 %v1285, %v1283
      %v1402 = vpack.c.b16 %v1286, %v1284
      %v1403 = vpack.c.b16 %v1289, %v1287
      %v1404 = vpack.c.b16 %v1290, %v1288
      %v1405 = vpack.c.b16 %v1293, %v1291
      %v1406 = vpack.c.b16 %v1294, %v1292
      %v1407 = vpack.c.b16 %v1297, %v1295
      %v1408 = vpack.c.b16 %v1298, %v1296
      %v1409 = vpack.c.b16 %v1301, %v1299
      %v1410 = vpack.c.b16 %v1302, %v1300
      %v1411 = vpack.c.b16 %v1305, %v1303
      %v1412 = vpack.c.b16 %v1306, %v1304
      %v1413 = vpack.c.b16 %v1309, %v1307
      %v1414 = vpack.c.b16 %v1310, %v1308
      %v1415 = vpack.c.b16 %v1313, %v1311
      %v1416 = vpack.c.b16 %v1314, %v1312
      %v1417 = vpack.c.b16 %v1317, %v1315
      %v1418 = vpack.c.b16 %v1318, %v1316
      %v1419 = vpack.c.b16 %v1321, %v1319
      %v1420 = vpack.c.b16 %v1322, %v1320
      %v1421 = vpack.c.b16 %v1325, %v1323
      %v1422 = vpack.c.b16 %v1326, %v1324
      %v1423 = vpack.c.b16 %v1329, %v1327
      %v1424 = vpack.c.b16 %v1330, %v1328
      %v1425 = vpack.c.b16 %v1333, %v1331
      %v1426 = vpack.c.b16 %v1334, %v1332
      %v1427 = vpack.c.b16 %v1337, %v1335
      %v1428 = vpack.c.b16 %v1338, %v1336
      %v1429 = vpack.c.b16 %v1341, %v1339
      %v1430 = vpack.c.b16 %v1342, %v1340
      %v1431 = vpack.c.b16 %v1345, %v1343
      %v1432 = vpack.c.b16 %v1346, %v1344
      %v1433 = vpack.c.b16 %v1349, %v1347
      %v1434 = vpack.c.b16 %v1350, %v1348
      %v1435 = vpack.c.b16 %v1353, %v1351
      %v1436 = vpack.c.b16 %v1354, %v1352
      %v1437 = vpack.c.b16 %v1357, %v1355
      %v1438 = vpack.c.b16 %v1358, %v1356
      %v1439 = vpack.c.b16 %v1361, %v1359
      %v1440 = vpack.c.b16 %v1362, %v1360
      %v1441 = vpack.c.b16 %v1365, %v1363
      %v1442 = vpack.c.b16 %v1366, %v1364
      %v1443 = vpack.c.b16 %v1369, %v1367
      %v1444 = vpack.c.b16 %v1370, %v1368
      %v1445 = vpack.c.b16 %v1373, %v1371
      %v1446 = vpack.c.b16 %v1374, %v1372
      %v1447 = vpack.c.b16 %v1377, %v1375
      %v1448 = vpack.c.b16 %v1378, %v1376
      %v1449 = vpack.c.b16 %v1381, %v1379
      %v1450 = vpack.c.b16 %v1382, %v1380
      %v1451 = vpack.c.b16 %v1385, %v1383
      %v1452 = vpack.c.b16 %v1386, %v1384
      %v1453 = vpack.c.b16 %v1389, %v1387
      %v1454 = vpack.c.b16 %v1390, %v1388
      %1519 = vmatprep.subr.bf16.mxu0 0
      %1520 = vmatpush1.bf16.msra.mxu0 %v814
      %1521 = vmatprep.subr.bf16.mxu0 0
      %1522 = vmatpush1.bf16.msra.mxu0 %v815
      %1523 = vmatprep.subr.bf16.mxu0 0
      %1524 = vmatpush1.bf16.msra.mxu0 %v816
      %1525 = vmatprep.subr.bf16.mxu0 0
      %1526 = vmatpush1.bf16.msra.mxu0 %v817
      %1527 = vmatprep.subr.bf16.mxu0 0
      %1528 = vmatpush1.bf16.msra.mxu0 %v818
      %1529 = vmatprep.subr.bf16.mxu0 0
      %1530 = vmatpush1.bf16.msra.mxu0 %v819
      %1531 = vmatprep.subr.bf16.mxu0 0
      %1532 = vmatpush1.bf16.msra.mxu0 %v820
      %1533 = vmatprep.subr.bf16.mxu0 0
      %1534 = vmatpush1.bf16.msra.mxu0 %v821
      %1535 = vmatprep.subr.bf16.mxu0 0
      %1536 = vmatpush1.bf16.msra.mxu0 %v822
      %1537 = vmatprep.subr.bf16.mxu0 0
      %1538 = vmatpush1.bf16.msra.mxu0 %v823
      %1539 = vmatprep.subr.bf16.mxu0 0
      %1540 = vmatpush1.bf16.msra.mxu0 %v824
      %1541 = vmatprep.subr.bf16.mxu0 0
      %1542 = vmatpush1.bf16.msra.mxu0 %v825
      %1543 = vmatprep.subr.bf16.mxu0 0
      %1544 = vmatpush1.bf16.msra.mxu0 %v826
      %1545 = vmatprep.subr.bf16.mxu0 0
      %1546 = vmatpush1.bf16.msra.mxu0 %v827
      %1547 = vmatprep.subr.bf16.mxu0 0
      %1548 = vmatpush1.bf16.msra.mxu0 %v828
      %1549 = vmatprep.subr.bf16.mxu0 0
      %1550 = vmatpush1.bf16.msra.mxu0 %v829
      %1551 = vmatprep.mubr.bf16.mxu0 %v1392
      %1552 = vmatmul.mubr.bf16.gmra.mrb[0].mxu0 %v1391
      %v1553 = vpop.f32.mrb[0].mxu0
      %v1554 = vadd.f32 0.0, %v1553
      %v1555 = vpop.f32.mrb[0].mxu0
      %v1556 = vpop.f32.mrb[0].mxu0
      %v1557 = vadd.f32 0.0, %v1556
      %v1558 = vpop.f32.mrb[0].mxu0
      %1559 = vmatprep.mubr.bf16.mxu0 %v1394
      %1560 = vmatmul.mubr.bf16.gmra.mrb[0].mxu0 %v1393
      %v1561 = vpop.f32.mrb[0].mxu0
      %v1562 = vadd.f32 0.0, %v1561
      %v1563 = vpop.f32.mrb[0].mxu0
      %v1564 = vpop.f32.mrb[0].mxu0
      %v1565 = vadd.f32 0.0, %v1564
      %v1566 = vpop.f32.mrb[0].mxu0
      %1567 = vmatprep.mubr.bf16.mxu0 %v1396
      %1568 = vmatmul.mubr.bf16.gmra.mrb[0].mxu0 %v1395
      %v1569 = vpop.f32.mrb[0].mxu0
      %v1570 = vadd.f32 0.0, %v1569
      %v1571 = vpop.f32.mrb[0].mxu0
      %v1572 = vpop.f32.mrb[0].mxu0
      %v1573 = vadd.f32 0.0, %v1572
      %v1574 = vpop.f32.mrb[0].mxu0
      %1575 = vmatprep.mubr.bf16.mxu0 %v1398
      %1576 = vmatmul.mubr.bf16.gmra.mrb[0].mxu0 %v1397
      %v1577 = vpop.f32.mrb[0].mxu0
      %v1578 = vadd.f32 0.0, %v1577
      %v1579 = vpop.f32.mrb[0].mxu0
      %v1580 = vpop.f32.mrb[0].mxu0
      %v1581 = vadd.f32 0.0, %v1580
      %v1582 = vpop.f32.mrb[0].mxu0
      %1583 = vmatprep.mubr.bf16.mxu0 %v1400
      %1584 = vmatmul.mubr.bf16.gmra.mrb[0].mxu0 %v1399
      %v1585 = vpop.f32.mrb[0].mxu0
      %v1586 = vadd.f32 0.0, %v1585
      %v1587 = vpop.f32.mrb[0].mxu0
      %v1588 = vpop.f32.mrb[0].mxu0
      %v1589 = vadd.f32 0.0, %v1588
      %v1590 = vpop.f32.mrb[0].mxu0
      %1591 = vmatprep.mubr.bf16.mxu0 %v1402
      %1592 = vmatmul.mubr.bf16.gmra.mrb[0].mxu0 %v1401
      %v1593 = vpop.f32.mrb[0].mxu0
      %v1594 = vadd.f32 0.0, %v1593
      %v1595 = vpop.f32.mrb[0].mxu0
      %v1596 = vpop.f32.mrb[0].mxu0
      %v1597 = vadd.f32 0.0, %v1596
      %v1598 = vpop.f32.mrb[0].mxu0
      %1599 = vmatprep.mubr.bf16.mxu0 %v1404
      %1600 = vmatmul.mubr.bf16.gmra.mrb[0].mxu0 %v1403
      %v1601 = vpop.f32.mrb[0].mxu0
      %v1602 = vadd.f32 0.0, %v1601
      %v1603 = vpop.f32.mrb[0].mxu0
      %v1604 = vpop.f32.mrb[0].mxu0
      %v1605 = vadd.f32 0.0, %v1604
      %v1606 = vpop.f32.mrb[0].mxu0
      %1607 = vmatprep.mubr.bf16.mxu0 %v1406
      %1608 = vmatmul.mubr.bf16.gmra.mrb[0].mxu0 %v1405
      %v1609 = vpop.f32.mrb[0].mxu0
      %v1610 = vadd.f32 0.0, %v1609
      %v1611 = vpop.f32.mrb[0].mxu0
      %v1612 = vpop.f32.mrb[0].mxu0
      %v1613 = vadd.f32 0.0, %v1612
      %v1614 = vpop.f32.mrb[0].mxu0
      %1615 = vmatprep.mubr.bf16.mxu0 %v1408
      %1616 = vmatmul.mubr.bf16.gmra.mrb[0].mxu0 %v1407
      %v1617 = vpop.f32.mrb[0].mxu0
      %v1618 = vadd.f32 0.0, %v1617
      %v1619 = vpop.f32.mrb[0].mxu0
      %v1620 = vpop.f32.mrb[0].mxu0
      %v1621 = vadd.f32 0.0, %v1620
      %v1622 = vpop.f32.mrb[0].mxu0
      %1623 = vmatprep.mubr.bf16.mxu0 %v1410
      %1624 = vmatmul.mubr.bf16.gmra.mrb[0].mxu0 %v1409
      %v1625 = vpop.f32.mrb[0].mxu0
      %v1626 = vadd.f32 0.0, %v1625
      %v1627 = vpop.f32.mrb[0].mxu0
      %v1628 = vpop.f32.mrb[0].mxu0
      %v1629 = vadd.f32 0.0, %v1628
      %v1630 = vpop.f32.mrb[0].mxu0
      %1631 = vmatprep.mubr.bf16.mxu0 %v1412
      %1632 = vmatmul.mubr.bf16.gmra.mrb[0].mxu0 %v1411
      %v1633 = vpop.f32.mrb[0].mxu0
      %v1634 = vadd.f32 0.0, %v1633
      %v1635 = vpop.f32.mrb[0].mxu0
      %v1636 = vpop.f32.mrb[0].mxu0
      %v1637 = vadd.f32 0.0, %v1636
      %v1638 = vpop.f32.mrb[0].mxu0
      %1639 = vmatprep.mubr.bf16.mxu0 %v1414
      %1640 = vmatmul.mubr.bf16.gmra.mrb[0].mxu0 %v1413
      %v1641 = vpop.f32.mrb[0].mxu0
      %v1642 = vadd.f32 0.0, %v1641
      %v1643 = vpop.f32.mrb[0].mxu0
      %v1644 = vpop.f32.mrb[0].mxu0
      %v1645 = vadd.f32 0.0, %v1644
      %v1646 = vpop.f32.mrb[0].mxu0
      %1647 = vmatprep.mubr.bf16.mxu0 %v1416
      %1648 = vmatmul.mubr.bf16.gmra.mrb[0].mxu0 %v1415
      %v1649 = vpop.f32.mrb[0].mxu0
      %v1650 = vadd.f32 0.0, %v1649
      %v1651 = vpop.f32.mrb[0].mxu0
      %v1652 = vpop.f32.mrb[0].mxu0
      %v1653 = vadd.f32 0.0, %v1652
      %v1654 = vpop.f32.mrb[0].mxu0
      %1655 = vmatprep.mubr.bf16.mxu0 %v1418
      %1656 = vmatmul.mubr.bf16.gmra.mrb[0].mxu0 %v1417
      %v1657 = vpop.f32.mrb[0].mxu0
      %v1658 = vadd.f32 0.0, %v1657
      %v1659 = vpop.f32.mrb[0].mxu0
      %v1660 = vpop.f32.mrb[0].mxu0
      %v1661 = vadd.f32 0.0, %v1660
      %v1662 = vpop.f32.mrb[0].mxu0
      %1663 = vmatprep.mubr.bf16.mxu0 %v1420
      %1664 = vmatmul.mubr.bf16.gmra.mrb[0].mxu0 %v1419
      %v1665 = vpop.f32.mrb[0].mxu0
      %v1666 = vadd.f32 0.0, %v1665
      %v1667 = vpop.f32.mrb[0].mxu0
      %v1668 = vpop.f32.mrb[0].mxu0
      %v1669 = vadd.f32 0.0, %v1668
      %v1670 = vpop.f32.mrb[0].mxu0
      %1671 = vmatprep.mubr.bf16.mxu0 %v1422
      %1672 = vmatmul.mubr.bf16.gmra.mrb[0].mxu0 %v1421
      %v1673 = vpop.f32.mrb[0].mxu0
      %v1674 = vadd.f32 0.0, %v1673
      %v1675 = vpop.f32.mrb[0].mxu0
      %v1676 = vpop.f32.mrb[0].mxu0
      %v1677 = vadd.f32 0.0, %v1676
      %v1678 = vpop.f32.mrb[0].mxu0
      %1679 = vmatprep.mubr.bf16.mxu0 %v1424
      %1680 = vmatmul.mubr.bf16.gmra.mrb[0].mxu0 %v1423
      %v1681 = vpop.f32.mrb[0].mxu0
      %v1682 = vadd.f32 0.0, %v1681
      %v1683 = vpop.f32.mrb[0].mxu0
      %v1684 = vpop.f32.mrb[0].mxu0
      %v1685 = vadd.f32 0.0, %v1684
      %v1686 = vpop.f32.mrb[0].mxu0
      %1687 = vmatprep.mubr.bf16.mxu0 %v1426
      %1688 = vmatmul.mubr.bf16.gmra.mrb[0].mxu0 %v1425
      %v1689 = vpop.f32.mrb[0].mxu0
      %v1690 = vadd.f32 0.0, %v1689
      %v1691 = vpop.f32.mrb[0].mxu0
      %v1692 = vpop.f32.mrb[0].mxu0
      %v1693 = vadd.f32 0.0, %v1692
      %v1694 = vpop.f32.mrb[0].mxu0
      %1695 = vmatprep.mubr.bf16.mxu0 %v1428
      %1696 = vmatmul.mubr.bf16.gmra.mrb[0].mxu0 %v1427
      %v1697 = vpop.f32.mrb[0].mxu0
      %v1698 = vadd.f32 0.0, %v1697
      %v1699 = vpop.f32.mrb[0].mxu0
      %v1700 = vpop.f32.mrb[0].mxu0
      %v1701 = vadd.f32 0.0, %v1700
      %v1702 = vpop.f32.mrb[0].mxu0
      %1703 = vmatprep.mubr.bf16.mxu0 %v1430
      %1704 = vmatmul.mubr.bf16.gmra.mrb[0].mxu0 %v1429
      %v1705 = vpop.f32.mrb[0].mxu0
      %v1706 = vadd.f32 0.0, %v1705
      %v1707 = vpop.f32.mrb[0].mxu0
      %v1708 = vpop.f32.mrb[0].mxu0
      %v1709 = vadd.f32 0.0, %v1708
      %v1710 = vpop.f32.mrb[0].mxu0
      %1711 = vmatprep.mubr.bf16.mxu0 %v1432
      %1712 = vmatmul.mubr.bf16.gmra.mrb[0].mxu0 %v1431
      %v1713 = vpop.f32.mrb[0].mxu0
      %v1714 = vadd.f32 0.0, %v1713
      %v1715 = vpop.f32.mrb[0].mxu0
      %v1716 = vpop.f32.mrb[0].mxu0
      %v1717 = vadd.f32 0.0, %v1716
      %v1718 = vpop.f32.mrb[0].mxu0
      %1719 = vmatprep.mubr.bf16.mxu0 %v1434
      %1720 = vmatmul.mubr.bf16.gmra.mrb[0].mxu0 %v1433
      %v1721 = vpop.f32.mrb[0].mxu0
      %v1722 = vadd.f32 0.0, %v1721
      %v1723 = vpop.f32.mrb[0].mxu0
      %v1724 = vpop.f32.mrb[0].mxu0
      %v1725 = vadd.f32 0.0, %v1724
      %v1726 = vpop.f32.mrb[0].mxu0
      %1727 = vmatprep.mubr.bf16.mxu0 %v1436
      %1728 = vmatmul.mubr.bf16.gmra.mrb[0].mxu0 %v1435
      %v1729 = vpop.f32.mrb[0].mxu0
      %v1730 = vadd.f32 0.0, %v1729
      %v1731 = vpop.f32.mrb[0].mxu0
      %v1732 = vpop.f32.mrb[0].mxu0
      %v1733 = vadd.f32 0.0, %v1732
      %v1734 = vpop.f32.mrb[0].mxu0
      %1735 = vmatprep.mubr.bf16.mxu0 %v1438
      %1736 = vmatmul.mubr.bf16.gmra.mrb[0].mxu0 %v1437
      %v1737 = vpop.f32.mrb[0].mxu0
      %v1738 = vadd.f32 0.0, %v1737
      %v1739 = vpop.f32.mrb[0].mxu0
      %v1740 = vpop.f32.mrb[0].mxu0
      %v1741 = vadd.f32 0.0, %v1740
      %v1742 = vpop.f32.mrb[0].mxu0
      %1743 = vmatprep.mubr.bf16.mxu0 %v1440
      %1744 = vmatmul.mubr.bf16.gmra.mrb[0].mxu0 %v1439
      %v1745 = vpop.f32.mrb[0].mxu0
      %v1746 = vadd.f32 0.0, %v1745
      %v1747 = vpop.f32.mrb[0].mxu0
      %v1748 = vpop.f32.mrb[0].mxu0
      %v1749 = vadd.f32 0.0, %v1748
      %v1750 = vpop.f32.mrb[0].mxu0
      %1751 = vmatprep.mubr.bf16.mxu0 %v1442
      %1752 = vmatmul.mubr.bf16.gmra.mrb[0].mxu0 %v1441
      %v1753 = vpop.f32.mrb[0].mxu0
      %v1754 = vadd.f32 0.0, %v1753
      %v1755 = vpop.f32.mrb[0].mxu0
      %v1756 = vpop.f32.mrb[0].mxu0
      %v1757 = vadd.f32 0.0, %v1756
      %v1758 = vpop.f32.mrb[0].mxu0
      %1759 = vmatprep.mubr.bf16.mxu0 %v1444
      %1760 = vmatmul.mubr.bf16.gmra.mrb[0].mxu0 %v1443
      %v1761 = vpop.f32.mrb[0].mxu0
      %v1762 = vadd.f32 0.0, %v1761
      %v1763 = vpop.f32.mrb[0].mxu0
      %v1764 = vpop.f32.mrb[0].mxu0
      %v1765 = vadd.f32 0.0, %v1764
      %v1766 = vpop.f32.mrb[0].mxu0
      %1767 = vmatprep.mubr.bf16.mxu0 %v1446
      %1768 = vmatmul.mubr.bf16.gmra.mrb[0].mxu0 %v1445
      %v1769 = vpop.f32.mrb[0].mxu0
      %v1770 = vadd.f32 0.0, %v1769
      %v1771 = vpop.f32.mrb[0].mxu0
      %v1772 = vpop.f32.mrb[0].mxu0
      %v1773 = vadd.f32 0.0, %v1772
      %v1774 = vpop.f32.mrb[0].mxu0
      %1775 = vmatprep.mubr.bf16.mxu0 %v1448
      %1776 = vmatmul.mubr.bf16.gmra.mrb[0].mxu0 %v1447
      %v1777 = vpop.f32.mrb[0].mxu0
      %v1778 = vadd.f32 0.0, %v1777
      %v1779 = vpop.f32.mrb[0].mxu0
      %v1780 = vpop.f32.mrb[0].mxu0
      %v1781 = vadd.f32 0.0, %v1780
      %v1782 = vpop.f32.mrb[0].mxu0
      %1783 = vmatprep.mubr.bf16.mxu0 %v1450
      %1784 = vmatmul.mubr.bf16.gmra.mrb[0].mxu0 %v1449
      %v1785 = vpop.f32.mrb[0].mxu0
      %v1786 = vadd.f32 0.0, %v1785
      %v1787 = vpop.f32.mrb[0].mxu0
      %v1788 = vpop.f32.mrb[0].mxu0
      %v1789 = vadd.f32 0.0, %v1788
      %v1790 = vpop.f32.mrb[0].mxu0
      %1791 = vmatprep.mubr.bf16.mxu0 %v1452
      %1792 = vmatmul.mubr.bf16.gmra.mrb[0].mxu0 %v1451
      %v1793 = vpop.f32.mrb[0].mxu0
      %v1794 = vadd.f32 0.0, %v1793
      %v1795 = vpop.f32.mrb[0].mxu0
      %v1796 = vpop.f32.mrb[0].mxu0
      %v1797 = vadd.f32 0.0, %v1796
      %v1798 = vpop.f32.mrb[0].mxu0
      %1799 = vmatprep.mubr.bf16.mxu0 %v1454
      %1800 = vmatmul.mubr.bf16.gmra.mrb[0].mxu0 %v1453
      %v1801 = vpop.f32.mrb[0].mxu0
      %v1802 = vadd.f32 0.0, %v1801
      %v1803 = vpop.f32.mrb[0].mxu0
      %v1804 = vpop.f32.mrb[0].mxu0
      %v1805 = vadd.f32 0.0, %v1804
      %v1806 = vpop.f32.mrb[0].mxu0
      %1807 = vdwg.mxu0
      %v1808 = vmax.f32 %v881, %v1554
      %v1809 = vmax.f32 %v884, %v1557
      %v1810 = vmax.f32 %v889, %v1562
      %v1811 = vmax.f32 %v892, %v1565
      %v1812 = vmax.f32 %v897, %v1570
      %v1813 = vmax.f32 %v900, %v1573
      %v1814 = vmax.f32 %v905, %v1578
      %v1815 = vmax.f32 %v908, %v1581
      %v1816 = vmax.f32 %v913, %v1586
      %v1817 = vmax.f32 %v916, %v1589
      %v1818 = vmax.f32 %v921, %v1594
      %v1819 = vmax.f32 %v924, %v1597
      %v1820 = vmax.f32 %v929, %v1602
      %v1821 = vmax.f32 %v932, %v1605
      %v1822 = vmax.f32 %v937, %v1610
      %v1823 = vmax.f32 %v940, %v1613
      %v1824 = vmax.f32 %v945, %v1618
      %v1825 = vmax.f32 %v948, %v1621
      %v1826 = vmax.f32 %v953, %v1626
      %v1827 = vmax.f32 %v956, %v1629
      %v1828 = vmax.f32 %v961, %v1634
      %v1829 = vmax.f32 %v964, %v1637
      %v1830 = vmax.f32 %v969, %v1642
      %v1831 = vmax.f32 %v972, %v1645
      %v1832 = vmax.f32 %v977, %v1650
      %v1833 = vmax.f32 %v980, %v1653
      %v1834 = vmax.f32 %v985, %v1658
      %v1835 = vmax.f32 %v988, %v1661
      %v1836 = vmax.f32 %v993, %v1666
      %v1837 = vmax.f32 %v996, %v1669
      %v1838 = vmax.f32 %v1001, %v1674
      %v1839 = vmax.f32 %v1004, %v1677
      %v1840 = vmax.f32 %v1009, %v1682
      %v1841 = vmax.f32 %v1012, %v1685
      %v1842 = vmax.f32 %v1017, %v1690
      %v1843 = vmax.f32 %v1020, %v1693
      %v1844 = vmax.f32 %v1025, %v1698
      %v1845 = vmax.f32 %v1028, %v1701
      %v1846 = vmax.f32 %v1033, %v1706
      %v1847 = vmax.f32 %v1036, %v1709
      %v1848 = vmax.f32 %v1041, %v1714
      %v1849 = vmax.f32 %v1044, %v1717
      %v1850 = vmax.f32 %v1049, %v1722
      %v1851 = vmax.f32 %v1052, %v1725
      %v1852 = vmax.f32 %v1057, %v1730
      %v1853 = vmax.f32 %v1060, %v1733
      %v1854 = vmax.f32 %v1065, %v1738
      %v1855 = vmax.f32 %v1068, %v1741
      %v1856 = vmax.f32 %v1073, %v1746
      %v1857 = vmax.f32 %v1076, %v1749
      %v1858 = vmax.f32 %v1081, %v1754
      %v1859 = vmax.f32 %v1084, %v1757
      %v1860 = vmax.f32 %v1089, %v1762
      %v1861 = vmax.f32 %v1092, %v1765
      %v1862 = vmax.f32 %v1097, %v1770
      %v1863 = vmax.f32 %v1100, %v1773
      %v1864 = vmax.f32 %v1105, %v1778
      %v1865 = vmax.f32 %v1108, %v1781
      %v1866 = vmax.f32 %v1113, %v1786
      %v1867 = vmax.f32 %v1116, %v1789
      %v1868 = vmax.f32 %v1121, %v1794
      %v1869 = vmax.f32 %v1124, %v1797
      %v1870 = vmax.f32 %v1129, %v1802
      %v1871 = vmax.f32 %v1132, %v1805
      %v1872 = vld [vmem:[%s318] sm:$0xff]
      %v1873 = vld [vmem:[%s318 + $0x8] sm:$0xff]
      %v1874 = vld [vmem:[%s318 + $0x10] sm:$0xff]
      %v1875 = vld [vmem:[%s318 + $0x18] sm:$0xff]
      %v1876 = vld [vmem:[%s318 + $0x20] sm:$0xff]
      %v1877 = vld [vmem:[%s318 + $0x28] sm:$0xff]
      %v1878 = vld [vmem:[%s318 + $0x30] sm:$0xff]
      %v1879 = vld [vmem:[%s318 + $0x38] sm:$0xff]
      %v1880 = vld [vmem:[%s318 + $0x40] sm:$0xff]
      %v1881 = vld [vmem:[%s318 + $0x48] sm:$0xff]
      %v1882 = vld [vmem:[%s318 + $0x50] sm:$0xff]
      %v1883 = vld [vmem:[%s318 + $0x58] sm:$0xff]
      %v1884 = vld [vmem:[%s318 + $0x60] sm:$0xff]
      %v1885 = vld [vmem:[%s318 + $0x68] sm:$0xff]
      %v1886 = vld [vmem:[%s318 + $0x70] sm:$0xff]
      %v1887 = vld [vmem:[%s318 + $0x78] sm:$0xff]
      %v1888 = vld [vmem:[%s318 + $0x80] sm:$0xff]
      %v1889 = vld [vmem:[%s318 + $0x88] sm:$0xff]
      %v1890 = vld [vmem:[%s318 + $0x90] sm:$0xff]
      %v1891 = vld [vmem:[%s318 + $0x98] sm:$0xff]
      %v1892 = vld [vmem:[%s318 + $0xa0] sm:$0xff]
      %v1893 = vld [vmem:[%s318 + $0xa8] sm:$0xff]
      %v1894 = vld [vmem:[%s318 + $0xb0] sm:$0xff]
      %v1895 = vld [vmem:[%s318 + $0xb8] sm:$0xff]
      %v1896 = vld [vmem:[%s318 + $0xc0] sm:$0xff]
      %v1897 = vld [vmem:[%s318 + $0xc8] sm:$0xff]
      %v1898 = vld [vmem:[%s318 + $0xd0] sm:$0xff]
      %v1899 = vld [vmem:[%s318 + $0xd8] sm:$0xff]
      %v1900 = vld [vmem:[%s318 + $0xe0] sm:$0xff]
      %v1901 = vld [vmem:[%s318 + $0xe8] sm:$0xff]
      %v1902 = vld [vmem:[%s318 + $0xf0] sm:$0xff]
      %v1903 = vld [vmem:[%s318 + $0xf8] sm:$0xff]
      %v1904 = vld [vmem:[%s318 + $0x100] sm:$0xff]
      %v1905 = vld [vmem:[%s318 + $0x108] sm:$0xff]
      %v1906 = vld [vmem:[%s318 + $0x110] sm:$0xff]
      %v1907 = vld [vmem:[%s318 + $0x118] sm:$0xff]
      %v1908 = vld [vmem:[%s318 + $0x120] sm:$0xff]
      %v1909 = vld [vmem:[%s318 + $0x128] sm:$0xff]
      %v1910 = vld [vmem:[%s318 + $0x130] sm:$0xff]
      %v1911 = vld [vmem:[%s318 + $0x138] sm:$0xff]
      %v1912 = vld [vmem:[%s318 + $0x140] sm:$0xff]
      %v1913 = vld [vmem:[%s318 + $0x148] sm:$0xff]
      %v1914 = vld [vmem:[%s318 + $0x150] sm:$0xff]
      %v1915 = vld [vmem:[%s318 + $0x158] sm:$0xff]
      %v1916 = vld [vmem:[%s318 + $0x160] sm:$0xff]
      %v1917 = vld [vmem:[%s318 + $0x168] sm:$0xff]
      %v1918 = vld [vmem:[%s318 + $0x170] sm:$0xff]
      %v1919 = vld [vmem:[%s318 + $0x178] sm:$0xff]
      %v1920 = vld [vmem:[%s318 + $0x180] sm:$0xff]
      %v1921 = vld [vmem:[%s318 + $0x188] sm:$0xff]
      %v1922 = vld [vmem:[%s318 + $0x190] sm:$0xff]
      %v1923 = vld [vmem:[%s318 + $0x198] sm:$0xff]
      %v1924 = vld [vmem:[%s318 + $0x1a0] sm:$0xff]
      %v1925 = vld [vmem:[%s318 + $0x1a8] sm:$0xff]
      %v1926 = vld [vmem:[%s318 + $0x1b0] sm:$0xff]
      %v1927 = vld [vmem:[%s318 + $0x1b8] sm:$0xff]
      %v1928 = vld [vmem:[%s318 + $0x1c0] sm:$0xff]
      %v1929 = vld [vmem:[%s318 + $0x1c8] sm:$0xff]
      %v1930 = vld [vmem:[%s318 + $0x1d0] sm:$0xff]
      %v1931 = vld [vmem:[%s318 + $0x1d8] sm:$0xff]
      %v1932 = vld [vmem:[%s318 + $0x1e0] sm:$0xff]
      %v1933 = vld [vmem:[%s318 + $0x1e8] sm:$0xff]
      %v1934 = vld [vmem:[%s318 + $0x1f0] sm:$0xff]
      %v1935 = vld [vmem:[%s318 + $0x1f8] sm:$0xff]
      %v2000 = vunpack.c.l.b16 %v1872
      %v2001 = vunpack.c.h.b16 %v1872
      %v2002 = vunpack.c.l.b16 %v1873
      %v2003 = vunpack.c.h.b16 %v1873
      %v2004 = vunpack.c.l.b16 %v1874
      %v2005 = vunpack.c.h.b16 %v1874
      %v2006 = vunpack.c.l.b16 %v1875
      %v2007 = vunpack.c.h.b16 %v1875
      %v2008 = vunpack.c.l.b16 %v1876
      %v2009 = vunpack.c.h.b16 %v1876
      %v2010 = vunpack.c.l.b16 %v1877
      %v2011 = vunpack.c.h.b16 %v1877
      %v2012 = vunpack.c.l.b16 %v1878
      %v2013 = vunpack.c.h.b16 %v1878
      %v2014 = vunpack.c.l.b16 %v1879
      %v2015 = vunpack.c.h.b16 %v1879
      %v2016 = vunpack.c.l.b16 %v1880
      %v2017 = vunpack.c.h.b16 %v1880
      %v2018 = vunpack.c.l.b16 %v1881
      %v2019 = vunpack.c.h.b16 %v1881
      %v2020 = vunpack.c.l.b16 %v1882
      %v2021 = vunpack.c.h.b16 %v1882
      %v2022 = vunpack.c.l.b16 %v1883
      %v2023 = vunpack.c.h.b16 %v1883
      %v2024 = vunpack.c.l.b16 %v1884
      %v2025 = vunpack.c.h.b16 %v1884
      %v2026 = vunpack.c.l.b16 %v1885
      %v2027 = vunpack.c.h.b16 %v1885
      %v2028 = vunpack.c.l.b16 %v1886
      %v2029 = vunpack.c.h.b16 %v1886
      %v2030 = vunpack.c.l.b16 %v1887
      %v2031 = vunpack.c.h.b16 %v1887
      %v2032 = vunpack.c.l.b16 %v1888
      %v2033 = vunpack.c.h.b16 %v1888
      %v2034 = vunpack.c.l.b16 %v1889
      %v2035 = vunpack.c.h.b16 %v1889
      %v2036 = vunpack.c.l.b16 %v1890
      %v2037 = vunpack.c.h.b16 %v1890
      %v2038 = vunpack.c.l.b16 %v1891
      %v2039 = vunpack.c.h.b16 %v1891
      %v2040 = vunpack.c.l.b16 %v1892
      %v2041 = vunpack.c.h.b16 %v1892
      %v2042 = vunpack.c.l.b16 %v1893
      %v2043 = vunpack.c.h.b16 %v1893
      %v2044 = vunpack.c.l.b16 %v1894
      %v2045 = vunpack.c.h.b16 %v1894
      %v2046 = vunpack.c.l.b16 %v1895
      %v2047 = vunpack.c.h.b16 %v1895
      %v2048 = vunpack.c.l.b16 %v1896
      %v2049 = vunpack.c.h.b16 %v1896
      %v2050 = vunpack.c.l.b16 %v1897
      %v2051 = vunpack.c.h.b16 %v1897
      %v2052 = vunpack.c.l.b16 %v1898
      %v2053 = vunpack.c.h.b16 %v1898
      %v2054 = vunpack.c.l.b16 %v1899
      %v2055 = vunpack.c.h.b16 %v1899
      %v2056 = vunpack.c.l.b16 %v1900
      %v2057 = vunpack.c.h.b16 %v1900
      %v2058 = vunpack.c.l.b16 %v1901
      %v2059 = vunpack.c.h.b16 %v1901
      %v2060 = vunpack.c.l.b16 %v1902
      %v2061 = vunpack.c.h.b16 %v1902
      %v2062 = vunpack.c.l.b16 %v1903
      %v2063 = vunpack.c.h.b16 %v1903
      %v2064 = vunpack.c.l.b16 %v1904
      %v2065 = vunpack.c.h.b16 %v1904
      %v2066 = vunpack.c.l.b16 %v1905
      %v2067 = vunpack.c.h.b16 %v1905
      %v2068 = vunpack.c.l.b16 %v1906
      %v2069 = vunpack.c.h.b16 %v1906
      %v2070 = vunpack.c.l.b16 %v1907
      %v2071 = vunpack.c.h.b16 %v1907
      %v2072 = vunpack.c.l.b16 %v1908
      %v2073 = vunpack.c.h.b16 %v1908
      %v2074 = vunpack.c.l.b16 %v1909
      %v2075 = vunpack.c.h.b16 %v1909
      %v2076 = vunpack.c.l.b16 %v1910
      %v2077 = vunpack.c.h.b16 %v1910
      %v2078 = vunpack.c.l.b16 %v1911
      %v2079 = vunpack.c.h.b16 %v1911
      %v2080 = vunpack.c.l.b16 %v1912
      %v2081 = vunpack.c.h.b16 %v1912
      %v2082 = vunpack.c.l.b16 %v1913
      %v2083 = vunpack.c.h.b16 %v1913
      %v2084 = vunpack.c.l.b16 %v1914
      %v2085 = vunpack.c.h.b16 %v1914
      %v2086 = vunpack.c.l.b16 %v1915
      %v2087 = vunpack.c.h.b16 %v1915
      %v2088 = vunpack.c.l.b16 %v1916
      %v2089 = vunpack.c.h.b16 %v1916
      %v2090 = vunpack.c.l.b16 %v1917
      %v2091 = vunpack.c.h.b16 %v1917
      %v2092 = vunpack.c.l.b16 %v1918
      %v2093 = vunpack.c.h.b16 %v1918
      %v2094 = vunpack.c.l.b16 %v1919
      %v2095 = vunpack.c.h.b16 %v1919
      %v2096 = vunpack.c.l.b16 %v1920
      %v2097 = vunpack.c.h.b16 %v1920
      %v2098 = vunpack.c.l.b16 %v1921
      %v2099 = vunpack.c.h.b16 %v1921
      %v2100 = vunpack.c.l.b16 %v1922
      %v2101 = vunpack.c.h.b16 %v1922
      %v2102 = vunpack.c.l.b16 %v1923
      %v2103 = vunpack.c.h.b16 %v1923
      %v2104 = vunpack.c.l.b16 %v1924
      %v2105 = vunpack.c.h.b16 %v1924
      %v2106 = vunpack.c.l.b16 %v1925
      %v2107 = vunpack.c.h.b16 %v1925
      %v2108 = vunpack.c.l.b16 %v1926
      %v2109 = vunpack.c.h.b16 %v1926
      %v2110 = vunpack.c.l.b16 %v1927
      %v2111 = vunpack.c.h.b16 %v1927
      %v2112 = vunpack.c.l.b16 %v1928
      %v2113 = vunpack.c.h.b16 %v1928
      %v2114 = vunpack.c.l.b16 %v1929
      %v2115 = vunpack.c.h.b16 %v1929
      %v2116 = vunpack.c.l.b16 %v1930
      %v2117 = vunpack.c.h.b16 %v1930
      %v2118 = vunpack.c.l.b16 %v1931
      %v2119 = vunpack.c.h.b16 %v1931
      %v2120 = vunpack.c.l.b16 %v1932
      %v2121 = vunpack.c.h.b16 %v1932
      %v2122 = vunpack.c.l.b16 %v1933
      %v2123 = vunpack.c.h.b16 %v1933
      %v2124 = vunpack.c.l.b16 %v1934
      %v2125 = vunpack.c.h.b16 %v1934
      %v2126 = vunpack.c.l.b16 %v1935
      %v2127 = vunpack.c.h.b16 %v1935
      %v2128 = vpack.c.b16 %v2002, %v2000
      %v2129 = vpack.c.b16 %v2003, %v2001
      %v2130 = vpack.c.b16 %v2006, %v2004
      %v2131 = vpack.c.b16 %v2007, %v2005
      %v2132 = vpack.c.b16 %v2010, %v2008
      %v2133 = vpack.c.b16 %v2011, %v2009
      %v2134 = vpack.c.b16 %v2014, %v2012
      %v2135 = vpack.c.b16 %v2015, %v2013
      %v2136 = vpack.c.b16 %v2018, %v2016
      %v2137 = vpack.c.b16 %v2019, %v2017
      %v2138 = vpack.c.b16 %v2022, %v2020
      %v2139 = vpack.c.b16 %v2023, %v2021
      %v2140 = vpack.c.b16 %v2026, %v2024
      %v2141 = vpack.c.b16 %v2027, %v2025
      %v2142 = vpack.c.b16 %v2030, %v2028
      %v2143 = vpack.c.b16 %v2031, %v2029
      %v2144 = vpack.c.b16 %v2034, %v2032
      %v2145 = vpack.c.b16 %v2035, %v2033
      %v2146 = vpack.c.b16 %v2038, %v2036
      %v2147 = vpack.c.b16 %v2039, %v2037
      %v2148 = vpack.c.b16 %v2042, %v2040
      %v2149 = vpack.c.b16 %v2043, %v2041
      %v2150 = vpack.c.b16 %v2046, %v2044
      %v2151 = vpack.c.b16 %v2047, %v2045
      %v2152 = vpack.c.b16 %v2050, %v2048
      %v2153 = vpack.c.b16 %v2051, %v2049
      %v2154 = vpack.c.b16 %v2054, %v2052
      %v2155 = vpack.c.b16 %v2055, %v2053
      %v2156 = vpack.c.b16 %v2058, %v2056
      %v2157 = vpack.c.b16 %v2059, %v2057
      %v2158 = vpack.c.b16 %v2062, %v2060
      %v2159 = vpack.c.b16 %v2063, %v2061
      %v2160 = vpack.c.b16 %v2066, %v2064
      %v2161 = vpack.c.b16 %v2067, %v2065
      %v2162 = vpack.c.b16 %v2070, %v2068
      %v2163 = vpack.c.b16 %v2071, %v2069
      %v2164 = vpack.c.b16 %v2074, %v2072
      %v2165 = vpack.c.b16 %v2075, %v2073
      %v2166 = vpack.c.b16 %v2078, %v2076
      %v2167 = vpack.c.b16 %v2079, %v2077
      %v2168 = vpack.c.b16 %v2082, %v2080
      %v2169 = vpack.c.b16 %v2083, %v2081
      %v2170 = vpack.c.b16 %v2086, %v2084
      %v2171 = vpack.c.b16 %v2087, %v2085
      %v2172 = vpack.c.b16 %v2090, %v2088
      %v2173 = vpack.c.b16 %v2091, %v2089
      %v2174 = vpack.c.b16 %v2094, %v2092
      %v2175 = vpack.c.b16 %v2095, %v2093
      %v2176 = vpack.c.b16 %v2098, %v2096
      %v2177 = vpack.c.b16 %v2099, %v2097
      %v2178 = vpack.c.b16 %v2102, %v2100
      %v2179 = vpack.c.b16 %v2103, %v2101
      %v2180 = vpack.c.b16 %v2106, %v2104
      %v2181 = vpack.c.b16 %v2107, %v2105
      %v2182 = vpack.c.b16 %v2110, %v2108
      %v2183 = vpack.c.b16 %v2111, %v2109
      %v2184 = vpack.c.b16 %v2114, %v2112
      %v2185 = vpack.c.b16 %v2115, %v2113
      %v2186 = vpack.c.b16 %v2118, %v2116
      %v2187 = vpack.c.b16 %v2119, %v2117
      %v2188 = vpack.c.b16 %v2122, %v2120
      %v2189 = vpack.c.b16 %v2123, %v2121
      %v2190 = vpack.c.b16 %v2126, %v2124
      %v2191 = vpack.c.b16 %v2127, %v2125
      %2256 = vmatprep.subr.bf16.mxu0 0
      %2257 = vmatpush1.bf16.msra.mxu0 %v814
      %2258 = vmatprep.subr.bf16.mxu0 0
      %2259 = vmatpush1.bf16.msra.mxu0 %v815
      %2260 = vmatprep.subr.bf16.mxu0 0
      %2261 = vmatpush1.bf16.msra.mxu0 %v816
      %2262 = vmatprep.subr.bf16.mxu0 0
      %2263 = vmatpush1.bf16.msra.mxu0 %v817
      %2264 = vmatprep.subr.bf16.mxu0 0
      %2265 = vmatpush1.bf16.msra.mxu0 %v818
      %2266 = vmatprep.subr.bf16.mxu0 0
      %2267 = vmatpush1.bf16.msra.mxu0 %v819
      %2268 = vmatprep.subr.bf16.mxu0 0
      %2269 = vmatpush1.bf16.msra.mxu0 %v820
      %2270 = vmatprep.subr.bf16.mxu0 0
      %2271 = vmatpush1.bf16.msra.mxu0 %v821
      %2272 = vmatprep.subr.bf16.mxu0 0
      %2273 = vmatpush1.bf16.msra.mxu0 %v822
      %2274 = vmatprep.subr.bf16.mxu0 0
      %2275 = vmatpush1.bf16.msra.mxu0 %v823
      %2276 = vmatprep.subr.bf16.mxu0 0
      %2277 = vmatpush1.bf16.msra.mxu0 %v824
      %2278 = vmatprep.subr.bf16.mxu0 0
      %2279 = vmatpush1.bf16.msra.mxu0 %v825
      %2280 = vmatprep.subr.bf16.mxu0 0
      %2281 = vmatpush1.bf16.msra.mxu0 %v826
      %2282 = vmatprep.subr.bf16.mxu0 0
      %2283 = vmatpush1.bf16.msra.mxu0 %v827
      %2284 = vmatprep.subr.bf16.mxu0 0
      %2285 = vmatpush1.bf16.msra.mxu0 %v828
      %2286 = vmatprep.subr.bf16.mxu0 0
      %2287 = vmatpush1.bf16.msra.mxu0 %v829
      %2288 = vmatprep.mubr.bf16.mxu0 %v2129
      %2289 = vmatmul.mubr.bf16.gmra.mrb[0].mxu0 %v2128
      %v2290 = vpop.f32.mrb[0].mxu0
      %v2291 = vadd.f32 0.0, %v2290
      %v2292 = vpop.f32.mrb[0].mxu0
      %v2293 = vpop.f32.mrb[0].mxu0
      %v2294 = vadd.f32 0.0, %v2293
      %v2295 = vpop.f32.mrb[0].mxu0
      %2296 = vmatprep.mubr.bf16.mxu0 %v2131
      %2297 = vmatmul.mubr.bf16.gmra.mrb[0].mxu0 %v2130
      %v2298 = vpop.f32.mrb[0].mxu0
      %v2299 = vadd.f32 0.0, %v2298
      %v2300 = vpop.f32.mrb[0].mxu0
      %v2301 = vpop.f32.mrb[0].mxu0
      %v2302 = vadd.f32 0.0, %v2301
      %v2303 = vpop.f32.mrb[0].mxu0
      %2304 = vmatprep.mubr.bf16.mxu0 %v2133
      %2305 = vmatmul.mubr.bf16.gmra.mrb[0].mxu0 %v2132
      %v2306 = vpop.f32.mrb[0].mxu0
      %v2307 = vadd.f32 0.0, %v2306
      %v2308 = vpop.f32.mrb[0].mxu0
      %v2309 = vpop.f32.mrb[0].mxu0
      %v2310 = vadd.f32 0.0, %v2309
      %v2311 = vpop.f32.mrb[0].mxu0
      %2312 = vmatprep.mubr.bf16.mxu0 %v2135
      %2313 = vmatmul.mubr.bf16.gmra.mrb[0].mxu0 %v2134
      %v2314 = vpop.f32.mrb[0].mxu0
      %v2315 = vadd.f32 0.0, %v2314
      %v2316 = vpop.f32.mrb[0].mxu0
      %v2317 = vpop.f32.mrb[0].mxu0
      %v2318 = vadd.f32 0.0, %v2317
      %v2319 = vpop.f32.mrb[0].mxu0
      %2320 = vmatprep.mubr.bf16.mxu0 %v2137
      %2321 = vmatmul.mubr.bf16.gmra.mrb[0].mxu0 %v2136
      %v2322 = vpop.f32.mrb[0].mxu0
      %v2323 = vadd.f32 0.0, %v2322
      %v2324 = vpop.f32.mrb[0].mxu0
      %v2325 = vpop.f32.mrb[0].mxu0
      %v2326 = vadd.f32 0.0, %v2325
      %v2327 = vpop.f32.mrb[0].mxu0
      %2328 = vmatprep.mubr.bf16.mxu0 %v2139
      %2329 = vmatmul.mubr.bf16.gmra.mrb[0].mxu0 %v2138
      %v2330 = vpop.f32.mrb[0].mxu0
      %v2331 = vadd.f32 0.0, %v2330
      %v2332 = vpop.f32.mrb[0].mxu0
      %v2333 = vpop.f32.mrb[0].mxu0
      %v2334 = vadd.f32 0.0, %v2333
      %v2335 = vpop.f32.mrb[0].mxu0
      %2336 = vmatprep.mubr.bf16.mxu0 %v2141
      %2337 = vmatmul.mubr.bf16.gmra.mrb[0].mxu0 %v2140
      %v2338 = vpop.f32.mrb[0].mxu0
      %v2339 = vadd.f32 0.0, %v2338
      %v2340 = vpop.f32.mrb[0].mxu0
      %v2341 = vpop.f32.mrb[0].mxu0
      %v2342 = vadd.f32 0.0, %v2341
      %v2343 = vpop.f32.mrb[0].mxu0
      %2344 = vmatprep.mubr.bf16.mxu0 %v2143
      %2345 = vmatmul.mubr.bf16.gmra.mrb[0].mxu0 %v2142
      %v2346 = vpop.f32.mrb[0].mxu0
      %v2347 = vadd.f32 0.0, %v2346
      %v2348 = vpop.f32.mrb[0].mxu0
      %v2349 = vpop.f32.mrb[0].mxu0
      %v2350 = vadd.f32 0.0, %v2349
      %v2351 = vpop.f32.mrb[0].mxu0
      %2352 = vmatprep.mubr.bf16.mxu0 %v2145
      %2353 = vmatmul.mubr.bf16.gmra.mrb[0].mxu0 %v2144
      %v2354 = vpop.f32.mrb[0].mxu0
      %v2355 = vadd.f32 0.0, %v2354
      %v2356 = vpop.f32.mrb[0].mxu0
      %v2357 = vpop.f32.mrb[0].mxu0
      %v2358 = vadd.f32 0.0, %v2357
      %v2359 = vpop.f32.mrb[0].mxu0
      %2360 = vmatprep.mubr.bf16.mxu0 %v2147
      %2361 = vmatmul.mubr.bf16.gmra.mrb[0].mxu0 %v2146
      %v2362 = vpop.f32.mrb[0].mxu0
      %v2363 = vadd.f32 0.0, %v2362
      %v2364 = vpop.f32.mrb[0].mxu0
      %v2365 = vpop.f32.mrb[0].mxu0
      %v2366 = vadd.f32 0.0, %v2365
      %v2367 = vpop.f32.mrb[0].mxu0
      %2368 = vmatprep.mubr.bf16.mxu0 %v2149
      %2369 = vmatmul.mubr.bf16.gmra.mrb[0].mxu0 %v2148
      %v2370 = vpop.f32.mrb[0].mxu0
      %v2371 = vadd.f32 0.0, %v2370
      %v2372 = vpop.f32.mrb[0].mxu0
      %v2373 = vpop.f32.mrb[0].mxu0
      %v2374 = vadd.f32 0.0, %v2373
      %v2375 = vpop.f32.mrb[0].mxu0
      %2376 = vmatprep.mubr.bf16.mxu0 %v2151
      %2377 = vmatmul.mubr.bf16.gmra.mrb[0].mxu0 %v2150
      %v2378 = vpop.f32.mrb[0].mxu0
      %v2379 = vadd.f32 0.0, %v2378
      %v2380 = vpop.f32.mrb[0].mxu0
      %v2381 = vpop.f32.mrb[0].mxu0
      %v2382 = vadd.f32 0.0, %v2381
      %v2383 = vpop.f32.mrb[0].mxu0
      %2384 = vmatprep.mubr.bf16.mxu0 %v2153
      %2385 = vmatmul.mubr.bf16.gmra.mrb[0].mxu0 %v2152
      %v2386 = vpop.f32.mrb[0].mxu0
      %v2387 = vadd.f32 0.0, %v2386
      %v2388 = vpop.f32.mrb[0].mxu0
      %v2389 = vpop.f32.mrb[0].mxu0
      %v2390 = vadd.f32 0.0, %v2389
      %v2391 = vpop.f32.mrb[0].mxu0
      %2392 = vmatprep.mubr.bf16.mxu0 %v2155
      %2393 = vmatmul.mubr.bf16.gmra.mrb[0].mxu0 %v2154
      %v2394 = vpop.f32.mrb[0].mxu0
      %v2395 = vadd.f32 0.0, %v2394
      %v2396 = vpop.f32.mrb[0].mxu0
      %v2397 = vpop.f32.mrb[0].mxu0
      %v2398 = vadd.f32 0.0, %v2397
      %v2399 = vpop.f32.mrb[0].mxu0
      %2400 = vmatprep.mubr.bf16.mxu0 %v2157
      %2401 = vmatmul.mubr.bf16.gmra.mrb[0].mxu0 %v2156
      %v2402 = vpop.f32.mrb[0].mxu0
      %v2403 = vadd.f32 0.0, %v2402
      %v2404 = vpop.f32.mrb[0].mxu0
      %v2405 = vpop.f32.mrb[0].mxu0
      %v2406 = vadd.f32 0.0, %v2405
      %v2407 = vpop.f32.mrb[0].mxu0
      %2408 = vmatprep.mubr.bf16.mxu0 %v2159
      %2409 = vmatmul.mubr.bf16.gmra.mrb[0].mxu0 %v2158
      %v2410 = vpop.f32.mrb[0].mxu0
      %v2411 = vadd.f32 0.0, %v2410
      %v2412 = vpop.f32.mrb[0].mxu0
      %v2413 = vpop.f32.mrb[0].mxu0
      %v2414 = vadd.f32 0.0, %v2413
      %v2415 = vpop.f32.mrb[0].mxu0
      %2416 = vmatprep.mubr.bf16.mxu0 %v2161
      %2417 = vmatmul.mubr.bf16.gmra.mrb[0].mxu0 %v2160
      %v2418 = vpop.f32.mrb[0].mxu0
      %v2419 = vadd.f32 0.0, %v2418
      %v2420 = vpop.f32.mrb[0].mxu0
      %v2421 = vpop.f32.mrb[0].mxu0
      %v2422 = vadd.f32 0.0, %v2421
      %v2423 = vpop.f32.mrb[0].mxu0
      %2424 = vmatprep.mubr.bf16.mxu0 %v2163
      %2425 = vmatmul.mubr.bf16.gmra.mrb[0].mxu0 %v2162
      %v2426 = vpop.f32.mrb[0].mxu0
      %v2427 = vadd.f32 0.0, %v2426
      %v2428 = vpop.f32.mrb[0].mxu0
      %v2429 = vpop.f32.mrb[0].mxu0
      %v2430 = vadd.f32 0.0, %v2429
      %v2431 = vpop.f32.mrb[0].mxu0
      %2432 = vmatprep.mubr.bf16.mxu0 %v2165
      %2433 = vmatmul.mubr.bf16.gmra.mrb[0].mxu0 %v2164
      %v2434 = vpop.f32.mrb[0].mxu0
      %v2435 = vadd.f32 0.0, %v2434
      %v2436 = vpop.f32.mrb[0].mxu0
      %v2437 = vpop.f32.mrb[0].mxu0
      %v2438 = vadd.f32 0.0, %v2437
      %v2439 = vpop.f32.mrb[0].mxu0
      %2440 = vmatprep.mubr.bf16.mxu0 %v2167
      %2441 = vmatmul.mubr.bf16.gmra.mrb[0].mxu0 %v2166
      %v2442 = vpop.f32.mrb[0].mxu0
      %v2443 = vadd.f32 0.0, %v2442
      %v2444 = vpop.f32.mrb[0].mxu0
      %v2445 = vpop.f32.mrb[0].mxu0
      %v2446 = vadd.f32 0.0, %v2445
      %v2447 = vpop.f32.mrb[0].mxu0
      %2448 = vmatprep.mubr.bf16.mxu0 %v2169
      %2449 = vmatmul.mubr.bf16.gmra.mrb[0].mxu0 %v2168
      %v2450 = vpop.f32.mrb[0].mxu0
      %v2451 = vadd.f32 0.0, %v2450
      %v2452 = vpop.f32.mrb[0].mxu0
      %v2453 = vpop.f32.mrb[0].mxu0
      %v2454 = vadd.f32 0.0, %v2453
      %v2455 = vpop.f32.mrb[0].mxu0
      %2456 = vmatprep.mubr.bf16.mxu0 %v2171
      %2457 = vmatmul.mubr.bf16.gmra.mrb[0].mxu0 %v2170
      %v2458 = vpop.f32.mrb[0].mxu0
      %v2459 = vadd.f32 0.0, %v2458
      %v2460 = vpop.f32.mrb[0].mxu0
      %v2461 = vpop.f32.mrb[0].mxu0
      %v2462 = vadd.f32 0.0, %v2461
      %v2463 = vpop.f32.mrb[0].mxu0
      %2464 = vmatprep.mubr.bf16.mxu0 %v2173
      %2465 = vmatmul.mubr.bf16.gmra.mrb[0].mxu0 %v2172
      %v2466 = vpop.f32.mrb[0].mxu0
      %v2467 = vadd.f32 0.0, %v2466
      %v2468 = vpop.f32.mrb[0].mxu0
      %v2469 = vpop.f32.mrb[0].mxu0
      %v2470 = vadd.f32 0.0, %v2469
      %v2471 = vpop.f32.mrb[0].mxu0
      %2472 = vmatprep.mubr.bf16.mxu0 %v2175
      %2473 = vmatmul.mubr.bf16.gmra.mrb[0].mxu0 %v2174
      %v2474 = vpop.f32.mrb[0].mxu0
      %v2475 = vadd.f32 0.0, %v2474
      %v2476 = vpop.f32.mrb[0].mxu0
      %v2477 = vpop.f32.mrb[0].mxu0
      %v2478 = vadd.f32 0.0, %v2477
      %v2479 = vpop.f32.mrb[0].mxu0
      %2480 = vmatprep.mubr.bf16.mxu0 %v2177
      %2481 = vmatmul.mubr.bf16.gmra.mrb[0].mxu0 %v2176
      %v2482 = vpop.f32.mrb[0].mxu0
      %v2483 = vadd.f32 0.0, %v2482
      %v2484 = vpop.f32.mrb[0].mxu0
      %v2485 = vpop.f32.mrb[0].mxu0
      %v2486 = vadd.f32 0.0, %v2485
      %v2487 = vpop.f32.mrb[0].mxu0
      %2488 = vmatprep.mubr.bf16.mxu0 %v2179
      %2489 = vmatmul.mubr.bf16.gmra.mrb[0].mxu0 %v2178
      %v2490 = vpop.f32.mrb[0].mxu0
      %v2491 = vadd.f32 0.0, %v2490
      %v2492 = vpop.f32.mrb[0].mxu0
      %v2493 = vpop.f32.mrb[0].mxu0
      %v2494 = vadd.f32 0.0, %v2493
      %v2495 = vpop.f32.mrb[0].mxu0
      %2496 = vmatprep.mubr.bf16.mxu0 %v2181
      %2497 = vmatmul.mubr.bf16.gmra.mrb[0].mxu0 %v2180
      %v2498 = vpop.f32.mrb[0].mxu0
      %v2499 = vadd.f32 0.0, %v2498
      %v2500 = vpop.f32.mrb[0].mxu0
      %v2501 = vpop.f32.mrb[0].mxu0
      %v2502 = vadd.f32 0.0, %v2501
      %v2503 = vpop.f32.mrb[0].mxu0
      %2504 = vmatprep.mubr.bf16.mxu0 %v2183
      %2505 = vmatmul.mubr.bf16.gmra.mrb[0].mxu0 %v2182
      %v2506 = vpop.f32.mrb[0].mxu0
      %v2507 = vadd.f32 0.0, %v2506
      %v2508 = vpop.f32.mrb[0].mxu0
      %v2509 = vpop.f32.mrb[0].mxu0
      %v2510 = vadd.f32 0.0, %v2509
      %v2511 = vpop.f32.mrb[0].mxu0
      %2512 = vmatprep.mubr.bf16.mxu0 %v2185
      %2513 = vmatmul.mubr.bf16.gmra.mrb[0].mxu0 %v2184
      %v2514 = vpop.f32.mrb[0].mxu0
      %v2515 = vadd.f32 0.0, %v2514
      %v2516 = vpop.f32.mrb[0].mxu0
      %v2517 = vpop.f32.mrb[0].mxu0
      %v2518 = vadd.f32 0.0, %v2517
      %v2519 = vpop.f32.mrb[0].mxu0
      %2520 = vmatprep.mubr.bf16.mxu0 %v2187
      %2521 = vmatmul.mubr.bf16.gmra.mrb[0].mxu0 %v2186
      %v2522 = vpop.f32.mrb[0].mxu0
      %v2523 = vadd.f32 0.0, %v2522
      %v2524 = vpop.f32.mrb[0].mxu0
      %v2525 = vpop.f32.mrb[0].mxu0
      %v2526 = vadd.f32 0.0, %v2525
      %v2527 = vpop.f32.mrb[0].mxu0
      %2528 = vmatprep.mubr.bf16.mxu0 %v2189
      %2529 = vmatmul.mubr.bf16.gmra.mrb[0].mxu0 %v2188
      %v2530 = vpop.f32.mrb[0].mxu0
      %v2531 = vadd.f32 0.0, %v2530
      %v2532 = vpop.f32.mrb[0].mxu0
      %v2533 = vpop.f32.mrb[0].mxu0
      %v2534 = vadd.f32 0.0, %v2533
      %v2535 = vpop.f32.mrb[0].mxu0
      %2536 = vmatprep.mubr.bf16.mxu0 %v2191
      %2537 = vmatmul.mubr.bf16.gmra.mrb[0].mxu0 %v2190
      %v2538 = vpop.f32.mrb[0].mxu0
      %v2539 = vadd.f32 0.0, %v2538
      %v2540 = vpop.f32.mrb[0].mxu0
      %v2541 = vpop.f32.mrb[0].mxu0
      %v2542 = vadd.f32 0.0, %v2541
      %v2543 = vpop.f32.mrb[0].mxu0
      %2544 = vdwg.mxu0
      %v2545 = vmax.f32 %v1808, %v2291
      %v2546 = vmax.f32 %v1809, %v2294
      %v2547 = vmax.f32 %v1810, %v2299
      %v2548 = vmax.f32 %v1811, %v2302
      %v2549 = vmax.f32 %v1812, %v2307
      %v2550 = vmax.f32 %v1813, %v2310
      %v2551 = vmax.f32 %v1814, %v2315
      %v2552 = vmax.f32 %v1815, %v2318
      %v2553 = vmax.f32 %v1816, %v2323
      %v2554 = vmax.f32 %v1817, %v2326
      %v2555 = vmax.f32 %v1818, %v2331
      %v2556 = vmax.f32 %v1819, %v2334
      %v2557 = vmax.f32 %v1820, %v2339
      %v2558 = vmax.f32 %v1821, %v2342
      %v2559 = vmax.f32 %v1822, %v2347
      %v2560 = vmax.f32 %v1823, %v2350
      %v2561 = vmax.f32 %v1824, %v2355
      %v2562 = vmax.f32 %v1825, %v2358
      %v2563 = vmax.f32 %v1826, %v2363
      %v2564 = vmax.f32 %v1827, %v2366
      %v2565 = vmax.f32 %v1828, %v2371
      %v2566 = vmax.f32 %v1829, %v2374
      %v2567 = vmax.f32 %v1830, %v2379
      %v2568 = vmax.f32 %v1831, %v2382
      %v2569 = vmax.f32 %v1832, %v2387
      %v2570 = vmax.f32 %v1833, %v2390
      %v2571 = vmax.f32 %v1834, %v2395
      %v2572 = vmax.f32 %v1835, %v2398
      %v2573 = vmax.f32 %v1836, %v2403
      %v2574 = vmax.f32 %v1837, %v2406
      %v2575 = vmax.f32 %v1838, %v2411
      %v2576 = vmax.f32 %v1839, %v2414
      %v2577 = vmax.f32 %v1840, %v2419
      %v2578 = vmax.f32 %v1841, %v2422
      %v2579 = vmax.f32 %v1842, %v2427
      %v2580 = vmax.f32 %v1843, %v2430
      %v2581 = vmax.f32 %v1844, %v2435
      %v2582 = vmax.f32 %v1845, %v2438
      %v2583 = vmax.f32 %v1846, %v2443
      %v2584 = vmax.f32 %v1847, %v2446
      %v2585 = vmax.f32 %v1848, %v2451
      %v2586 = vmax.f32 %v1849, %v2454
      %v2587 = vmax.f32 %v1850, %v2459
      %v2588 = vmax.f32 %v1851, %v2462
      %v2589 = vmax.f32 %v1852, %v2467
      %v2590 = vmax.f32 %v1853, %v2470
      %v2591 = vmax.f32 %v1854, %v2475
      %v2592 = vmax.f32 %v1855, %v2478
      %v2593 = vmax.f32 %v1856, %v2483
      %v2594 = vmax.f32 %v1857, %v2486
      %v2595 = vmax.f32 %v1858, %v2491
      %v2596 = vmax.f32 %v1859, %v2494
      %v2597 = vmax.f32 %v1860, %v2499
      %v2598 = vmax.f32 %v1861, %v2502
      %v2599 = vmax.f32 %v1862, %v2507
      %v2600 = vmax.f32 %v1863, %v2510
      %v2601 = vmax.f32 %v1864, %v2515
      %v2602 = vmax.f32 %v1865, %v2518
      %v2603 = vmax.f32 %v1866, %v2523
      %v2604 = vmax.f32 %v1867, %v2526
      %v2605 = vmax.f32 %v1868, %v2531
      %v2606 = vmax.f32 %v1869, %v2534
      %v2607 = vmax.f32 %v1870, %v2539
      %v2608 = vmax.f32 %v1871, %v2542
      %v2609 = vld [vmem:[%s325] sm:$0xff]
      %v2610 = vld [vmem:[%s325 + $0x8] sm:$0xff]
      %v2611 = vld [vmem:[%s325 + $0x10] sm:$0xff]
      %v2612 = vld [vmem:[%s325 + $0x18] sm:$0xff]
      %v2613 = vld [vmem:[%s325 + $0x20] sm:$0xff]
      %v2614 = vld [vmem:[%s325 + $0x28] sm:$0xff]
      %v2615 = vld [vmem:[%s325 + $0x30] sm:$0xff]
      %v2616 = vld [vmem:[%s325 + $0x38] sm:$0xff]
      %v2617 = vld [vmem:[%s325 + $0x40] sm:$0xff]
      %v2618 = vld [vmem:[%s325 + $0x48] sm:$0xff]
      %v2619 = vld [vmem:[%s325 + $0x50] sm:$0xff]
      %v2620 = vld [vmem:[%s325 + $0x58] sm:$0xff]
      %v2621 = vld [vmem:[%s325 + $0x60] sm:$0xff]
      %v2622 = vld [vmem:[%s325 + $0x68] sm:$0xff]
      %v2623 = vld [vmem:[%s325 + $0x70] sm:$0xff]
      %v2624 = vld [vmem:[%s325 + $0x78] sm:$0xff]
      %v2625 = vld [vmem:[%s325 + $0x80] sm:$0xff]
      %v2626 = vld [vmem:[%s325 + $0x88] sm:$0xff]
      %v2627 = vld [vmem:[%s325 + $0x90] sm:$0xff]
      %v2628 = vld [vmem:[%s325 + $0x98] sm:$0xff]
      %v2629 = vld [vmem:[%s325 + $0xa0] sm:$0xff]
      %v2630 = vld [vmem:[%s325 + $0xa8] sm:$0xff]
      %v2631 = vld [vmem:[%s325 + $0xb0] sm:$0xff]
      %v2632 = vld [vmem:[%s325 + $0xb8] sm:$0xff]
      %v2633 = vld [vmem:[%s325 + $0xc0] sm:$0xff]
      %v2634 = vld [vmem:[%s325 + $0xc8] sm:$0xff]
      %v2635 = vld [vmem:[%s325 + $0xd0] sm:$0xff]
      %v2636 = vld [vmem:[%s325 + $0xd8] sm:$0xff]
      %v2637 = vld [vmem:[%s325 + $0xe0] sm:$0xff]
      %v2638 = vld [vmem:[%s325 + $0xe8] sm:$0xff]
      %v2639 = vld [vmem:[%s325 + $0xf0] sm:$0xff]
      %v2640 = vld [vmem:[%s325 + $0xf8] sm:$0xff]
      %v2641 = vld [vmem:[%s325 + $0x100] sm:$0xff]
      %v2642 = vld [vmem:[%s325 + $0x108] sm:$0xff]
      %v2643 = vld [vmem:[%s325 + $0x110] sm:$0xff]
      %v2644 = vld [vmem:[%s325 + $0x118] sm:$0xff]
      %v2645 = vld [vmem:[%s325 + $0x120] sm:$0xff]
      %v2646 = vld [vmem:[%s325 + $0x128] sm:$0xff]
      %v2647 = vld [vmem:[%s325 + $0x130] sm:$0xff]
      %v2648 = vld [vmem:[%s325 + $0x138] sm:$0xff]
      %v2649 = vld [vmem:[%s325 + $0x140] sm:$0xff]
      %v2650 = vld [vmem:[%s325 + $0x148] sm:$0xff]
      %v2651 = vld [vmem:[%s325 + $0x150] sm:$0xff]
      %v2652 = vld [vmem:[%s325 + $0x158] sm:$0xff]
      %v2653 = vld [vmem:[%s325 + $0x160] sm:$0xff]
      %v2654 = vld [vmem:[%s325 + $0x168] sm:$0xff]
      %v2655 = vld [vmem:[%s325 + $0x170] sm:$0xff]
      %v2656 = vld [vmem:[%s325 + $0x178] sm:$0xff]
      %v2657 = vld [vmem:[%s325 + $0x180] sm:$0xff]
      %v2658 = vld [vmem:[%s325 + $0x188] sm:$0xff]
      %v2659 = vld [vmem:[%s325 + $0x190] sm:$0xff]
      %v2660 = vld [vmem:[%s325 + $0x198] sm:$0xff]
      %v2661 = vld [vmem:[%s325 + $0x1a0] sm:$0xff]
      %v2662 = vld [vmem:[%s325 + $0x1a8] sm:$0xff]
      %v2663 = vld [vmem:[%s325 + $0x1b0] sm:$0xff]
      %v2664 = vld [vmem:[%s325 + $0x1b8] sm:$0xff]
      %v2665 = vld [vmem:[%s325 + $0x1c0] sm:$0xff]
      %v2666 = vld [vmem:[%s325 + $0x1c8] sm:$0xff]
      %v2667 = vld [vmem:[%s325 + $0x1d0] sm:$0xff]
      %v2668 = vld [vmem:[%s325 + $0x1d8] sm:$0xff]
      %v2669 = vld [vmem:[%s325 + $0x1e0] sm:$0xff]
      %v2670 = vld [vmem:[%s325 + $0x1e8] sm:$0xff]
      %v2671 = vld [vmem:[%s325 + $0x1f0] sm:$0xff]
      %v2672 = vld [vmem:[%s325 + $0x1f8] sm:$0xff]
      %v2737 = vunpack.c.l.b16 %v2609
      %v2738 = vunpack.c.h.b16 %v2609
      %v2739 = vunpack.c.l.b16 %v2610
      %v2740 = vunpack.c.h.b16 %v2610
      %v2741 = vunpack.c.l.b16 %v2611
      %v2742 = vunpack.c.h.b16 %v2611
      %v2743 = vunpack.c.l.b16 %v2612
      %v2744 = vunpack.c.h.b16 %v2612
      %v2745 = vunpack.c.l.b16 %v2613
      %v2746 = vunpack.c.h.b16 %v2613
      %v2747 = vunpack.c.l.b16 %v2614
      %v2748 = vunpack.c.h.b16 %v2614
      %v2749 = vunpack.c.l.b16 %v2615
      %v2750 = vunpack.c.h.b16 %v2615
      %v2751 = vunpack.c.l.b16 %v2616
      %v2752 = vunpack.c.h.b16 %v2616
      %v2753 = vunpack.c.l.b16 %v2617
      %v2754 = vunpack.c.h.b16 %v2617
      %v2755 = vunpack.c.l.b16 %v2618
      %v2756 = vunpack.c.h.b16 %v2618
      %v2757 = vunpack.c.l.b16 %v2619
      %v2758 = vunpack.c.h.b16 %v2619
      %v2759 = vunpack.c.l.b16 %v2620
      %v2760 = vunpack.c.h.b16 %v2620
      %v2761 = vunpack.c.l.b16 %v2621
      %v2762 = vunpack.c.h.b16 %v2621
      %v2763 = vunpack.c.l.b16 %v2622
      %v2764 = vunpack.c.h.b16 %v2622
      %v2765 = vunpack.c.l.b16 %v2623
      %v2766 = vunpack.c.h.b16 %v2623
      %v2767 = vunpack.c.l.b16 %v2624
      %v2768 = vunpack.c.h.b16 %v2624
      %v2769 = vunpack.c.l.b16 %v2625
      %v2770 = vunpack.c.h.b16 %v2625
      %v2771 = vunpack.c.l.b16 %v2626
      %v2772 = vunpack.c.h.b16 %v2626
      %v2773 = vunpack.c.l.b16 %v2627
      %v2774 = vunpack.c.h.b16 %v2627
      %v2775 = vunpack.c.l.b16 %v2628
      %v2776 = vunpack.c.h.b16 %v2628
      %v2777 = vunpack.c.l.b16 %v2629
      %v2778 = vunpack.c.h.b16 %v2629
      %v2779 = vunpack.c.l.b16 %v2630
      %v2780 = vunpack.c.h.b16 %v2630
      %v2781 = vunpack.c.l.b16 %v2631
      %v2782 = vunpack.c.h.b16 %v2631
      %v2783 = vunpack.c.l.b16 %v2632
      %v2784 = vunpack.c.h.b16 %v2632
      %v2785 = vunpack.c.l.b16 %v2633
      %v2786 = vunpack.c.h.b16 %v2633
      %v2787 = vunpack.c.l.b16 %v2634
      %v2788 = vunpack.c.h.b16 %v2634
      %v2789 = vunpack.c.l.b16 %v2635
      %v2790 = vunpack.c.h.b16 %v2635
      %v2791 = vunpack.c.l.b16 %v2636
      %v2792 = vunpack.c.h.b16 %v2636
      %v2793 = vunpack.c.l.b16 %v2637
      %v2794 = vunpack.c.h.b16 %v2637
      %v2795 = vunpack.c.l.b16 %v2638
      %v2796 = vunpack.c.h.b16 %v2638
      %v2797 = vunpack.c.l.b16 %v2639
      %v2798 = vunpack.c.h.b16 %v2639
      %v2799 = vunpack.c.l.b16 %v2640
      %v2800 = vunpack.c.h.b16 %v2640
      %v2801 = vunpack.c.l.b16 %v2641
      %v2802 = vunpack.c.h.b16 %v2641
      %v2803 = vunpack.c.l.b16 %v2642
      %v2804 = vunpack.c.h.b16 %v2642
      %v2805 = vunpack.c.l.b16 %v2643
      %v2806 = vunpack.c.h.b16 %v2643
      %v2807 = vunpack.c.l.b16 %v2644
      %v2808 = vunpack.c.h.b16 %v2644
      %v2809 = vunpack.c.l.b16 %v2645
      %v2810 = vunpack.c.h.b16 %v2645
      %v2811 = vunpack.c.l.b16 %v2646
      %v2812 = vunpack.c.h.b16 %v2646
      %v2813 = vunpack.c.l.b16 %v2647
      %v2814 = vunpack.c.h.b16 %v2647
      %v2815 = vunpack.c.l.b16 %v2648
      %v2816 = vunpack.c.h.b16 %v2648
      %v2817 = vunpack.c.l.b16 %v2649
      %v2818 = vunpack.c.h.b16 %v2649
      %v2819 = vunpack.c.l.b16 %v2650
      %v2820 = vunpack.c.h.b16 %v2650
      %v2821 = vunpack.c.l.b16 %v2651
      %v2822 = vunpack.c.h.b16 %v2651
      %v2823 = vunpack.c.l.b16 %v2652
      %v2824 = vunpack.c.h.b16 %v2652
      %v2825 = vunpack.c.l.b16 %v2653
      %v2826 = vunpack.c.h.b16 %v2653
      %v2827 = vunpack.c.l.b16 %v2654
      %v2828 = vunpack.c.h.b16 %v2654
      %v2829 = vunpack.c.l.b16 %v2655
      %v2830 = vunpack.c.h.b16 %v2655
      %v2831 = vunpack.c.l.b16 %v2656
      %v2832 = vunpack.c.h.b16 %v2656
      %v2833 = vunpack.c.l.b16 %v2657
      %v2834 = vunpack.c.h.b16 %v2657
      %v2835 = vunpack.c.l.b16 %v2658
      %v2836 = vunpack.c.h.b16 %v2658
      %v2837 = vunpack.c.l.b16 %v2659
      %v2838 = vunpack.c.h.b16 %v2659
      %v2839 = vunpack.c.l.b16 %v2660
      %v2840 = vunpack.c.h.b16 %v2660
      %v2841 = vunpack.c.l.b16 %v2661
      %v2842 = vunpack.c.h.b16 %v2661
      %v2843 = vunpack.c.l.b16 %v2662
      %v2844 = vunpack.c.h.b16 %v2662
      %v2845 = vunpack.c.l.b16 %v2663
      %v2846 = vunpack.c.h.b16 %v2663
      %v2847 = vunpack.c.l.b16 %v2664
      %v2848 = vunpack.c.h.b16 %v2664
      %v2849 = vunpack.c.l.b16 %v2665
      %v2850 = vunpack.c.h.b16 %v2665
      %v2851 = vunpack.c.l.b16 %v2666
      %v2852 = vunpack.c.h.b16 %v2666
      %v2853 = vunpack.c.l.b16 %v2667
      %v2854 = vunpack.c.h.b16 %v2667
      %v2855 = vunpack.c.l.b16 %v2668
      %v2856 = vunpack.c.h.b16 %v2668
      %v2857 = vunpack.c.l.b16 %v2669
      %v2858 = vunpack.c.h.b16 %v2669
      %v2859 = vunpack.c.l.b16 %v2670
      %v2860 = vunpack.c.h.b16 %v2670
      %v2861 = vunpack.c.l.b16 %v2671
      %v2862 = vunpack.c.h.b16 %v2671
      %v2863 = vunpack.c.l.b16 %v2672
      %v2864 = vunpack.c.h.b16 %v2672
      %v2865 = vpack.c.b16 %v2739, %v2737
      %v2866 = vpack.c.b16 %v2740, %v2738
      %v2867 = vpack.c.b16 %v2743, %v2741
      %v2868 = vpack.c.b16 %v2744, %v2742
      %v2869 = vpack.c.b16 %v2747, %v2745
      %v2870 = vpack.c.b16 %v2748, %v2746
      %v2871 = vpack.c.b16 %v2751, %v2749
      %v2872 = vpack.c.b16 %v2752, %v2750
      %v2873 = vpack.c.b16 %v2755, %v2753
      %v2874 = vpack.c.b16 %v2756, %v2754
      %v2875 = vpack.c.b16 %v2759, %v2757
      %v2876 = vpack.c.b16 %v2760, %v2758
      %v2877 = vpack.c.b16 %v2763, %v2761
      %v2878 = vpack.c.b16 %v2764, %v2762
      %v2879 = vpack.c.b16 %v2767, %v2765
      %v2880 = vpack.c.b16 %v2768, %v2766
      %v2881 = vpack.c.b16 %v2771, %v2769
      %v2882 = vpack.c.b16 %v2772, %v2770
      %v2883 = vpack.c.b16 %v2775, %v2773
      %v2884 = vpack.c.b16 %v2776, %v2774
      %v2885 = vpack.c.b16 %v2779, %v2777
      %v2886 = vpack.c.b16 %v2780, %v2778
      %v2887 = vpack.c.b16 %v2783, %v2781
      %v2888 = vpack.c.b16 %v2784, %v2782
      %v2889 = vpack.c.b16 %v2787, %v2785
      %v2890 = vpack.c.b16 %v2788, %v2786
      %v2891 = vpack.c.b16 %v2791, %v2789
      %v2892 = vpack.c.b16 %v2792, %v2790
      %v2893 = vpack.c.b16 %v2795, %v2793
      %v2894 = vpack.c.b16 %v2796, %v2794
      %v2895 = vpack.c.b16 %v2799, %v2797
      %v2896 = vpack.c.b16 %v2800, %v2798
      %v2897 = vpack.c.b16 %v2803, %v2801
      %v2898 = vpack.c.b16 %v2804, %v2802
      %v2899 = vpack.c.b16 %v2807, %v2805
      %v2900 = vpack.c.b16 %v2808, %v2806
      %v2901 = vpack.c.b16 %v2811, %v2809
      %v2902 = vpack.c.b16 %v2812, %v2810
      %v2903 = vpack.c.b16 %v2815, %v2813
      %v2904 = vpack.c.b16 %v2816, %v2814
      %v2905 = vpack.c.b16 %v2819, %v2817
      %v2906 = vpack.c.b16 %v2820, %v2818
      %v2907 = vpack.c.b16 %v2823, %v2821
      %v2908 = vpack.c.b16 %v2824, %v2822
      %v2909 = vpack.c.b16 %v2827, %v2825
      %v2910 = vpack.c.b16 %v2828, %v2826
      %v2911 = vpack.c.b16 %v2831, %v2829
      %v2912 = vpack.c.b16 %v2832, %v2830
      %v2913 = vpack.c.b16 %v2835, %v2833
      %v2914 = vpack.c.b16 %v2836, %v2834
      %v2915 = vpack.c.b16 %v2839, %v2837
      %v2916 = vpack.c.b16 %v2840, %v2838
      %v2917 = vpack.c.b16 %v2843, %v2841
      %v2918 = vpack.c.b16 %v2844, %v2842
      %v2919 = vpack.c.b16 %v2847, %v2845
      %v2920 = vpack.c.b16 %v2848, %v2846
      %v2921 = vpack.c.b16 %v2851, %v2849
      %v2922 = vpack.c.b16 %v2852, %v2850
      %v2923 = vpack.c.b16 %v2855, %v2853
      %v2924 = vpack.c.b16 %v2856, %v2854
      %v2925 = vpack.c.b16 %v2859, %v2857
      %v2926 = vpack.c.b16 %v2860, %v2858
      %v2927 = vpack.c.b16 %v2863, %v2861
      %v2928 = vpack.c.b16 %v2864, %v2862
      %2993 = vmatprep.subr.bf16.mxu0 0
      %2994 = vmatpush1.bf16.msra.mxu0 %v814
      %2995 = vmatprep.subr.bf16.mxu0 0
      %2996 = vmatpush1.bf16.msra.mxu0 %v815
      %2997 = vmatprep.subr.bf16.mxu0 0
      %2998 = vmatpush1.bf16.msra.mxu0 %v816
      %2999 = vmatprep.subr.bf16.mxu0 0
      %3000 = vmatpush1.bf16.msra.mxu0 %v817
      %3001 = vmatprep.subr.bf16.mxu0 0
      %3002 = vmatpush1.bf16.msra.mxu0 %v818
      %3003 = vmatprep.subr.bf16.mxu0 0
      %3004 = vmatpush1.bf16.msra.mxu0 %v819
      %3005 = vmatprep.subr.bf16.mxu0 0
      %3006 = vmatpush1.bf16.msra.mxu0 %v820
      %3007 = vmatprep.subr.bf16.mxu0 0
      %3008 = vmatpush1.bf16.msra.mxu0 %v821
      %3009 = vmatprep.subr.bf16.mxu0 0
      %3010 = vmatpush1.bf16.msra.mxu0 %v822
      %3011 = vmatprep.subr.bf16.mxu0 0
      %3012 = vmatpush1.bf16.msra.mxu0 %v823
      %3013 = vmatprep.subr.bf16.mxu0 0
      %3014 = vmatpush1.bf16.msra.mxu0 %v824
      %3015 = vmatprep.subr.bf16.mxu0 0
      %3016 = vmatpush1.bf16.msra.mxu0 %v825
      %3017 = vmatprep.subr.bf16.mxu0 0
      %3018 = vmatpush1.bf16.msra.mxu0 %v826
      %3019 = vmatprep.subr.bf16.mxu0 0
      %3020 = vmatpush1.bf16.msra.mxu0 %v827
      %3021 = vmatprep.subr.bf16.mxu0 0
      %3022 = vmatpush1.bf16.msra.mxu0 %v828
      %3023 = vmatprep.subr.bf16.mxu0 0
      %3024 = vmatpush1.bf16.msra.mxu0 %v829
      %3025 = vmatprep.mubr.bf16.mxu0 %v2866
      %3026 = vmatmul.mubr.bf16.gmra.mrb[0].mxu0 %v2865
      %v3027 = vpop.f32.mrb[0].mxu0
      %v3028 = vadd.f32 0.0, %v3027
      %v3029 = vpop.f32.mrb[0].mxu0
      %v3030 = vpop.f32.mrb[0].mxu0
      %v3031 = vadd.f32 0.0, %v3030
      %v3032 = vpop.f32.mrb[0].mxu0
      %3033 = vmatprep.mubr.bf16.mxu0 %v2868
      %3034 = vmatmul.mubr.bf16.gmra.mrb[0].mxu0 %v2867
      %v3035 = vpop.f32.mrb[0].mxu0
      %v3036 = vadd.f32 0.0, %v3035
      %v3037 = vpop.f32.mrb[0].mxu0
      %v3038 = vpop.f32.mrb[0].mxu0
      %v3039 = vadd.f32 0.0, %v3038
      %v3040 = vpop.f32.mrb[0].mxu0
      %3041 = vmatprep.mubr.bf16.mxu0 %v2870
      %3042 = vmatmul.mubr.bf16.gmra.mrb[0].mxu0 %v2869
      %v3043 = vpop.f32.mrb[0].mxu0
      %v3044 = vadd.f32 0.0, %v3043
      %v3045 = vpop.f32.mrb[0].mxu0
      %v3046 = vpop.f32.mrb[0].mxu0
      %v3047 = vadd.f32 0.0, %v3046
      %v3048 = vpop.f32.mrb[0].mxu0
      %3049 = vmatprep.mubr.bf16.mxu0 %v2872
      %3050 = vmatmul.mubr.bf16.gmra.mrb[0].mxu0 %v2871
      %v3051 = vpop.f32.mrb[0].mxu0
      %v3052 = vadd.f32 0.0, %v3051
      %v3053 = vpop.f32.mrb[0].mxu0
      %v3054 = vpop.f32.mrb[0].mxu0
      %v3055 = vadd.f32 0.0, %v3054
      %v3056 = vpop.f32.mrb[0].mxu0
      %3057 = vmatprep.mubr.bf16.mxu0 %v2874
      %3058 = vmatmul.mubr.bf16.gmra.mrb[0].mxu0 %v2873
      %v3059 = vpop.f32.mrb[0].mxu0
      %v3060 = vadd.f32 0.0, %v3059
      %v3061 = vpop.f32.mrb[0].mxu0
      %v3062 = vpop.f32.mrb[0].mxu0
      %v3063 = vadd.f32 0.0, %v3062
      %v3064 = vpop.f32.mrb[0].mxu0
      %3065 = vmatprep.mubr.bf16.mxu0 %v2876
      %3066 = vmatmul.mubr.bf16.gmra.mrb[0].mxu0 %v2875
      %v3067 = vpop.f32.mrb[0].mxu0
      %v3068 = vadd.f32 0.0, %v3067
      %v3069 = vpop.f32.mrb[0].mxu0
      %v3070 = vpop.f32.mrb[0].mxu0
      %v3071 = vadd.f32 0.0, %v3070
      %v3072 = vpop.f32.mrb[0].mxu0
      %3073 = vmatprep.mubr.bf16.mxu0 %v2878
      %3074 = vmatmul.mubr.bf16.gmra.mrb[0].mxu0 %v2877
      %v3075 = vpop.f32.mrb[0].mxu0
      %v3076 = vadd.f32 0.0, %v3075
      %v3077 = vpop.f32.mrb[0].mxu0
      %v3078 = vpop.f32.mrb[0].mxu0
      %v3079 = vadd.f32 0.0, %v3078
      %v3080 = vpop.f32.mrb[0].mxu0
      %3081 = vmatprep.mubr.bf16.mxu0 %v2880
      %3082 = vmatmul.mubr.bf16.gmra.mrb[0].mxu0 %v2879
      %v3083 = vpop.f32.mrb[0].mxu0
      %v3084 = vadd.f32 0.0, %v3083
      %v3085 = vpop.f32.mrb[0].mxu0
      %v3086 = vpop.f32.mrb[0].mxu0
      %v3087 = vadd.f32 0.0, %v3086
      %v3088 = vpop.f32.mrb[0].mxu0
      %3089 = vmatprep.mubr.bf16.mxu0 %v2882
      %3090 = vmatmul.mubr.bf16.gmra.mrb[0].mxu0 %v2881
      %v3091 = vpop.f32.mrb[0].mxu0
      %v3092 = vadd.f32 0.0, %v3091
      %v3093 = vpop.f32.mrb[0].mxu0
      %v3094 = vpop.f32.mrb[0].mxu0
      %v3095 = vadd.f32 0.0, %v3094
      %v3096 = vpop.f32.mrb[0].mxu0
      %3097 = vmatprep.mubr.bf16.mxu0 %v2884
      %3098 = vmatmul.mubr.bf16.gmra.mrb[0].mxu0 %v2883
      %v3099 = vpop.f32.mrb[0].mxu0
      %v3100 = vadd.f32 0.0, %v3099
      %v3101 = vpop.f32.mrb[0].mxu0
      %v3102 = vpop.f32.mrb[0].mxu0
      %v3103 = vadd.f32 0.0, %v3102
      %v3104 = vpop.f32.mrb[0].mxu0
      %3105 = vmatprep.mubr.bf16.mxu0 %v2886
      %3106 = vmatmul.mubr.bf16.gmra.mrb[0].mxu0 %v2885
      %v3107 = vpop.f32.mrb[0].mxu0
      %v3108 = vadd.f32 0.0, %v3107
      %v3109 = vpop.f32.mrb[0].mxu0
      %v3110 = vpop.f32.mrb[0].mxu0
      %v3111 = vadd.f32 0.0, %v3110
      %v3112 = vpop.f32.mrb[0].mxu0
      %3113 = vmatprep.mubr.bf16.mxu0 %v2888
      %3114 = vmatmul.mubr.bf16.gmra.mrb[0].mxu0 %v2887
      %v3115 = vpop.f32.mrb[0].mxu0
      %v3116 = vadd.f32 0.0, %v3115
      %v3117 = vpop.f32.mrb[0].mxu0
      %v3118 = vpop.f32.mrb[0].mxu0
      %v3119 = vadd.f32 0.0, %v3118
      %v3120 = vpop.f32.mrb[0].mxu0
      %3121 = vmatprep.mubr.bf16.mxu0 %v2890
      %3122 = vmatmul.mubr.bf16.gmra.mrb[0].mxu0 %v2889
      %v3123 = vpop.f32.mrb[0].mxu0
      %v3124 = vadd.f32 0.0, %v3123
      %v3125 = vpop.f32.mrb[0].mxu0
      %v3126 = vpop.f32.mrb[0].mxu0
      %v3127 = vadd.f32 0.0, %v3126
      %v3128 = vpop.f32.mrb[0].mxu0
      %3129 = vmatprep.mubr.bf16.mxu0 %v2892
      %3130 = vmatmul.mubr.bf16.gmra.mrb[0].mxu0 %v2891
      %v3131 = vpop.f32.mrb[0].mxu0
      %v3132 = vadd.f32 0.0, %v3131
      %v3133 = vpop.f32.mrb[0].mxu0
      %v3134 = vpop.f32.mrb[0].mxu0
      %v3135 = vadd.f32 0.0, %v3134
      %v3136 = vpop.f32.mrb[0].mxu0
      %3137 = vmatprep.mubr.bf16.mxu0 %v2894
      %3138 = vmatmul.mubr.bf16.gmra.mrb[0].mxu0 %v2893
      %v3139 = vpop.f32.mrb[0].mxu0
      %v3140 = vadd.f32 0.0, %v3139
      %v3141 = vpop.f32.mrb[0].mxu0
      %v3142 = vpop.f32.mrb[0].mxu0
      %v3143 = vadd.f32 0.0, %v3142
      %v3144 = vpop.f32.mrb[0].mxu0
      %3145 = vmatprep.mubr.bf16.mxu0 %v2896
      %3146 = vmatmul.mubr.bf16.gmra.mrb[0].mxu0 %v2895
      %v3147 = vpop.f32.mrb[0].mxu0
      %v3148 = vadd.f32 0.0, %v3147
      %v3149 = vpop.f32.mrb[0].mxu0
      %v3150 = vpop.f32.mrb[0].mxu0
      %v3151 = vadd.f32 0.0, %v3150
      %v3152 = vpop.f32.mrb[0].mxu0
      %3153 = vmatprep.mubr.bf16.mxu0 %v2898
      %3154 = vmatmul.mubr.bf16.gmra.mrb[0].mxu0 %v2897
      %v3155 = vpop.f32.mrb[0].mxu0
      %v3156 = vadd.f32 0.0, %v3155
      %v3157 = vpop.f32.mrb[0].mxu0
      %v3158 = vpop.f32.mrb[0].mxu0
      %v3159 = vadd.f32 0.0, %v3158
      %v3160 = vpop.f32.mrb[0].mxu0
      %3161 = vmatprep.mubr.bf16.mxu0 %v2900
      %3162 = vmatmul.mubr.bf16.gmra.mrb[0].mxu0 %v2899
      %v3163 = vpop.f32.mrb[0].mxu0
      %v3164 = vadd.f32 0.0, %v3163
      %v3165 = vpop.f32.mrb[0].mxu0
      %v3166 = vpop.f32.mrb[0].mxu0
      %v3167 = vadd.f32 0.0, %v3166
      %v3168 = vpop.f32.mrb[0].mxu0
      %3169 = vmatprep.mubr.bf16.mxu0 %v2902
      %3170 = vmatmul.mubr.bf16.gmra.mrb[0].mxu0 %v2901
      %v3171 = vpop.f32.mrb[0].mxu0
      %v3172 = vadd.f32 0.0, %v3171
      %v3173 = vpop.f32.mrb[0].mxu0
      %v3174 = vpop.f32.mrb[0].mxu0
      %v3175 = vadd.f32 0.0, %v3174
      %v3176 = vpop.f32.mrb[0].mxu0
      %3177 = vmatprep.mubr.bf16.mxu0 %v2904
      %3178 = vmatmul.mubr.bf16.gmra.mrb[0].mxu0 %v2903
      %v3179 = vpop.f32.mrb[0].mxu0
      %v3180 = vadd.f32 0.0, %v3179
      %v3181 = vpop.f32.mrb[0].mxu0
      %v3182 = vpop.f32.mrb[0].mxu0
      %v3183 = vadd.f32 0.0, %v3182
      %v3184 = vpop.f32.mrb[0].mxu0
      %3185 = vmatprep.mubr.bf16.mxu0 %v2906
      %3186 = vmatmul.mubr.bf16.gmra.mrb[0].mxu0 %v2905
      %v3187 = vpop.f32.mrb[0].mxu0
      %v3188 = vadd.f32 0.0, %v3187
      %v3189 = vpop.f32.mrb[0].mxu0
      %v3190 = vpop.f32.mrb[0].mxu0
      %v3191 = vadd.f32 0.0, %v3190
      %v3192 = vpop.f32.mrb[0].mxu0
      %3193 = vmatprep.mubr.bf16.mxu0 %v2908
      %3194 = vmatmul.mubr.bf16.gmra.mrb[0].mxu0 %v2907
      %v3195 = vpop.f32.mrb[0].mxu0
      %v3196 = vadd.f32 0.0, %v3195
      %v3197 = vpop.f32.mrb[0].mxu0
      %v3198 = vpop.f32.mrb[0].mxu0
      %v3199 = vadd.f32 0.0, %v3198
      %v3200 = vpop.f32.mrb[0].mxu0
      %3201 = vmatprep.mubr.bf16.mxu0 %v2910
      %3202 = vmatmul.mubr.bf16.gmra.mrb[0].mxu0 %v2909
      %v3203 = vpop.f32.mrb[0].mxu0
      %v3204 = vadd.f32 0.0, %v3203
      %v3205 = vpop.f32.mrb[0].mxu0
      %v3206 = vpop.f32.mrb[0].mxu0
      %v3207 = vadd.f32 0.0, %v3206
      %v3208 = vpop.f32.mrb[0].mxu0
      %3209 = vmatprep.mubr.bf16.mxu0 %v2912
      %3210 = vmatmul.mubr.bf16.gmra.mrb[0].mxu0 %v2911
      %v3211 = vpop.f32.mrb[0].mxu0
      %v3212 = vadd.f32 0.0, %v3211
      %v3213 = vpop.f32.mrb[0].mxu0
      %v3214 = vpop.f32.mrb[0].mxu0
      %v3215 = vadd.f32 0.0, %v3214
      %v3216 = vpop.f32.mrb[0].mxu0
      %3217 = vmatprep.mubr.bf16.mxu0 %v2914
      %3218 = vmatmul.mubr.bf16.gmra.mrb[0].mxu0 %v2913
      %v3219 = vpop.f32.mrb[0].mxu0
      %v3220 = vadd.f32 0.0, %v3219
      %v3221 = vpop.f32.mrb[0].mxu0
      %v3222 = vpop.f32.mrb[0].mxu0
      %v3223 = vadd.f32 0.0, %v3222
      %v3224 = vpop.f32.mrb[0].mxu0
      %3225 = vmatprep.mubr.bf16.mxu0 %v2916
      %3226 = vmatmul.mubr.bf16.gmra.mrb[0].mxu0 %v2915
      %v3227 = vpop.f32.mrb[0].mxu0
      %v3228 = vadd.f32 0.0, %v3227
      %v3229 = vpop.f32.mrb[0].mxu0
      %v3230 = vpop.f32.mrb[0].mxu0
      %v3231 = vadd.f32 0.0, %v3230
      %v3232 = vpop.f32.mrb[0].mxu0
      %3233 = vmatprep.mubr.bf16.mxu0 %v2918
      %3234 = vmatmul.mubr.bf16.gmra.mrb[0].mxu0 %v2917
      %v3235 = vpop.f32.mrb[0].mxu0
      %v3236 = vadd.f32 0.0, %v3235
      %v3237 = vpop.f32.mrb[0].mxu0
      %v3238 = vpop.f32.mrb[0].mxu0
      %v3239 = vadd.f32 0.0, %v3238
      %v3240 = vpop.f32.mrb[0].mxu0
      %3241 = vmatprep.mubr.bf16.mxu0 %v2920
      %3242 = vmatmul.mubr.bf16.gmra.mrb[0].mxu0 %v2919
      %v3243 = vpop.f32.mrb[0].mxu0
      %v3244 = vadd.f32 0.0, %v3243
      %v3245 = vpop.f32.mrb[0].mxu0
      %v3246 = vpop.f32.mrb[0].mxu0
      %v3247 = vadd.f32 0.0, %v3246
      %v3248 = vpop.f32.mrb[0].mxu0
      %3249 = vmatprep.mubr.bf16.mxu0 %v2922
      %3250 = vmatmul.mubr.bf16.gmra.mrb[0].mxu0 %v2921
      %v3251 = vpop.f32.mrb[0].mxu0
      %v3252 = vadd.f32 0.0, %v3251
      %v3253 = vpop.f32.mrb[0].mxu0
      %v3254 = vpop.f32.mrb[0].mxu0
      %v3255 = vadd.f32 0.0, %v3254
      %v3256 = vpop.f32.mrb[0].mxu0
      %3257 = vmatprep.mubr.bf16.mxu0 %v2924
      %3258 = vmatmul.mubr.bf16.gmra.mrb[0].mxu0 %v2923
      %v3259 = vpop.f32.mrb[0].mxu0
      %v3260 = vadd.f32 0.0, %v3259
      %v3261 = vpop.f32.mrb[0].mxu0
      %v3262 = vpop.f32.mrb[0].mxu0
      %v3263 = vadd.f32 0.0, %v3262
      %v3264 = vpop.f32.mrb[0].mxu0
      %3265 = vmatprep.mubr.bf16.mxu0 %v2926
      %3266 = vmatmul.mubr.bf16.gmra.mrb[0].mxu0 %v2925
      %v3267 = vpop.f32.mrb[0].mxu0
      %v3268 = vadd.f32 0.0, %v3267
      %v3269 = vpop.f32.mrb[0].mxu0
      %v3270 = vpop.f32.mrb[0].mxu0
      %v3271 = vadd.f32 0.0, %v3270
      %v3272 = vpop.f32.mrb[0].mxu0
      %3273 = vmatprep.mubr.bf16.mxu0 %v2928
      %3274 = vmatmul.mubr.bf16.gmra.mrb[0].mxu0 %v2927
      %v3275 = vpop.f32.mrb[0].mxu0
      %v3276 = vadd.f32 0.0, %v3275
      %v3277 = vpop.f32.mrb[0].mxu0
      %v3278 = vpop.f32.mrb[0].mxu0
      %v3279 = vadd.f32 0.0, %v3278
      %v3280 = vpop.f32.mrb[0].mxu0
      %3281 = vdwg.mxu0
      %v3282 = vmax.f32 %v2545, %v3028
      %v3283 = vmax.f32 %v2546, %v3031
      %v3284 = vmax.f32 %v2547, %v3036
      %v3285 = vmax.f32 %v2548, %v3039
      %v3286 = vmax.f32 %v2549, %v3044
      %v3287 = vmax.f32 %v2550, %v3047
      %v3288 = vmax.f32 %v2551, %v3052
      %v3289 = vmax.f32 %v2552, %v3055
      %v3290 = vmax.f32 %v2553, %v3060
      %v3291 = vmax.f32 %v2554, %v3063
      %v3292 = vmax.f32 %v2555, %v3068
      %v3293 = vmax.f32 %v2556, %v3071
      %v3294 = vmax.f32 %v2557, %v3076
      %v3295 = vmax.f32 %v2558, %v3079
      %v3296 = vmax.f32 %v2559, %v3084
      %v3297 = vmax.f32 %v2560, %v3087
      %v3298 = vmax.f32 %v2561, %v3092
      %v3299 = vmax.f32 %v2562, %v3095
      %v3300 = vmax.f32 %v2563, %v3100
      %v3301 = vmax.f32 %v2564, %v3103
      %v3302 = vmax.f32 %v2565, %v3108
      %v3303 = vmax.f32 %v2566, %v3111
      %v3304 = vmax.f32 %v2567, %v3116
      %v3305 = vmax.f32 %v2568, %v3119
      %v3306 = vmax.f32 %v2569, %v3124
      %v3307 = vmax.f32 %v2570, %v3127
      %v3308 = vmax.f32 %v2571, %v3132
      %v3309 = vmax.f32 %v2572, %v3135
      %v3310 = vmax.f32 %v2573, %v3140
      %v3311 = vmax.f32 %v2574, %v3143
      %v3312 = vmax.f32 %v2575, %v3148
      %v3313 = vmax.f32 %v2576, %v3151
      %v3314 = vmax.f32 %v2577, %v3156
      %v3315 = vmax.f32 %v2578, %v3159
      %v3316 = vmax.f32 %v2579, %v3164
      %v3317 = vmax.f32 %v2580, %v3167
      %v3318 = vmax.f32 %v2581, %v3172
      %v3319 = vmax.f32 %v2582, %v3175
      %v3320 = vmax.f32 %v2583, %v3180
      %v3321 = vmax.f32 %v2584, %v3183
      %v3322 = vmax.f32 %v2585, %v3188
      %v3323 = vmax.f32 %v2586, %v3191
      %v3324 = vmax.f32 %v2587, %v3196
      %v3325 = vmax.f32 %v2588, %v3199
      %v3326 = vmax.f32 %v2589, %v3204
      %v3327 = vmax.f32 %v2590, %v3207
      %v3328 = vmax.f32 %v2591, %v3212
      %v3329 = vmax.f32 %v2592, %v3215
      %v3330 = vmax.f32 %v2593, %v3220
      %v3331 = vmax.f32 %v2594, %v3223
      %v3332 = vmax.f32 %v2595, %v3228
      %v3333 = vmax.f32 %v2596, %v3231
      %v3334 = vmax.f32 %v2597, %v3236
      %v3335 = vmax.f32 %v2598, %v3239
      %v3336 = vmax.f32 %v2599, %v3244
      %v3337 = vmax.f32 %v2600, %v3247
      %v3338 = vmax.f32 %v2601, %v3252
      %v3339 = vmax.f32 %v2602, %v3255
      %v3340 = vmax.f32 %v2603, %v3260
      %v3341 = vmax.f32 %v2604, %v3263
      %v3342 = vmax.f32 %v2605, %v3268
      %v3343 = vmax.f32 %v2606, %v3271
      %v3344 = vmax.f32 %v2607, %v3276
      %v3345 = vmax.f32 %v2608, %v3279
      %v3346 = vld [vmem:[%s5] sm:$0x1]
      %v3348 = vlaneseq
      %v3349 = vshrl.u32 %v3348, 7
      %v3350 = vsub.s32 0, %v3349
      %v3351 = vrot.slane %v3346, %v3350
      %v3353 = vadd.f32 %v3282, %v3351
      %v3354 = vadd.f32 %v3283, %v3351
      %v3355 = vadd.f32 %v3284, %v3351
      %v3356 = vadd.f32 %v3285, %v3351
      %v3357 = vadd.f32 %v3286, %v3351
      %v3358 = vadd.f32 %v3287, %v3351
      %v3359 = vadd.f32 %v3288, %v3351
      %v3360 = vadd.f32 %v3289, %v3351
      %v3361 = vadd.f32 %v3290, %v3351
      %v3362 = vadd.f32 %v3291, %v3351
      %v3363 = vadd.f32 %v3292, %v3351
      %v3364 = vadd.f32 %v3293, %v3351
      %v3365 = vadd.f32 %v3294, %v3351
      %v3366 = vadd.f32 %v3295, %v3351
      %v3367 = vadd.f32 %v3296, %v3351
      %v3368 = vadd.f32 %v3297, %v3351
      %v3369 = vadd.f32 %v3298, %v3351
      %v3370 = vadd.f32 %v3299, %v3351
      %v3371 = vadd.f32 %v3300, %v3351
      %v3372 = vadd.f32 %v3301, %v3351
      %v3373 = vadd.f32 %v3302, %v3351
      %v3374 = vadd.f32 %v3303, %v3351
      %v3375 = vadd.f32 %v3304, %v3351
      %v3376 = vadd.f32 %v3305, %v3351
      %v3377 = vadd.f32 %v3306, %v3351
      %v3378 = vadd.f32 %v3307, %v3351
      %v3379 = vadd.f32 %v3308, %v3351
      %v3380 = vadd.f32 %v3309, %v3351
      %v3381 = vadd.f32 %v3310, %v3351
      %v3382 = vadd.f32 %v3311, %v3351
      %v3383 = vadd.f32 %v3312, %v3351
      %v3384 = vadd.f32 %v3313, %v3351
      %v3385 = vadd.f32 %v3314, %v3351
      %v3386 = vadd.f32 %v3315, %v3351
      %v3387 = vadd.f32 %v3316, %v3351
      %v3388 = vadd.f32 %v3317, %v3351
      %v3389 = vadd.f32 %v3318, %v3351
      %v3390 = vadd.f32 %v3319, %v3351
      %v3391 = vadd.f32 %v3320, %v3351
      %v3392 = vadd.f32 %v3321, %v3351
      %v3393 = vadd.f32 %v3322, %v3351
      %v3394 = vadd.f32 %v3323, %v3351
      %v3395 = vadd.f32 %v3324, %v3351
      %v3396 = vadd.f32 %v3325, %v3351
      %v3397 = vadd.f32 %v3326, %v3351
      %v3398 = vadd.f32 %v3327, %v3351
      %v3399 = vadd.f32 %v3328, %v3351
      %v3400 = vadd.f32 %v3329, %v3351
      %v3401 = vadd.f32 %v3330, %v3351
      %v3402 = vadd.f32 %v3331, %v3351
      %v3403 = vadd.f32 %v3332, %v3351
      %v3404 = vadd.f32 %v3333, %v3351
      %v3405 = vadd.f32 %v3334, %v3351
      %v3406 = vadd.f32 %v3335, %v3351
      %v3407 = vadd.f32 %v3336, %v3351
      %v3408 = vadd.f32 %v3337, %v3351
      %v3409 = vadd.f32 %v3338, %v3351
      %v3410 = vadd.f32 %v3339, %v3351
      %v3411 = vadd.f32 %v3340, %v3351
      %v3412 = vadd.f32 %v3341, %v3351
      %v3413 = vadd.f32 %v3342, %v3351
      %v3414 = vadd.f32 %v3343, %v3351
      %v3415 = vadd.f32 %v3344, %v3351
      %v3416 = vadd.f32 %v3345, %v3351
      %v3417 = vmax.f32 %v3353, 0.0
      %v3418 = vmax.f32 %v3354, 0.0
      %v3419 = vmax.f32 %v3355, 0.0
      %v3420 = vmax.f32 %v3356, 0.0
      %v3421 = vmax.f32 %v3357, 0.0
      %v3422 = vmax.f32 %v3358, 0.0
      %v3423 = vmax.f32 %v3359, 0.0
      %v3424 = vmax.f32 %v3360, 0.0
      %v3425 = vmax.f32 %v3361, 0.0
      %v3426 = vmax.f32 %v3362, 0.0
      %v3427 = vmax.f32 %v3363, 0.0
      %v3428 = vmax.f32 %v3364, 0.0
      %v3429 = vmax.f32 %v3365, 0.0
      %v3430 = vmax.f32 %v3366, 0.0
      %v3431 = vmax.f32 %v3367, 0.0
      %v3432 = vmax.f32 %v3368, 0.0
      %v3433 = vmax.f32 %v3369, 0.0
      %v3434 = vmax.f32 %v3370, 0.0
      %v3435 = vmax.f32 %v3371, 0.0
      %v3436 = vmax.f32 %v3372, 0.0
      %v3437 = vmax.f32 %v3373, 0.0
      %v3438 = vmax.f32 %v3374, 0.0
      %v3439 = vmax.f32 %v3375, 0.0
      %v3440 = vmax.f32 %v3376, 0.0
      %v3441 = vmax.f32 %v3377, 0.0
      %v3442 = vmax.f32 %v3378, 0.0
      %v3443 = vmax.f32 %v3379, 0.0
      %v3444 = vmax.f32 %v3380, 0.0
      %v3445 = vmax.f32 %v3381, 0.0
      %v3446 = vmax.f32 %v3382, 0.0
      %v3447 = vmax.f32 %v3383, 0.0
      %v3448 = vmax.f32 %v3384, 0.0
      %v3449 = vmax.f32 %v3385, 0.0
      %v3450 = vmax.f32 %v3386, 0.0
      %v3451 = vmax.f32 %v3387, 0.0
      %v3452 = vmax.f32 %v3388, 0.0
      %v3453 = vmax.f32 %v3389, 0.0
      %v3454 = vmax.f32 %v3390, 0.0
      %v3455 = vmax.f32 %v3391, 0.0
      %v3456 = vmax.f32 %v3392, 0.0
      %v3457 = vmax.f32 %v3393, 0.0
      %v3458 = vmax.f32 %v3394, 0.0
      %v3459 = vmax.f32 %v3395, 0.0
      %v3460 = vmax.f32 %v3396, 0.0
      %v3461 = vmax.f32 %v3397, 0.0
      %v3462 = vmax.f32 %v3398, 0.0
      %v3463 = vmax.f32 %v3399, 0.0
      %v3464 = vmax.f32 %v3400, 0.0
      %v3465 = vmax.f32 %v3401, 0.0
      %v3466 = vmax.f32 %v3402, 0.0
      %v3467 = vmax.f32 %v3403, 0.0
      %v3468 = vmax.f32 %v3404, 0.0
      %v3469 = vmax.f32 %v3405, 0.0
      %v3470 = vmax.f32 %v3406, 0.0
      %v3471 = vmax.f32 %v3407, 0.0
      %v3472 = vmax.f32 %v3408, 0.0
      %v3473 = vmax.f32 %v3409, 0.0
      %v3474 = vmax.f32 %v3410, 0.0
      %v3475 = vmax.f32 %v3411, 0.0
      %v3476 = vmax.f32 %v3412, 0.0
      %v3477 = vmax.f32 %v3413, 0.0
      %v3478 = vmax.f32 %v3414, 0.0
      %v3479 = vmax.f32 %v3415, 0.0
      %v3480 = vmax.f32 %v3416, 0.0
      %v3481 = vpack.c.bf16 %v3418, %v3417
      %v3482 = vpack.c.bf16 %v3420, %v3419
      %v3483 = vpack.c.bf16 %v3422, %v3421
      %v3484 = vpack.c.bf16 %v3424, %v3423
      %v3485 = vpack.c.bf16 %v3426, %v3425
      %v3486 = vpack.c.bf16 %v3428, %v3427
      %v3487 = vpack.c.bf16 %v3430, %v3429
      %v3488 = vpack.c.bf16 %v3432, %v3431
      %v3489 = vpack.c.bf16 %v3434, %v3433
      %v3490 = vpack.c.bf16 %v3436, %v3435
      %v3491 = vpack.c.bf16 %v3438, %v3437
      %v3492 = vpack.c.bf16 %v3440, %v3439
      %v3493 = vpack.c.bf16 %v3442, %v3441
      %v3494 = vpack.c.bf16 %v3444, %v3443
      %v3495 = vpack.c.bf16 %v3446, %v3445
      %v3496 = vpack.c.bf16 %v3448, %v3447
      %v3497 = vpack.c.bf16 %v3450, %v3449
      %v3498 = vpack.c.bf16 %v3452, %v3451
      %v3499 = vpack.c.bf16 %v3454, %v3453
      %v3500 = vpack.c.bf16 %v3456, %v3455
      %v3501 = vpack.c.bf16 %v3458, %v3457
      %v3502 = vpack.c.bf16 %v3460, %v3459
      %v3503 = vpack.c.bf16 %v3462, %v3461
      %v3504 = vpack.c.bf16 %v3464, %v3463
      %v3505 = vpack.c.bf16 %v3466, %v3465
      %v3506 = vpack.c.bf16 %v3468, %v3467
      %v3507 = vpack.c.bf16 %v3470, %v3469
      %v3508 = vpack.c.bf16 %v3472, %v3471
      %v3509 = vpack.c.bf16 %v3474, %v3473
      %v3510 = vpack.c.bf16 %v3476, %v3475
      %v3511 = vpack.c.bf16 %v3478, %v3477
      %v3512 = vpack.c.bf16 %v3480, %v3479
      %v3545 = vunpack.c.l.b16 %v3481
      %v3546 = vunpack.c.h.b16 %v3481
      %v3547 = vunpack.c.l.b16 %v3482
      %v3548 = vunpack.c.h.b16 %v3482
      %v3549 = vunpack.c.l.b16 %v3483
      %v3550 = vunpack.c.h.b16 %v3483
      %v3551 = vunpack.c.l.b16 %v3484
      %v3552 = vunpack.c.h.b16 %v3484
      %v3553 = vunpack.c.l.b16 %v3485
      %v3554 = vunpack.c.h.b16 %v3485
      %v3555 = vunpack.c.l.b16 %v3486
      %v3556 = vunpack.c.h.b16 %v3486
      %v3557 = vunpack.c.l.b16 %v3487
      %v3558 = vunpack.c.h.b16 %v3487
      %v3559 = vunpack.c.l.b16 %v3488
      %v3560 = vunpack.c.h.b16 %v3488
      %v3561 = vunpack.c.l.b16 %v3489
      %v3562 = vunpack.c.h.b16 %v3489
      %v3563 = vunpack.c.l.b16 %v3490
      %v3564 = vunpack.c.h.b16 %v3490
      %v3565 = vunpack.c.l.b16 %v3491
      %v3566 = vunpack.c.h.b16 %v3491
      %v3567 = vunpack.c.l.b16 %v3492
      %v3568 = vunpack.c.h.b16 %v3492
      %v3569 = vunpack.c.l.b16 %v3493
      %v3570 = vunpack.c.h.b16 %v3493
      %v3571 = vunpack.c.l.b16 %v3494
      %v3572 = vunpack.c.h.b16 %v3494
      %v3573 = vunpack.c.l.b16 %v3495
      %v3574 = vunpack.c.h.b16 %v3495
      %v3575 = vunpack.c.l.b16 %v3496
      %v3576 = vunpack.c.h.b16 %v3496
      %v3577 = vunpack.c.l.b16 %v3497
      %v3578 = vunpack.c.h.b16 %v3497
      %v3579 = vunpack.c.l.b16 %v3498
      %v3580 = vunpack.c.h.b16 %v3498
      %v3581 = vunpack.c.l.b16 %v3499
      %v3582 = vunpack.c.h.b16 %v3499
      %v3583 = vunpack.c.l.b16 %v3500
      %v3584 = vunpack.c.h.b16 %v3500
      %v3585 = vunpack.c.l.b16 %v3501
      %v3586 = vunpack.c.h.b16 %v3501
      %v3587 = vunpack.c.l.b16 %v3502
      %v3588 = vunpack.c.h.b16 %v3502
      %v3589 = vunpack.c.l.b16 %v3503
      %v3590 = vunpack.c.h.b16 %v3503
      %v3591 = vunpack.c.l.b16 %v3504
      %v3592 = vunpack.c.h.b16 %v3504
      %v3593 = vunpack.c.l.b16 %v3505
      %v3594 = vunpack.c.h.b16 %v3505
      %v3595 = vunpack.c.l.b16 %v3506
      %v3596 = vunpack.c.h.b16 %v3506
      %v3597 = vunpack.c.l.b16 %v3507
      %v3598 = vunpack.c.h.b16 %v3507
      %v3599 = vunpack.c.l.b16 %v3508
      %v3600 = vunpack.c.h.b16 %v3508
      %v3601 = vunpack.c.l.b16 %v3509
      %v3602 = vunpack.c.h.b16 %v3509
      %v3603 = vunpack.c.l.b16 %v3510
      %v3604 = vunpack.c.h.b16 %v3510
      %v3605 = vunpack.c.l.b16 %v3511
      %v3606 = vunpack.c.h.b16 %v3511
      %v3607 = vunpack.c.l.b16 %v3512
      %v3608 = vunpack.c.h.b16 %v3512
      %v3609 = vpack.c.b16 %v3545, %v3545
      %v3610 = vpack.c.b16 %v3546, %v3546
      %v3611 = vpack.c.b16 %v3547, %v3547
      %v3612 = vpack.c.b16 %v3548, %v3548
      %v3613 = vpack.c.b16 %v3549, %v3549
      %v3614 = vpack.c.b16 %v3550, %v3550
      %v3615 = vpack.c.b16 %v3551, %v3551
      %v3616 = vpack.c.b16 %v3552, %v3552
      %v3617 = vpack.c.b16 %v3553, %v3553
      %v3618 = vpack.c.b16 %v3554, %v3554
      %v3619 = vpack.c.b16 %v3555, %v3555
      %v3620 = vpack.c.b16 %v3556, %v3556
      %v3621 = vpack.c.b16 %v3557, %v3557
      %v3622 = vpack.c.b16 %v3558, %v3558
      %v3623 = vpack.c.b16 %v3559, %v3559
      %v3624 = vpack.c.b16 %v3560, %v3560
      %v3625 = vpack.c.b16 %v3561, %v3561
      %v3626 = vpack.c.b16 %v3562, %v3562
      %v3627 = vpack.c.b16 %v3563, %v3563
      %v3628 = vpack.c.b16 %v3564, %v3564
      %v3629 = vpack.c.b16 %v3565, %v3565
      %v3630 = vpack.c.b16 %v3566, %v3566
      %v3631 = vpack.c.b16 %v3567, %v3567
      %v3632 = vpack.c.b16 %v3568, %v3568
      %v3633 = vpack.c.b16 %v3569, %v3569
      %v3634 = vpack.c.b16 %v3570, %v3570
      %v3635 = vpack.c.b16 %v3571, %v3571
      %v3636 = vpack.c.b16 %v3572, %v3572
      %v3637 = vpack.c.b16 %v3573, %v3573
      %v3638 = vpack.c.b16 %v3574, %v3574
      %v3639 = vpack.c.b16 %v3575, %v3575
      %v3640 = vpack.c.b16 %v3576, %v3576
      %v3641 = vpack.c.b16 %v3577, %v3577
      %v3642 = vpack.c.b16 %v3578, %v3578
      %v3643 = vpack.c.b16 %v3579, %v3579
      %v3644 = vpack.c.b16 %v3580, %v3580
      %v3645 = vpack.c.b16 %v3581, %v3581
      %v3646 = vpack.c.b16 %v3582, %v3582
      %v3647 = vpack.c.b16 %v3583, %v3583
      %v3648 = vpack.c.b16 %v3584, %v3584
      %v3649 = vpack.c.b16 %v3585, %v3585
      %v3650 = vpack.c.b16 %v3586, %v3586
      %v3651 = vpack.c.b16 %v3587, %v3587
      %v3652 = vpack.c.b16 %v3588, %v3588
      %v3653 = vpack.c.b16 %v3589, %v3589
      %v3654 = vpack.c.b16 %v3590, %v3590
      %v3655 = vpack.c.b16 %v3591, %v3591
      %v3656 = vpack.c.b16 %v3592, %v3592
      %v3657 = vpack.c.b16 %v3593, %v3593
      %v3658 = vpack.c.b16 %v3594, %v3594
      %v3659 = vpack.c.b16 %v3595, %v3595
      %v3660 = vpack.c.b16 %v3596, %v3596
      %v3661 = vpack.c.b16 %v3597, %v3597
      %v3662 = vpack.c.b16 %v3598, %v3598
      %v3663 = vpack.c.b16 %v3599, %v3599
      %v3664 = vpack.c.b16 %v3600, %v3600
      %v3665 = vpack.c.b16 %v3601, %v3601
      %v3666 = vpack.c.b16 %v3602, %v3602
      %v3667 = vpack.c.b16 %v3603, %v3603
      %v3668 = vpack.c.b16 %v3604, %v3604
      %v3669 = vpack.c.b16 %v3605, %v3605
      %v3670 = vpack.c.b16 %v3606, %v3606
      %v3671 = vpack.c.b16 %v3607, %v3607
      %v3672 = vpack.c.b16 %v3608, %v3608
      %3737 = vst [vmem:[%s331] sm:$0xf] %v3609
      %3738 = vst [vmem:[%s331 + $0x4] sm:$0xf] %v3610
      %3739 = vst [vmem:[%s331 + $0x8] sm:$0xf] %v3611
      %3740 = vst [vmem:[%s331 + $0xc] sm:$0xf] %v3612
      %3741 = vst [vmem:[%s331 + $0x10] sm:$0xf] %v3613
      %3742 = vst [vmem:[%s331 + $0x14] sm:$0xf] %v3614
      %3743 = vst [vmem:[%s331 + $0x18] sm:$0xf] %v3615
      %3744 = vst [vmem:[%s331 + $0x1c] sm:$0xf] %v3616
      %3745 = vst [vmem:[%s331 + $0x20] sm:$0xf] %v3617
      %3746 = vst [vmem:[%s331 + $0x24] sm:$0xf] %v3618
      %3747 = vst [vmem:[%s331 + $0x28] sm:$0xf] %v3619
      %3748 = vst [vmem:[%s331 + $0x2c] sm:$0xf] %v3620
      %3749 = vst [vmem:[%s331 + $0x30] sm:$0xf] %v3621
      %3750 = vst [vmem:[%s331 + $0x34] sm:$0xf] %v3622
      %3751 = vst [vmem:[%s331 + $0x38] sm:$0xf] %v3623
      %3752 = vst [vmem:[%s331 + $0x3c] sm:$0xf] %v3624
      %3753 = vst [vmem:[%s331 + $0x40] sm:$0xf] %v3625
      %3754 = vst [vmem:[%s331 + $0x44] sm:$0xf] %v3626
      %3755 = vst [vmem:[%s331 + $0x48] sm:$0xf] %v3627
      %3756 = vst [vmem:[%s331 + $0x4c] sm:$0xf] %v3628
      %3757 = vst [vmem:[%s331 + $0x50] sm:$0xf] %v3629
      %3758 = vst [vmem:[%s331 + $0x54] sm:$0xf] %v3630
      %3759 = vst [vmem:[%s331 + $0x58] sm:$0xf] %v3631
      %3760 = vst [vmem:[%s331 + $0x5c] sm:$0xf] %v3632
      %3761 = vst [vmem:[%s331 + $0x60] sm:$0xf] %v3633
      %3762 = vst [vmem:[%s331 + $0x64] sm:$0xf] %v3634
      %3763 = vst [vmem:[%s331 + $0x68] sm:$0xf] %v3635
      %3764 = vst [vmem:[%s331 + $0x6c] sm:$0xf] %v3636
      %3765 = vst [vmem:[%s331 + $0x70] sm:$0xf] %v3637
      %3766 = vst [vmem:[%s331 + $0x74] sm:$0xf] %v3638
      %3767 = vst [vmem:[%s331 + $0x78] sm:$0xf] %v3639
      %3768 = vst [vmem:[%s331 + $0x7c] sm:$0xf] %v3640
      %3769 = vst [vmem:[%s331 + $0x80] sm:$0xf] %v3641
      %3770 = vst [vmem:[%s331 + $0x84] sm:$0xf] %v3642
      %3771 = vst [vmem:[%s331 + $0x88] sm:$0xf] %v3643
      %3772 = vst [vmem:[%s331 + $0x8c] sm:$0xf] %v3644
      %3773 = vst [vmem:[%s331 + $0x90] sm:$0xf] %v3645
      %3774 = vst [vmem:[%s331 + $0x94] sm:$0xf] %v3646
      %3775 = vst [vmem:[%s331 + $0x98] sm:$0xf] %v3647
      %3776 = vst [vmem:[%s331 + $0x9c] sm:$0xf] %v3648
      %3777 = vst [vmem:[%s331 + $0xa0] sm:$0xf] %v3649
      %3778 = vst [vmem:[%s331 + $0xa4] sm:$0xf] %v3650
      %3779 = vst [vmem:[%s331 + $0xa8] sm:$0xf] %v3651
      %3780 = vst [vmem:[%s331 + $0xac] sm:$0xf] %v3652
      %3781 = vst [vmem:[%s331 + $0xb0] sm:$0xf] %v3653
      %3782 = vst [vmem:[%s331 + $0xb4] sm:$0xf] %v3654
      %3783 = vst [vmem:[%s331 + $0xb8] sm:$0xf] %v3655
      %3784 = vst [vmem:[%s331 + $0xbc] sm:$0xf] %v3656
      %3785 = vst [vmem:[%s331 + $0xc0] sm:$0xf] %v3657
      %3786 = vst [vmem:[%s331 + $0xc4] sm:$0xf] %v3658
      %3787 = vst [vmem:[%s331 + $0xc8] sm:$0xf] %v3659
      %3788 = vst [vmem:[%s331 + $0xcc] sm:$0xf] %v3660
      %3789 = vst [vmem:[%s331 + $0xd0] sm:$0xf] %v3661
      %3790 = vst [vmem:[%s331 + $0xd4] sm:$0xf] %v3662
      %3791 = vst [vmem:[%s331 + $0xd8] sm:$0xf] %v3663
      %3792 = vst [vmem:[%s331 + $0xdc] sm:$0xf] %v3664
      %3793 = vst [vmem:[%s331 + $0xe0] sm:$0xf] %v3665
      %3794 = vst [vmem:[%s331 + $0xe4] sm:$0xf] %v3666
      %3795 = vst [vmem:[%s331 + $0xe8] sm:$0xf] %v3667
      %3796 = vst [vmem:[%s331 + $0xec] sm:$0xf] %v3668
      %3797 = vst [vmem:[%s331 + $0xf0] sm:$0xf] %v3669
      %3798 = vst [vmem:[%s331 + $0xf4] sm:$0xf] %v3670
      %3799 = vst [vmem:[%s331 + $0xf8] sm:$0xf] %v3671
      %3800 = vst [vmem:[%s331 + $0xfc] sm:$0xf] %v3672
      %s3801 = smul.u32 64, %s17
      %p3802 = scmp.lt.s32.totalorder %s3801, 127
      %s3803 = scalar_select %p3802, %s3801, 127
      %s3804 = smul.addr %s3803, 4
      %s3805 = scalar_lea.vmem %s6, %s3804
      // Predicated region
      $region45: #{_lambda_.5} parent=43 // pred_check
        %p3806 = pneg %p181
      $region46: #{_lambda_.5} parent=43 // pred_check_branch
        %3808 = sbr.rel (%p3806) target = $region48
      $region47: #{_lambda_.5} parent=43 // pred_region
        %s3809 = smul.u32 64, %s17
      $region48: #{_lambda_.5} parent=43 // pred_fallthru
        _
    $region44: #{_lambda_.5} parent=5 // pred_fallthru
      _
    %p3810 = scmp.le.s32.totalorder 2, %s12
    // Predicated region
    $region49: #{_lambda_.5} parent=5 // pred_check
      %p3811 = pneg %p3810
    $region50: #{_lambda_.5} parent=5 // pred_check_branch
      %3813 = sbr.rel (%p3811) target = $region52
    $region51: #{_lambda_.5} parent=5 // pred_region
      %s3814 = ssub.s32 %s12, 2
      // Predicated region
      $region53: #{_lambda_.5} parent=51 // pred_check
        %p3815 = pneg %p187
      $region54: #{_lambda_.5} parent=51 // pred_check_branch
        %3817 = sbr.rel (%p3815) target = $region56
      $region55: #{_lambda_.5} parent=51 // pred_region
        %s3818 = smul.u32 64, %s18
        %p3819 = scmp.lt.s32.totalorder %s3818, 127
        %s3820 = scalar_select %p3819, %s3818, 127
        %s3821 = smul.addr %s3820, 4
        %s3822 = scalar_lea.vmem %s6, %s3821
      $region56: #{_lambda_.5} parent=51 // pred_fallthru
        _
    $region52: #{_lambda_.5} parent=5 // pred_fallthru
      _
  $region6: #{_lambda_.5} parent=0 // loop_footer
    %s16 = sadd.s32 1, %s12
  $region7: #{_lambda_.5} parent=0 // loop_footer_branch
    %11 = sbr.rel target = $region3
  $region8: #{_lambda_.5} parent=0 // loop_exit
    _

// kernel: _lambda_.6
$region0: #{_lambda_.6}
  #allocation0 [shape = 'u32[]', space=smem, size = 0x4, offset = 0x4, fixed_abs, tag = 'smem constant byte address 0x4 - core index']
  #allocation1 [shape = 'u32[144,128]{1,0:T(1,128)}', space=vmem, size = 0x12000, scoped, tag = 'internal scratch']
  %s0 = inlined_call_operand.vmem [shape: bf16[40,256], index: 0, kind: input, shape index: {}]
  %s1 = inlined_call_operand.vmem [shape: bf16[40,256], index: 1, kind: input, shape index: {}]
  %s2 = inlined_call_operand.vmem [shape: bf16[40,256], index: 2, kind: input, shape index: {}]
  %s3 = inlined_call_operand.vmem [shape: bf16[40,256], index: 3, kind: input, shape index: {}]
  %s4 = inlined_call_operand.vmem [shape: bf16[256,128], index: 4, kind: input, shape index: {}]
  %s5 = inlined_call_operand.vmem [shape: f32[1,128], index: 5, kind: input, shape index: {}]
  %s6 = inlined_call_operand.vmem [shape: bf16[40,128], index: 6, kind: output, shape index: {}]
  %s7 = sld [smem:[#allocation0]]
  $region34: #{_lambda_.6} parent=0
    _
  %s9 = ssub.s32 1, %s7
  %s10 = scalar_select 0, %s9, %s7
  // Predicated region
  $region2: #{_lambda_.6} parent=0 // pred_check
    _
  $region3: #{_lambda_.6} parent=0 // pred_check_branch
    %12 = sbr.rel (0) target = $region5
  $region4: #{_lambda_.6} parent=0 // pred_region
    _
  $region5: #{_lambda_.6} parent=0 // pred_fallthru
    _
  // Predicated region
  $region6: #{_lambda_.6} parent=0 // pred_check
    _
  $region7: #{_lambda_.6} parent=0 // pred_check_branch
    %14 = sbr.rel (0) target = $region9
  $region8: #{_lambda_.6} parent=0 // pred_region
    _
  $region9: #{_lambda_.6} parent=0 // pred_fallthru
    _
  // Predicated region
  $region10: #{_lambda_.6} parent=0 // pred_check
    _
  $region11: #{_lambda_.6} parent=0 // pred_check_branch
    %16 = sbr.rel (0) target = $region13
  $region12: #{_lambda_.6} parent=0 // pred_region
    _
  $region13: #{_lambda_.6} parent=0 // pred_fallthru
    _
  // Predicated region
  $region14: #{_lambda_.6} parent=0 // pred_check
    _
  $region15: #{_lambda_.6} parent=0 // pred_check_branch
    %18 = sbr.rel (0) target = $region17
  $region16: #{_lambda_.6} parent=0 // pred_region
    _
  $region17: #{_lambda_.6} parent=0 // pred_fallthru
    _
  // Predicated region
  $region18: #{_lambda_.6} parent=0 // pred_check
    _
  $region19: #{_lambda_.6} parent=0 // pred_check_branch
    %20 = sbr.rel (0) target = $region21
  $region20: #{_lambda_.6} parent=0 // pred_region
    _
  $region21: #{_lambda_.6} parent=0 // pred_fallthru
    _
  // Predicated region
  $region22: #{_lambda_.6} parent=0 // pred_check
    _
  $region23: #{_lambda_.6} parent=0 // pred_check_branch
    %22 = sbr.rel (0) target = $region25
  $region24: #{_lambda_.6} parent=0 // pred_region
    _
  $region25: #{_lambda_.6} parent=0 // pred_fallthru
    _
  %v24 = vld [vmem:[%s4] sm:$0xf]
  %v25 = vld [vmem:[%s4 + $0x4] sm:$0xf]
  %v26 = vld [vmem:[%s4 + $0x8] sm:$0xf]
  %v27 = vld [vmem:[%s4 + $0xc] sm:$0xf]
  %v28 = vld [vmem:[%s4 + $0x10] sm:$0xf]
  %v29 = vld [vmem:[%s4 + $0x14] sm:$0xf]
  %v30 = vld [vmem:[%s4 + $0x18] sm:$0xf]
  %v31 = vld [vmem:[%s4 + $0x1c] sm:$0xf]
  %v32 = vld [vmem:[%s4 + $0x20] sm:$0xf]
  %v33 = vld [vmem:[%s4 + $0x24] sm:$0xf]
  %v34 = vld [vmem:[%s4 + $0x28] sm:$0xf]
  %v35 = vld [vmem:[%s4 + $0x2c] sm:$0xf]
  %v36 = vld [vmem:[%s4 + $0x30] sm:$0xf]
  %v37 = vld [vmem:[%s4 + $0x34] sm:$0xf]
  %v38 = vld [vmem:[%s4 + $0x38] sm:$0xf]
  %v39 = vld [vmem:[%s4 + $0x3c] sm:$0xf]
  %v40 = vld [vmem:[%s4 + $0x40] sm:$0xf]
  %v41 = vld [vmem:[%s4 + $0x44] sm:$0xf]
  %v42 = vld [vmem:[%s4 + $0x48] sm:$0xf]
  %v43 = vld [vmem:[%s4 + $0x4c] sm:$0xf]
  %v44 = vld [vmem:[%s4 + $0x50] sm:$0xf]
  %v45 = vld [vmem:[%s4 + $0x54] sm:$0xf]
  %v46 = vld [vmem:[%s4 + $0x58] sm:$0xf]
  %v47 = vld [vmem:[%s4 + $0x5c] sm:$0xf]
  %v48 = vld [vmem:[%s4 + $0x60] sm:$0xf]
  %v49 = vld [vmem:[%s4 + $0x64] sm:$0xf]
  %v50 = vld [vmem:[%s4 + $0x68] sm:$0xf]
  %v51 = vld [vmem:[%s4 + $0x6c] sm:$0xf]
  %v52 = vld [vmem:[%s4 + $0x70] sm:$0xf]
  %v53 = vld [vmem:[%s4 + $0x74] sm:$0xf]
  %v54 = vld [vmem:[%s4 + $0x78] sm:$0xf]
  %v55 = vld [vmem:[%s4 + $0x7c] sm:$0xf]
  %v56 = vld [vmem:[%s0] sm:$0xff]
  %v57 = vld [vmem:[%s0 + $0x8] sm:$0xff]
  %v58 = vld [vmem:[%s0 + $0x10] sm:$0xff]
  %v59 = vld [vmem:[%s0 + $0x18] sm:$0xff]
  %v60 = vld [vmem:[%s0 + $0x20] sm:$0xff]
  %v66 = vunpack.c.l.b16 %v56
  %v67 = vunpack.c.h.b16 %v56
  %v68 = vunpack.c.l.b16 %v57
  %v69 = vunpack.c.h.b16 %v57
  %v70 = vunpack.c.l.b16 %v58
  %v71 = vunpack.c.h.b16 %v58
  %v72 = vunpack.c.l.b16 %v59
  %v73 = vunpack.c.h.b16 %v59
  %v74 = vunpack.c.l.b16 %v60
  %v75 = vunpack.c.h.b16 %v60
  %v76 = vpack.c.b16 %v68, %v66
  %v77 = vpack.c.b16 %v69, %v67
  %v78 = vpack.c.b16 %v72, %v70
  %v79 = vpack.c.b16 %v73, %v71
  %v80 = vpack.c.b16 %v74, %v74
  %v81 = vpack.c.b16 %v75, %v75
  %v120 = vunpack.c.l.b16 %v24
  %v121 = vunpack.c.l.b16 %v25
  %v122 = vunpack.c.l.b16 %v26
  %v123 = vunpack.c.l.b16 %v27
  %v124 = vunpack.c.l.b16 %v28
  %v125 = vunpack.c.l.b16 %v29
  %v126 = vunpack.c.l.b16 %v30
  %v127 = vunpack.c.l.b16 %v31
  %v128 = vunpack.c.l.b16 %v32
  %v129 = vunpack.c.l.b16 %v33
  %v130 = vunpack.c.l.b16 %v34
  %v131 = vunpack.c.l.b16 %v35
  %v132 = vunpack.c.l.b16 %v36
  %v133 = vunpack.c.l.b16 %v37
  %v134 = vunpack.c.l.b16 %v38
  %v135 = vunpack.c.l.b16 %v39
  %v136 = vunpack.c.l.b16 %v40
  %v137 = vunpack.c.l.b16 %v41
  %v138 = vunpack.c.l.b16 %v42
  %v139 = vunpack.c.l.b16 %v43
  %v140 = vunpack.c.l.b16 %v44
  %v141 = vunpack.c.l.b16 %v45
  %v142 = vunpack.c.l.b16 %v46
  %v143 = vunpack.c.l.b16 %v47
  %v144 = vunpack.c.l.b16 %v48
  %v145 = vunpack.c.l.b16 %v49
  %v146 = vunpack.c.l.b16 %v50
  %v147 = vunpack.c.l.b16 %v51
  %v148 = vunpack.c.l.b16 %v52
  %v149 = vunpack.c.l.b16 %v53
  %v150 = vunpack.c.l.b16 %v54
  %v151 = vunpack.c.l.b16 %v55
  %v152 = vpack.c.b16 %v121, %v120
  %v153 = vpack.c.b16 %v123, %v122
  %v154 = vpack.c.b16 %v125, %v124
  %v155 = vpack.c.b16 %v127, %v126
  %v156 = vpack.c.b16 %v129, %v128
  %v157 = vpack.c.b16 %v131, %v130
  %v158 = vpack.c.b16 %v133, %v132
  %v159 = vpack.c.b16 %v135, %v134
  %v160 = vpack.c.b16 %v137, %v136
  %v161 = vpack.c.b16 %v139, %v138
  %v162 = vpack.c.b16 %v141, %v140
  %v163 = vpack.c.b16 %v143, %v142
  %v164 = vpack.c.b16 %v145, %v144
  %v165 = vpack.c.b16 %v147, %v146
  %v166 = vpack.c.b16 %v149, %v148
  %v167 = vpack.c.b16 %v151, %v150
  %184 = vmatprep.subr.bf16.mxu0 0
  %185 = vmatpush1.bf16.msra.mxu0 %v152
  %186 = vmatprep.subr.bf16.mxu0 0
  %187 = vmatpush1.bf16.msra.mxu0 %v153
  %188 = vmatprep.subr.bf16.mxu0 0
  %189 = vmatpush1.bf16.msra.mxu0 %v154
  %190 = vmatprep.subr.bf16.mxu0 0
  %191 = vmatpush1.bf16.msra.mxu0 %v155
  %192 = vmatprep.subr.bf16.mxu0 0
  %193 = vmatpush1.bf16.msra.mxu0 %v156
  %194 = vmatprep.subr.bf16.mxu0 0
  %195 = vmatpush1.bf16.msra.mxu0 %v157
  %196 = vmatprep.subr.bf16.mxu0 0
  %197 = vmatpush1.bf16.msra.mxu0 %v158
  %198 = vmatprep.subr.bf16.mxu0 0
  %199 = vmatpush1.bf16.msra.mxu0 %v159
  %200 = vmatprep.subr.bf16.mxu0 0
  %201 = vmatpush1.bf16.msra.mxu0 %v160
  %202 = vmatprep.subr.bf16.mxu0 0
  %203 = vmatpush1.bf16.msra.mxu0 %v161
  %204 = vmatprep.subr.bf16.mxu0 0
  %205 = vmatpush1.bf16.msra.mxu0 %v162
  %206 = vmatprep.subr.bf16.mxu0 0
  %207 = vmatpush1.bf16.msra.mxu0 %v163
  %208 = vmatprep.subr.bf16.mxu0 0
  %209 = vmatpush1.bf16.msra.mxu0 %v164
  %210 = vmatprep.subr.bf16.mxu0 0
  %211 = vmatpush1.bf16.msra.mxu0 %v165
  %212 = vmatprep.subr.bf16.mxu0 0
  %213 = vmatpush1.bf16.msra.mxu0 %v166
  %214 = vmatprep.subr.bf16.mxu0 0
  %215 = vmatpush1.bf16.msra.mxu0 %v167
  %216 = vmatprep.mubr.bf16.mxu0 %v77
  %217 = vmatmul.mubr.bf16.gmra.mrb[0].mxu0 %v76
  %v218 = vpop.f32.mrb[0].mxu0
  %v219 = vadd.f32 0.0, %v218
  %v220 = vpop.f32.mrb[0].mxu0
  %v221 = vpop.f32.mrb[0].mxu0
  %v222 = vadd.f32 0.0, %v221
  %v223 = vpop.f32.mrb[0].mxu0
  %224 = vmatprep.mubr.bf16.mxu0 %v79
  %225 = vmatmul.mubr.bf16.gmra.mrb[0].mxu0 %v78
  %v226 = vpop.f32.mrb[0].mxu0
  %v227 = vadd.f32 0.0, %v226
  %v228 = vpop.f32.mrb[0].mxu0
  %v229 = vpop.f32.mrb[0].mxu0
  %v230 = vadd.f32 0.0, %v229
  %v231 = vpop.f32.mrb[0].mxu0
  %232 = vmatprep.mubr.bf16.mxu0 %v81
  %233 = vmatmul.mubr.bf16.gmra.mrb[0].mxu0 %v80
  %v234 = vpop.f32.mrb[0].mxu0
  %v235 = vadd.f32 0.0, %v234
  %v236 = vpop.f32.mrb[0].mxu0
  %v237 = vpop.f32.mrb[0].mxu0
  %v238 = vpop.f32.mrb[0].mxu0
  %239 = vdwg.mxu0
  %v240 = vld [vmem:[%s1] sm:$0xff]
  %v241 = vld [vmem:[%s1 + $0x8] sm:$0xff]
  %v242 = vld [vmem:[%s1 + $0x10] sm:$0xff]
  %v243 = vld [vmem:[%s1 + $0x18] sm:$0xff]
  %v244 = vld [vmem:[%s1 + $0x20] sm:$0xff]
  %v250 = vunpack.c.l.b16 %v240
  %v251 = vunpack.c.h.b16 %v240
  %v252 = vunpack.c.l.b16 %v241
  %v253 = vunpack.c.h.b16 %v241
  %v254 = vunpack.c.l.b16 %v242
  %v255 = vunpack.c.h.b16 %v242
  %v256 = vunpack.c.l.b16 %v243
  %v257 = vunpack.c.h.b16 %v243
  %v258 = vunpack.c.l.b16 %v244
  %v259 = vunpack.c.h.b16 %v244
  %v260 = vpack.c.b16 %v252, %v250
  %v261 = vpack.c.b16 %v253, %v251
  %v262 = vpack.c.b16 %v256, %v254
  %v263 = vpack.c.b16 %v257, %v255
  %v264 = vpack.c.b16 %v258, %v258
  %v265 = vpack.c.b16 %v259, %v259
  %272 = vmatprep.subr.bf16.mxu0 0
  %273 = vmatpush1.bf16.msra.mxu0 %v152
  %274 = vmatprep.subr.bf16.mxu0 0
  %275 = vmatpush1.bf16.msra.mxu0 %v153
  %276 = vmatprep.subr.bf16.mxu0 0
  %277 = vmatpush1.bf16.msra.mxu0 %v154
  %278 = vmatprep.subr.bf16.mxu0 0
  %279 = vmatpush1.bf16.msra.mxu0 %v155
  %280 = vmatprep.subr.bf16.mxu0 0
  %281 = vmatpush1.bf16.msra.mxu0 %v156
  %282 = vmatprep.subr.bf16.mxu0 0
  %283 = vmatpush1.bf16.msra.mxu0 %v157
  %284 = vmatprep.subr.bf16.mxu0 0
  %285 = vmatpush1.bf16.msra.mxu0 %v158
  %286 = vmatprep.subr.bf16.mxu0 0
  %287 = vmatpush1.bf16.msra.mxu0 %v159
  %288 = vmatprep.subr.bf16.mxu0 0
  %289 = vmatpush1.bf16.msra.mxu0 %v160
  %290 = vmatprep.subr.bf16.mxu0 0
  %291 = vmatpush1.bf16.msra.mxu0 %v161
  %292 = vmatprep.subr.bf16.mxu0 0
  %293 = vmatpush1.bf16.msra.mxu0 %v162
  %294 = vmatprep.subr.bf16.mxu0 0
  %295 = vmatpush1.bf16.msra.mxu0 %v163
  %296 = vmatprep.subr.bf16.mxu0 0
  %297 = vmatpush1.bf16.msra.mxu0 %v164
  %298 = vmatprep.subr.bf16.mxu0 0
  %299 = vmatpush1.bf16.msra.mxu0 %v165
  %300 = vmatprep.subr.bf16.mxu0 0
  %301 = vmatpush1.bf16.msra.mxu0 %v166
  %302 = vmatprep.subr.bf16.mxu0 0
  %303 = vmatpush1.bf16.msra.mxu0 %v167
  %304 = vmatprep.mubr.bf16.mxu0 %v261
  %305 = vmatmul.mubr.bf16.gmra.mrb[0].mxu0 %v260
  %v306 = vpop.f32.mrb[0].mxu0
  %v307 = vadd.f32 0.0, %v306
  %v308 = vpop.f32.mrb[0].mxu0
  %v309 = vpop.f32.mrb[0].mxu0
  %v310 = vadd.f32 0.0, %v309
  %v311 = vpop.f32.mrb[0].mxu0
  %312 = vmatprep.mubr.bf16.mxu0 %v263
  %313 = vmatmul.mubr.bf16.gmra.mrb[0].mxu0 %v262
  %v314 = vpop.f32.mrb[0].mxu0
  %v315 = vadd.f32 0.0, %v314
  %v316 = vpop.f32.mrb[0].mxu0
  %v317 = vpop.f32.mrb[0].mxu0
  %v318 = vadd.f32 0.0, %v317
  %v319 = vpop.f32.mrb[0].mxu0
  %320 = vmatprep.mubr.bf16.mxu0 %v265
  %321 = vmatmul.mubr.bf16.gmra.mrb[0].mxu0 %v264
  %v322 = vpop.f32.mrb[0].mxu0
  %v323 = vadd.f32 0.0, %v322
  %v324 = vpop.f32.mrb[0].mxu0
  %v325 = vpop.f32.mrb[0].mxu0
  %v326 = vpop.f32.mrb[0].mxu0
  %327 = vdwg.mxu0
  %v328 = vmax.f32 %v219, %v307
  %v329 = vmax.f32 %v222, %v310
  %v330 = vmax.f32 %v227, %v315
  %v331 = vmax.f32 %v230, %v318
  %v332 = vmax.f32 %v235, %v323
  %v333 = vld [vmem:[%s2] sm:$0xff]
  %v334 = vld [vmem:[%s2 + $0x8] sm:$0xff]
  %v335 = vld [vmem:[%s2 + $0x10] sm:$0xff]
  %v336 = vld [vmem:[%s2 + $0x18] sm:$0xff]
  %v337 = vld [vmem:[%s2 + $0x20] sm:$0xff]
  %v343 = vunpack.c.l.b16 %v333
  %v344 = vunpack.c.h.b16 %v333
  %v345 = vunpack.c.l.b16 %v334
  %v346 = vunpack.c.h.b16 %v334
  %v347 = vunpack.c.l.b16 %v335
  %v348 = vunpack.c.h.b16 %v335
  %v349 = vunpack.c.l.b16 %v336
  %v350 = vunpack.c.h.b16 %v336
  %v351 = vunpack.c.l.b16 %v337
  %v352 = vunpack.c.h.b16 %v337
  %v353 = vpack.c.b16 %v345, %v343
  %v354 = vpack.c.b16 %v346, %v344
  %v355 = vpack.c.b16 %v349, %v347
  %v356 = vpack.c.b16 %v350, %v348
  %v357 = vpack.c.b16 %v351, %v351
  %v358 = vpack.c.b16 %v352, %v352
  %365 = vmatprep.subr.bf16.mxu0 0
  %366 = vmatpush1.bf16.msra.mxu0 %v152
  %367 = vmatprep.subr.bf16.mxu0 0
  %368 = vmatpush1.bf16.msra.mxu0 %v153
  %369 = vmatprep.subr.bf16.mxu0 0
  %370 = vmatpush1.bf16.msra.mxu0 %v154
  %371 = vmatprep.subr.bf16.mxu0 0
  %372 = vmatpush1.bf16.msra.mxu0 %v155
  %373 = vmatprep.subr.bf16.mxu0 0
  %374 = vmatpush1.bf16.msra.mxu0 %v156
  %375 = vmatprep.subr.bf16.mxu0 0
  %376 = vmatpush1.bf16.msra.mxu0 %v157
  %377 = vmatprep.subr.bf16.mxu0 0
  %378 = vmatpush1.bf16.msra.mxu0 %v158
  %379 = vmatprep.subr.bf16.mxu0 0
  %380 = vmatpush1.bf16.msra.mxu0 %v159
  %381 = vmatprep.subr.bf16.mxu0 0
  %382 = vmatpush1.bf16.msra.mxu0 %v160
  %383 = vmatprep.subr.bf16.mxu0 0
  %384 = vmatpush1.bf16.msra.mxu0 %v161
  %385 = vmatprep.subr.bf16.mxu0 0
  %386 = vmatpush1.bf16.msra.mxu0 %v162
  %387 = vmatprep.subr.bf16.mxu0 0
  %388 = vmatpush1.bf16.msra.mxu0 %v163
  %389 = vmatprep.subr.bf16.mxu0 0
  %390 = vmatpush1.bf16.msra.mxu0 %v164
  %391 = vmatprep.subr.bf16.mxu0 0
  %392 = vmatpush1.bf16.msra.mxu0 %v165
  %393 = vmatprep.subr.bf16.mxu0 0
  %394 = vmatpush1.bf16.msra.mxu0 %v166
  %395 = vmatprep.subr.bf16.mxu0 0
  %396 = vmatpush1.bf16.msra.mxu0 %v167
  %397 = vmatprep.mubr.bf16.mxu0 %v354
  %398 = vmatmul.mubr.bf16.gmra.mrb[0].mxu0 %v353
  %v399 = vpop.f32.mrb[0].mxu0
  %v400 = vadd.f32 0.0, %v399
  %v401 = vpop.f32.mrb[0].mxu0
  %v402 = vpop.f32.mrb[0].mxu0
  %v403 = vadd.f32 0.0, %v402
  %v404 = vpop.f32.mrb[0].mxu0
  %405 = vmatprep.mubr.bf16.mxu0 %v356
  %406 = vmatmul.mubr.bf16.gmra.mrb[0].mxu0 %v355
  %v407 = vpop.f32.mrb[0].mxu0
  %v408 = vadd.f32 0.0, %v407
  %v409 = vpop.f32.mrb[0].mxu0
  %v410 = vpop.f32.mrb[0].mxu0
  %v411 = vadd.f32 0.0, %v410
  %v412 = vpop.f32.mrb[0].mxu0
  %413 = vmatprep.mubr.bf16.mxu0 %v358
  %414 = vmatmul.mubr.bf16.gmra.mrb[0].mxu0 %v357
  %v415 = vpop.f32.mrb[0].mxu0
  %v416 = vadd.f32 0.0, %v415
  %v417 = vpop.f32.mrb[0].mxu0
  %v418 = vpop.f32.mrb[0].mxu0
  %v419 = vpop.f32.mrb[0].mxu0
  %420 = vdwg.mxu0
  %v421 = vmax.f32 %v328, %v400
  %v422 = vmax.f32 %v329, %v403
  %v423 = vmax.f32 %v330, %v408
  %v424 = vmax.f32 %v331, %v411
  %v425 = vmax.f32 %v332, %v416
  %v426 = vld [vmem:[%s3] sm:$0xff]
  %v427 = vld [vmem:[%s3 + $0x8] sm:$0xff]
  %v428 = vld [vmem:[%s3 + $0x10] sm:$0xff]
  %v429 = vld [vmem:[%s3 + $0x18] sm:$0xff]
  %v430 = vld [vmem:[%s3 + $0x20] sm:$0xff]
  %v436 = vunpack.c.l.b16 %v426
  %v437 = vunpack.c.h.b16 %v426
  %v438 = vunpack.c.l.b16 %v427
  %v439 = vunpack.c.h.b16 %v427
  %v440 = vunpack.c.l.b16 %v428
  %v441 = vunpack.c.h.b16 %v428
  %v442 = vunpack.c.l.b16 %v429
  %v443 = vunpack.c.h.b16 %v429
  %v444 = vunpack.c.l.b16 %v430
  %v445 = vunpack.c.h.b16 %v430
  %v446 = vpack.c.b16 %v438, %v436
  %v447 = vpack.c.b16 %v439, %v437
  %v448 = vpack.c.b16 %v442, %v440
  %v449 = vpack.c.b16 %v443, %v441
  %v450 = vpack.c.b16 %v444, %v444
  %v451 = vpack.c.b16 %v445, %v445
  %458 = vmatprep.subr.bf16.mxu0 0
  %459 = vmatpush1.bf16.msra.mxu0 %v152
  %460 = vmatprep.subr.bf16.mxu0 0
  %461 = vmatpush1.bf16.msra.mxu0 %v153
  %462 = vmatprep.subr.bf16.mxu0 0
  %463 = vmatpush1.bf16.msra.mxu0 %v154
  %464 = vmatprep.subr.bf16.mxu0 0
  %465 = vmatpush1.bf16.msra.mxu0 %v155
  %466 = vmatprep.subr.bf16.mxu0 0
  %467 = vmatpush1.bf16.msra.mxu0 %v156
  %468 = vmatprep.subr.bf16.mxu0 0
  %469 = vmatpush1.bf16.msra.mxu0 %v157
  %470 = vmatprep.subr.bf16.mxu0 0
  %471 = vmatpush1.bf16.msra.mxu0 %v158
  %472 = vmatprep.subr.bf16.mxu0 0
  %473 = vmatpush1.bf16.msra.mxu0 %v159
  %474 = vmatprep.subr.bf16.mxu0 0
  %475 = vmatpush1.bf16.msra.mxu0 %v160
  %476 = vmatprep.subr.bf16.mxu0 0
  %477 = vmatpush1.bf16.msra.mxu0 %v161
  %478 = vmatprep.subr.bf16.mxu0 0
  %479 = vmatpush1.bf16.msra.mxu0 %v162
  %480 = vmatprep.subr.bf16.mxu0 0
  %481 = vmatpush1.bf16.msra.mxu0 %v163
  %482 = vmatprep.subr.bf16.mxu0 0
  %483 = vmatpush1.bf16.msra.mxu0 %v164
  %484 = vmatprep.subr.bf16.mxu0 0
  %485 = vmatpush1.bf16.msra.mxu0 %v165
  %486 = vmatprep.subr.bf16.mxu0 0
  %487 = vmatpush1.bf16.msra.mxu0 %v166
  %488 = vmatprep.subr.bf16.mxu0 0
  %489 = vmatpush1.bf16.msra.mxu0 %v167
  %490 = vmatprep.mubr.bf16.mxu0 %v447
  %491 = vmatmul.mubr.bf16.gmra.mrb[0].mxu0 %v446
  %v492 = vpop.f32.mrb[0].mxu0
  %v493 = vadd.f32 0.0, %v492
  %v494 = vpop.f32.mrb[0].mxu0
  %v495 = vpop.f32.mrb[0].mxu0
  %v496 = vadd.f32 0.0, %v495
  %v497 = vpop.f32.mrb[0].mxu0
  %498 = vmatprep.mubr.bf16.mxu0 %v449
  %499 = vmatmul.mubr.bf16.gmra.mrb[0].mxu0 %v448
  %v500 = vpop.f32.mrb[0].mxu0
  %v501 = vadd.f32 0.0, %v500
  %v502 = vpop.f32.mrb[0].mxu0
  %v503 = vpop.f32.mrb[0].mxu0
  %v504 = vadd.f32 0.0, %v503
  %v505 = vpop.f32.mrb[0].mxu0
  %506 = vmatprep.mubr.bf16.mxu0 %v451
  %507 = vmatmul.mubr.bf16.gmra.mrb[0].mxu0 %v450
  %v508 = vpop.f32.mrb[0].mxu0
  %v509 = vadd.f32 0.0, %v508
  %v510 = vpop.f32.mrb[0].mxu0
  %v511 = vpop.f32.mrb[0].mxu0
  %v512 = vpop.f32.mrb[0].mxu0
  %513 = vdwg.mxu0
  %v514 = vmax.f32 %v421, %v493
  %v515 = vmax.f32 %v422, %v496
  %v516 = vmax.f32 %v423, %v501
  %v517 = vmax.f32 %v424, %v504
  %v518 = vmax.f32 %v425, %v509
  %v519 = vld [vmem:[%s5] sm:$0x1]
  %v521 = vlaneseq
  %v522 = vshrl.u32 %v521, 7
  %v523 = vsub.s32 0, %v522
  %v524 = vrot.slane %v519, %v523
  %v526 = vadd.f32 %v514, %v524
  %v527 = vadd.f32 %v515, %v524
  %v528 = vadd.f32 %v516, %v524
  %v529 = vadd.f32 %v517, %v524
  %v530 = vadd.f32 %v518, %v524
  %v531 = vmax.f32 %v526, 0.0
  %v532 = vmax.f32 %v527, 0.0
  %v533 = vmax.f32 %v528, 0.0
  %v534 = vmax.f32 %v529, 0.0
  %v535 = vmax.f32 %v530, 0.0
  %v536 = vpack.c.bf16 %v532, %v531
  %v537 = vpack.c.bf16 %v534, %v533
  %v538 = vpack.c.bf16 %v535, %v535
  %v542 = vunpack.c.l.b16 %v536
  %v543 = vunpack.c.h.b16 %v536
  %v544 = vunpack.c.l.b16 %v537
  %v545 = vunpack.c.h.b16 %v537
  %v546 = vunpack.c.l.b16 %v538
  %v547 = vpack.c.b16 %v542, %v542
  %v548 = vpack.c.b16 %v543, %v543
  %v549 = vpack.c.b16 %v544, %v544
  %v550 = vpack.c.b16 %v545, %v545
  %v551 = vpack.c.b16 %v546, %v546
  %557 = vst [vmem:[%s6] sm:$0xf] %v547
  %558 = vst [vmem:[%s6 + $0x4] sm:$0xf] %v548
  %559 = vst [vmem:[%s6 + $0x8] sm:$0xf] %v549
  %560 = vst [vmem:[%s6 + $0xc] sm:$0xf] %v550
  %561 = vst [vmem:[%s6 + $0x10] sm:$0xf] %v551
  // Predicated region
  $region26: #{_lambda_.6} parent=0 // pred_check
    _
  $region27: #{_lambda_.6} parent=0 // pred_check_branch
    %563 = sbr.rel (0) target = $region29
  $region28: #{_lambda_.6} parent=0 // pred_region
    _
  $region29: #{_lambda_.6} parent=0 // pred_fallthru
    _
  // Predicated region
  $region30: #{_lambda_.6} parent=0 // pred_check
    _
  $region31: #{_lambda_.6} parent=0 // pred_check_branch
    %565 = sbr.rel (0) target = $region33
  $region32: #{_lambda_.6} parent=0 // pred_region
    _
  $region33: #{_lambda_.6} parent=0 // pred_fallthru
    _

// kernel: _lambda_.7
$region0: #{_lambda_.7}
  #allocation0 [shape = 'u32[]', space=smem, size = 0x4, offset = 0x4, fixed_abs, tag = 'smem constant byte address 0x4 - core index']
  #allocation1 [shape = 'u32[144,128]{1,0:T(1,128)}', space=vmem, size = 0x12000, scoped, tag = 'internal scratch']
  %s0 = inlined_call_operand.vmem [shape: bf16[24,128], index: 0, kind: input, shape index: {}]
  %s1 = inlined_call_operand.vmem [shape: bf16[128,128], index: 1, kind: input, shape index: {}]
  %s2 = inlined_call_operand.vmem [shape: f32[1,128], index: 2, kind: input, shape index: {}]
  %s3 = inlined_call_operand.vmem [shape: bf16[24,128], index: 3, kind: output, shape index: {}]
  %s4 = sld [smem:[#allocation0]]
  $region22: #{_lambda_.7} parent=0
    _
  %s6 = ssub.s32 1, %s4
  %s7 = scalar_select 0, %s6, %s4
  // Predicated region
  $region2: #{_lambda_.7} parent=0 // pred_check
    _
  $region3: #{_lambda_.7} parent=0 // pred_check_branch
    %9 = sbr.rel (0) target = $region5
  $region4: #{_lambda_.7} parent=0 // pred_region
    _
  $region5: #{_lambda_.7} parent=0 // pred_fallthru
    _
  // Predicated region
  $region6: #{_lambda_.7} parent=0 // pred_check
    _
  $region7: #{_lambda_.7} parent=0 // pred_check_branch
    %11 = sbr.rel (0) target = $region9
  $region8: #{_lambda_.7} parent=0 // pred_region
    _
  $region9: #{_lambda_.7} parent=0 // pred_fallthru
    _
  // Predicated region
  $region10: #{_lambda_.7} parent=0 // pred_check
    _
  $region11: #{_lambda_.7} parent=0 // pred_check_branch
    %13 = sbr.rel (0) target = $region13
  $region12: #{_lambda_.7} parent=0 // pred_region
    _
  $region13: #{_lambda_.7} parent=0 // pred_fallthru
    _
  %v15 = vld [vmem:[%s0] sm:$0xf]
  %v16 = vld [vmem:[%s0 + $0x4] sm:$0xf]
  %v17 = vld [vmem:[%s0 + $0x8] sm:$0xf]
  %v18 = vld [vmem:[%s1] sm:$0xf]
  %v19 = vld [vmem:[%s1 + $0x4] sm:$0xf]
  %v20 = vld [vmem:[%s1 + $0x8] sm:$0xf]
  %v21 = vld [vmem:[%s1 + $0xc] sm:$0xf]
  %v22 = vld [vmem:[%s1 + $0x10] sm:$0xf]
  %v23 = vld [vmem:[%s1 + $0x14] sm:$0xf]
  %v24 = vld [vmem:[%s1 + $0x18] sm:$0xf]
  %v25 = vld [vmem:[%s1 + $0x1c] sm:$0xf]
  %v26 = vld [vmem:[%s1 + $0x20] sm:$0xf]
  %v27 = vld [vmem:[%s1 + $0x24] sm:$0xf]
  %v28 = vld [vmem:[%s1 + $0x28] sm:$0xf]
  %v29 = vld [vmem:[%s1 + $0x2c] sm:$0xf]
  %v30 = vld [vmem:[%s1 + $0x30] sm:$0xf]
  %v31 = vld [vmem:[%s1 + $0x34] sm:$0xf]
  %v32 = vld [vmem:[%s1 + $0x38] sm:$0xf]
  %v33 = vld [vmem:[%s1 + $0x3c] sm:$0xf]
  %v34 = vld [vmem:[%s2] sm:$0x1]
  %v36 = vlaneseq
  %v37 = vshrl.u32 %v36, 7
  %v38 = vsub.s32 0, %v37
  %v39 = vrot.slane %v34, %v38
  %v44 = vunpack.c.l.b16 %v15
  %v45 = vunpack.c.l.b16 %v16
  %v46 = vunpack.c.l.b16 %v17
  %v47 = vpack.c.b16 %v45, %v44
  %v48 = vpack.c.b16 %v46, %v46
  %v67 = vunpack.c.l.b16 %v18
  %v68 = vunpack.c.l.b16 %v19
  %v69 = vunpack.c.l.b16 %v20
  %v70 = vunpack.c.l.b16 %v21
  %v71 = vunpack.c.l.b16 %v22
  %v72 = vunpack.c.l.b16 %v23
  %v73 = vunpack.c.l.b16 %v24
  %v74 = vunpack.c.l.b16 %v25
  %v75 = vunpack.c.l.b16 %v26
  %v76 = vunpack.c.l.b16 %v27
  %v77 = vunpack.c.l.b16 %v28
  %v78 = vunpack.c.l.b16 %v29
  %v79 = vunpack.c.l.b16 %v30
  %v80 = vunpack.c.l.b16 %v31
  %v81 = vunpack.c.l.b16 %v32
  %v82 = vunpack.c.l.b16 %v33
  %v83 = vpack.c.b16 %v68, %v67
  %v84 = vpack.c.b16 %v70, %v69
  %v85 = vpack.c.b16 %v72, %v71
  %v86 = vpack.c.b16 %v74, %v73
  %v87 = vpack.c.b16 %v76, %v75
  %v88 = vpack.c.b16 %v78, %v77
  %v89 = vpack.c.b16 %v80, %v79
  %v90 = vpack.c.b16 %v82, %v81
  %99 = vmatprep.subr.bf16.mxu0 0
  %100 = vmatpush1.bf16.msra.mxu0 %v83
  %101 = vmatprep.subr.bf16.mxu0 0
  %102 = vmatpush1.bf16.msra.mxu0 %v84
  %103 = vmatprep.subr.bf16.mxu0 0
  %104 = vmatpush1.bf16.msra.mxu0 %v85
  %105 = vmatprep.subr.bf16.mxu0 0
  %106 = vmatpush1.bf16.msra.mxu0 %v86
  %107 = vmatprep.subr.bf16.mxu0 0
  %108 = vmatpush1.bf16.msra.mxu0 %v87
  %109 = vmatprep.subr.bf16.mxu0 0
  %110 = vmatpush1.bf16.msra.mxu0 %v88
  %111 = vmatprep.subr.bf16.mxu0 0
  %112 = vmatpush1.bf16.msra.mxu0 %v89
  %113 = vmatprep.subr.bf16.mxu0 0
  %114 = vmatpush1.bf16.msra.mxu0 %v90
  %115 = vmatprep.subr.bf16.mxu0 0
  %116 = vmatpush1.bf16.msra.mxu0 0
  %117 = vmatprep.subr.bf16.mxu0 0
  %118 = vmatpush1.bf16.msra.mxu0 0
  %119 = vmatprep.subr.bf16.mxu0 0
  %120 = vmatpush1.bf16.msra.mxu0 0
  %121 = vmatprep.subr.bf16.mxu0 0
  %122 = vmatpush1.bf16.msra.mxu0 0
  %123 = vmatprep.subr.bf16.mxu0 0
  %124 = vmatpush1.bf16.msra.mxu0 0
  %125 = vmatprep.subr.bf16.mxu0 0
  %126 = vmatpush1.bf16.msra.mxu0 0
  %127 = vmatprep.subr.bf16.mxu0 0
  %128 = vmatpush1.bf16.msra.mxu0 0
  %129 = vmatprep.subr.bf16.mxu0 0
  %130 = vmatpush1.bf16.msra.mxu0 0
  %131 = vmatprep.mubr.bf16.mxu0 0
  %132 = vmatmul.mubr.bf16.gmra.mrb[0].mxu0 %v47
  %v133 = vpop.f32.mrb[0].mxu0
  %v134 = vadd.f32 %v39, %v133
  %v135 = vpop.f32.mrb[0].mxu0
  %v136 = vpop.f32.mrb[0].mxu0
  %v137 = vadd.f32 %v39, %v136
  %v138 = vpop.f32.mrb[0].mxu0
  %139 = vmatprep.mubr.bf16.mxu0 0
  %140 = vmatmul.mubr.bf16.gmra.mrb[0].mxu0 %v48
  %v141 = vpop.f32.mrb[0].mxu0
  %v142 = vadd.f32 %v39, %v141
  %v143 = vpop.f32.mrb[0].mxu0
  %v144 = vpop.f32.mrb[0].mxu0
  %v145 = vpop.f32.mrb[0].mxu0
  %146 = vdwg.mxu0
  %v147 = vmax.f32 %v134, 0.0
  %v148 = vmax.f32 %v137, 0.0
  %v149 = vmax.f32 %v142, 0.0
  %v150 = vpack.c.bf16 %v148, %v147
  %v151 = vpack.c.bf16 %v149, %v149
  %v154 = vunpack.c.l.b16 %v150
  %v155 = vunpack.c.h.b16 %v150
  %v156 = vunpack.c.l.b16 %v151
  %v157 = vpack.c.b16 %v154, %v154
  %v158 = vpack.c.b16 %v155, %v155
  %v159 = vpack.c.b16 %v156, %v156
  %163 = vst [vmem:[%s3] sm:$0xf] %v157
  %164 = vst [vmem:[%s3 + $0x4] sm:$0xf] %v158
  %165 = vst [vmem:[%s3 + $0x8] sm:$0xf] %v159
  // Predicated region
  $region14: #{_lambda_.7} parent=0 // pred_check
    _
  $region15: #{_lambda_.7} parent=0 // pred_check_branch
    %167 = sbr.rel (0) target = $region17
  $region16: #{_lambda_.7} parent=0 // pred_region
    _
  $region17: #{_lambda_.7} parent=0 // pred_fallthru
    _
  // Predicated region
  $region18: #{_lambda_.7} parent=0 // pred_check
    _
  $region19: #{_lambda_.7} parent=0 // pred_check_branch
    %169 = sbr.rel (0) target = $region21
  $region20: #{_lambda_.7} parent=0 // pred_region
    _
  $region21: #{_lambda_.7} parent=0 // pred_fallthru
    _

// kernel: _lambda_.9
$region0: #{_lambda_.9}
  #allocation0 [shape = 'u32[]', space=smem, size = 0x4, offset = 0x4, fixed_abs, tag = 'smem constant byte address 0x4 - core index']
  #allocation1 [shape = 'u32[144,128]{1,0:T(1,128)}', space=vmem, size = 0x12000, scoped, tag = 'internal scratch']
  %s0 = inlined_call_operand.vmem [shape: bf16[8,512], index: 0, kind: input, shape index: {}]
  %s1 = inlined_call_operand.vmem [shape: bf16[512,128], index: 1, kind: input, shape index: {}]
  %s2 = inlined_call_operand.vmem [shape: f32[1,128], index: 2, kind: input, shape index: {}]
  %s3 = inlined_call_operand.vmem [shape: f32[8,128], index: 3, kind: output, shape index: {}]
  %s4 = sld [smem:[#allocation0]]
  $region22: #{_lambda_.9} parent=0
    _
  %s6 = ssub.s32 1, %s4
  %s7 = scalar_select 0, %s6, %s4
  // Predicated region
  $region2: #{_lambda_.9} parent=0 // pred_check
    _
  $region3: #{_lambda_.9} parent=0 // pred_check_branch
    %9 = sbr.rel (0) target = $region5
  $region4: #{_lambda_.9} parent=0 // pred_region
    _
  $region5: #{_lambda_.9} parent=0 // pred_fallthru
    _
  // Predicated region
  $region6: #{_lambda_.9} parent=0 // pred_check
    _
  $region7: #{_lambda_.9} parent=0 // pred_check_branch
    %11 = sbr.rel (0) target = $region9
  $region8: #{_lambda_.9} parent=0 // pred_region
    _
  $region9: #{_lambda_.9} parent=0 // pred_fallthru
    _
  // Predicated region
  $region10: #{_lambda_.9} parent=0 // pred_check
    _
  $region11: #{_lambda_.9} parent=0 // pred_check_branch
    %13 = sbr.rel (0) target = $region13
  $region12: #{_lambda_.9} parent=0 // pred_region
    _
  $region13: #{_lambda_.9} parent=0 // pred_fallthru
    _
  %v15 = vld [vmem:[%s0] sm:$0xff]
  %v16 = vld [vmem:[%s0 + $0x8] sm:$0xff]
  %v17 = vld [vmem:[%s1] sm:$0xf]
  %v18 = vld [vmem:[%s1 + $0x4] sm:$0xf]
  %v19 = vld [vmem:[%s1 + $0x8] sm:$0xf]
  %v20 = vld [vmem:[%s1 + $0xc] sm:$0xf]
  %v21 = vld [vmem:[%s1 + $0x10] sm:$0xf]
  %v22 = vld [vmem:[%s1 + $0x14] sm:$0xf]
  %v23 = vld [vmem:[%s1 + $0x18] sm:$0xf]
  %v24 = vld [vmem:[%s1 + $0x1c] sm:$0xf]
  %v25 = vld [vmem:[%s1 + $0x20] sm:$0xf]
  %v26 = vld [vmem:[%s1 + $0x24] sm:$0xf]
  %v27 = vld [vmem:[%s1 + $0x28] sm:$0xf]
  %v28 = vld [vmem:[%s1 + $0x2c] sm:$0xf]
  %v29 = vld [vmem:[%s1 + $0x30] sm:$0xf]
  %v30 = vld [vmem:[%s1 + $0x34] sm:$0xf]
  %v31 = vld [vmem:[%s1 + $0x38] sm:$0xf]
  %v32 = vld [vmem:[%s1 + $0x3c] sm:$0xf]
  %v33 = vld [vmem:[%s1 + $0x40] sm:$0xf]
  %v34 = vld [vmem:[%s1 + $0x44] sm:$0xf]
  %v35 = vld [vmem:[%s1 + $0x48] sm:$0xf]
  %v36 = vld [vmem:[%s1 + $0x4c] sm:$0xf]
  %v37 = vld [vmem:[%s1 + $0x50] sm:$0xf]
  %v38 = vld [vmem:[%s1 + $0x54] sm:$0xf]
  %v39 = vld [vmem:[%s1 + $0x58] sm:$0xf]
  %v40 = vld [vmem:[%s1 + $0x5c] sm:$0xf]
  %v41 = vld [vmem:[%s1 + $0x60] sm:$0xf]
  %v42 = vld [vmem:[%s1 + $0x64] sm:$0xf]
  %v43 = vld [vmem:[%s1 + $0x68] sm:$0xf]
  %v44 = vld [vmem:[%s1 + $0x6c] sm:$0xf]
  %v45 = vld [vmem:[%s1 + $0x70] sm:$0xf]
  %v46 = vld [vmem:[%s1 + $0x74] sm:$0xf]
  %v47 = vld [vmem:[%s1 + $0x78] sm:$0xf]
  %v48 = vld [vmem:[%s1 + $0x7c] sm:$0xf]
  %v49 = vld [vmem:[%s1 + $0x80] sm:$0xf]
  %v50 = vld [vmem:[%s1 + $0x84] sm:$0xf]
  %v51 = vld [vmem:[%s1 + $0x88] sm:$0xf]
  %v52 = vld [vmem:[%s1 + $0x8c] sm:$0xf]
  %v53 = vld [vmem:[%s1 + $0x90] sm:$0xf]
  %v54 = vld [vmem:[%s1 + $0x94] sm:$0xf]
  %v55 = vld [vmem:[%s1 + $0x98] sm:$0xf]
  %v56 = vld [vmem:[%s1 + $0x9c] sm:$0xf]
  %v57 = vld [vmem:[%s1 + $0xa0] sm:$0xf]
  %v58 = vld [vmem:[%s1 + $0xa4] sm:$0xf]
  %v59 = vld [vmem:[%s1 + $0xa8] sm:$0xf]
  %v60 = vld [vmem:[%s1 + $0xac] sm:$0xf]
  %v61 = vld [vmem:[%s1 + $0xb0] sm:$0xf]
  %v62 = vld [vmem:[%s1 + $0xb4] sm:$0xf]
  %v63 = vld [vmem:[%s1 + $0xb8] sm:$0xf]
  %v64 = vld [vmem:[%s1 + $0xbc] sm:$0xf]
  %v65 = vld [vmem:[%s1 + $0xc0] sm:$0xf]
  %v66 = vld [vmem:[%s1 + $0xc4] sm:$0xf]
  %v67 = vld [vmem:[%s1 + $0xc8] sm:$0xf]
  %v68 = vld [vmem:[%s1 + $0xcc] sm:$0xf]
  %v69 = vld [vmem:[%s1 + $0xd0] sm:$0xf]
  %v70 = vld [vmem:[%s1 + $0xd4] sm:$0xf]
  %v71 = vld [vmem:[%s1 + $0xd8] sm:$0xf]
  %v72 = vld [vmem:[%s1 + $0xdc] sm:$0xf]
  %v73 = vld [vmem:[%s1 + $0xe0] sm:$0xf]
  %v74 = vld [vmem:[%s1 + $0xe4] sm:$0xf]
  %v75 = vld [vmem:[%s1 + $0xe8] sm:$0xf]
  %v76 = vld [vmem:[%s1 + $0xec] sm:$0xf]
  %v77 = vld [vmem:[%s1 + $0xf0] sm:$0xf]
  %v78 = vld [vmem:[%s1 + $0xf4] sm:$0xf]
  %v79 = vld [vmem:[%s1 + $0xf8] sm:$0xf]
  %v80 = vld [vmem:[%s1 + $0xfc] sm:$0xf]
  %v81 = vld [vmem:[%s2] sm:$0x1]
  %v83 = vlaneseq
  %v84 = vshrl.u32 %v83, 7
  %v85 = vsub.s32 0, %v84
  %v86 = vrot.slane %v81, %v85
  %v90 = vunpack.c.l.b16 %v15
  %v91 = vunpack.c.h.b16 %v15
  %v92 = vunpack.c.l.b16 %v16
  %v93 = vunpack.c.h.b16 %v16
  %v94 = vpack.c.b16 %v90, %v90
  %v95 = vpack.c.b16 %v91, %v91
  %v96 = vpack.c.b16 %v92, %v92
  %v97 = vpack.c.b16 %v93, %v93
  %v166 = vunpack.c.l.b16 %v17
  %v167 = vunpack.c.l.b16 %v18
  %v168 = vunpack.c.l.b16 %v19
  %v169 = vunpack.c.l.b16 %v20
  %v170 = vunpack.c.l.b16 %v21
  %v171 = vunpack.c.l.b16 %v22
  %v172 = vunpack.c.l.b16 %v23
  %v173 = vunpack.c.l.b16 %v24
  %v174 = vunpack.c.l.b16 %v25
  %v175 = vunpack.c.l.b16 %v26
  %v176 = vunpack.c.l.b16 %v27
  %v177 = vunpack.c.l.b16 %v28
  %v178 = vunpack.c.l.b16 %v29
  %v179 = vunpack.c.l.b16 %v30
  %v180 = vunpack.c.l.b16 %v31
  %v181 = vunpack.c.l.b16 %v32
  %v182 = vunpack.c.l.b16 %v33
  %v183 = vunpack.c.l.b16 %v34
  %v184 = vunpack.c.l.b16 %v35
  %v185 = vunpack.c.l.b16 %v36
  %v186 = vunpack.c.l.b16 %v37
  %v187 = vunpack.c.l.b16 %v38
  %v188 = vunpack.c.l.b16 %v39
  %v189 = vunpack.c.l.b16 %v40
  %v190 = vunpack.c.l.b16 %v41
  %v191 = vunpack.c.l.b16 %v42
  %v192 = vunpack.c.l.b16 %v43
  %v193 = vunpack.c.l.b16 %v44
  %v194 = vunpack.c.l.b16 %v45
  %v195 = vunpack.c.l.b16 %v46
  %v196 = vunpack.c.l.b16 %v47
  %v197 = vunpack.c.l.b16 %v48
  %v198 = vunpack.c.l.b16 %v49
  %v199 = vunpack.c.l.b16 %v50
  %v200 = vunpack.c.l.b16 %v51
  %v201 = vunpack.c.l.b16 %v52
  %v202 = vunpack.c.l.b16 %v53
  %v203 = vunpack.c.l.b16 %v54
  %v204 = vunpack.c.l.b16 %v55
  %v205 = vunpack.c.l.b16 %v56
  %v206 = vunpack.c.l.b16 %v57
  %v207 = vunpack.c.l.b16 %v58
  %v208 = vunpack.c.l.b16 %v59
  %v209 = vunpack.c.l.b16 %v60
  %v210 = vunpack.c.l.b16 %v61
  %v211 = vunpack.c.l.b16 %v62
  %v212 = vunpack.c.l.b16 %v63
  %v213 = vunpack.c.l.b16 %v64
  %v214 = vunpack.c.l.b16 %v65
  %v215 = vunpack.c.l.b16 %v66
  %v216 = vunpack.c.l.b16 %v67
  %v217 = vunpack.c.l.b16 %v68
  %v218 = vunpack.c.l.b16 %v69
  %v219 = vunpack.c.l.b16 %v70
  %v220 = vunpack.c.l.b16 %v71
  %v221 = vunpack.c.l.b16 %v72
  %v222 = vunpack.c.l.b16 %v73
  %v223 = vunpack.c.l.b16 %v74
  %v224 = vunpack.c.l.b16 %v75
  %v225 = vunpack.c.l.b16 %v76
  %v226 = vunpack.c.l.b16 %v77
  %v227 = vunpack.c.l.b16 %v78
  %v228 = vunpack.c.l.b16 %v79
  %v229 = vunpack.c.l.b16 %v80
  %v230 = vpack.c.b16 %v167, %v166
  %v231 = vpack.c.b16 %v169, %v168
  %v232 = vpack.c.b16 %v171, %v170
  %v233 = vpack.c.b16 %v173, %v172
  %v234 = vpack.c.b16 %v175, %v174
  %v235 = vpack.c.b16 %v177, %v176
  %v236 = vpack.c.b16 %v179, %v178
  %v237 = vpack.c.b16 %v181, %v180
  %v238 = vpack.c.b16 %v183, %v182
  %v239 = vpack.c.b16 %v185, %v184
  %v240 = vpack.c.b16 %v187, %v186
  %v241 = vpack.c.b16 %v189, %v188
  %v242 = vpack.c.b16 %v191, %v190
  %v243 = vpack.c.b16 %v193, %v192
  %v244 = vpack.c.b16 %v195, %v194
  %v245 = vpack.c.b16 %v197, %v196
  %v246 = vpack.c.b16 %v199, %v198
  %v247 = vpack.c.b16 %v201, %v200
  %v248 = vpack.c.b16 %v203, %v202
  %v249 = vpack.c.b16 %v205, %v204
  %v250 = vpack.c.b16 %v207, %v206
  %v251 = vpack.c.b16 %v209, %v208
  %v252 = vpack.c.b16 %v211, %v210
  %v253 = vpack.c.b16 %v213, %v212
  %v254 = vpack.c.b16 %v215, %v214
  %v255 = vpack.c.b16 %v217, %v216
  %v256 = vpack.c.b16 %v219, %v218
  %v257 = vpack.c.b16 %v221, %v220
  %v258 = vpack.c.b16 %v223, %v222
  %v259 = vpack.c.b16 %v225, %v224
  %v260 = vpack.c.b16 %v227, %v226
  %v261 = vpack.c.b16 %v229, %v228
  %294 = vmatprep.subr.bf16.mxu0 0
  %295 = vmatpush1.bf16.msra.mxu0 %v230
  %296 = vmatprep.subr.bf16.mxu0 0
  %297 = vmatpush1.bf16.msra.mxu0 %v231
  %298 = vmatprep.subr.bf16.mxu0 0
  %299 = vmatpush1.bf16.msra.mxu0 %v232
  %300 = vmatprep.subr.bf16.mxu0 0
  %301 = vmatpush1.bf16.msra.mxu0 %v233
  %302 = vmatprep.subr.bf16.mxu0 0
  %303 = vmatpush1.bf16.msra.mxu0 %v234
  %304 = vmatprep.subr.bf16.mxu0 0
  %305 = vmatpush1.bf16.msra.mxu0 %v235
  %306 = vmatprep.subr.bf16.mxu0 0
  %307 = vmatpush1.bf16.msra.mxu0 %v236
  %308 = vmatprep.subr.bf16.mxu0 0
  %309 = vmatpush1.bf16.msra.mxu0 %v237
  %310 = vmatprep.subr.bf16.mxu0 0
  %311 = vmatpush1.bf16.msra.mxu0 %v238
  %312 = vmatprep.subr.bf16.mxu0 0
  %313 = vmatpush1.bf16.msra.mxu0 %v239
  %314 = vmatprep.subr.bf16.mxu0 0
  %315 = vmatpush1.bf16.msra.mxu0 %v240
  %316 = vmatprep.subr.bf16.mxu0 0
  %317 = vmatpush1.bf16.msra.mxu0 %v241
  %318 = vmatprep.subr.bf16.mxu0 0
  %319 = vmatpush1.bf16.msra.mxu0 %v242
  %320 = vmatprep.subr.bf16.mxu0 0
  %321 = vmatpush1.bf16.msra.mxu0 %v243
  %322 = vmatprep.subr.bf16.mxu0 0
  %323 = vmatpush1.bf16.msra.mxu0 %v244
  %324 = vmatprep.subr.bf16.mxu0 0
  %325 = vmatpush1.bf16.msra.mxu0 %v245
  %326 = vmatprep.mubr.bf16.mxu0 %v95
  %327 = vmatmul.mubr.bf16.gmra.mrb[0].mxu0 %v94
  %v328 = vpop.f32.mrb[0].mxu0
  %v329 = vadd.f32 %v86, %v328
  %v330 = vpop.f32.mrb[0].mxu0
  %v331 = vpop.f32.mrb[0].mxu0
  %v332 = vpop.f32.mrb[0].mxu0
  %333 = vdwg.mxu0
  %334 = vmatprep.subr.bf16.mxu0 0
  %335 = vmatpush1.bf16.msra.mxu0 %v246
  %336 = vmatprep.subr.bf16.mxu0 0
  %337 = vmatpush1.bf16.msra.mxu0 %v247
  %338 = vmatprep.subr.bf16.mxu0 0
  %339 = vmatpush1.bf16.msra.mxu0 %v248
  %340 = vmatprep.subr.bf16.mxu0 0
  %341 = vmatpush1.bf16.msra.mxu0 %v249
  %342 = vmatprep.subr.bf16.mxu0 0
  %343 = vmatpush1.bf16.msra.mxu0 %v250
  %344 = vmatprep.subr.bf16.mxu0 0
  %345 = vmatpush1.bf16.msra.mxu0 %v251
  %346 = vmatprep.subr.bf16.mxu0 0
  %347 = vmatpush1.bf16.msra.mxu0 %v252
  %348 = vmatprep.subr.bf16.mxu0 0
  %349 = vmatpush1.bf16.msra.mxu0 %v253
  %350 = vmatprep.subr.bf16.mxu0 0
  %351 = vmatpush1.bf16.msra.mxu0 %v254
  %352 = vmatprep.subr.bf16.mxu0 0
  %353 = vmatpush1.bf16.msra.mxu0 %v255
  %354 = vmatprep.subr.bf16.mxu0 0
  %355 = vmatpush1.bf16.msra.mxu0 %v256
  %356 = vmatprep.subr.bf16.mxu0 0
  %357 = vmatpush1.bf16.msra.mxu0 %v257
  %358 = vmatprep.subr.bf16.mxu0 0
  %359 = vmatpush1.bf16.msra.mxu0 %v258
  %360 = vmatprep.subr.bf16.mxu0 0
  %361 = vmatpush1.bf16.msra.mxu0 %v259
  %362 = vmatprep.subr.bf16.mxu0 0
  %363 = vmatpush1.bf16.msra.mxu0 %v260
  %364 = vmatprep.subr.bf16.mxu0 0
  %365 = vmatpush1.bf16.msra.mxu0 %v261
  %366 = vmatprep.mubr.bf16.mxu0 %v97
  %367 = vmatmul.mubr.bf16.gmra.mrb[0].mxu0 %v96
  %v368 = vpop.f32.mrb[0].mxu0
  %v369 = vadd.f32 %v329, %v368
  %v370 = vpop.f32.mrb[0].mxu0
  %v371 = vpop.f32.mrb[0].mxu0
  %v372 = vpop.f32.mrb[0].mxu0
  %373 = vdwg.mxu0
  %374 = vst [vmem:[%s3] sm:$0xff] %v369
  // Predicated region
  $region14: #{_lambda_.9} parent=0 // pred_check
    _
  $region15: #{_lambda_.9} parent=0 // pred_check_branch
    %376 = sbr.rel (0) target = $region17
  $region16: #{_lambda_.9} parent=0 // pred_region
    _
  $region17: #{_lambda_.9} parent=0 // pred_fallthru
    _
  // Predicated region
  $region18: #{_lambda_.9} parent=0 // pred_check
    _
  $region19: #{_lambda_.9} parent=0 // pred_check_branch
    %378 = sbr.rel (0) target = $region21
  $region20: #{_lambda_.9} parent=0 // pred_region
    _
  $region21: #{_lambda_.9} parent=0 // pred_fallthru
    _

// kernel: _lambda_.8
$region0: #{_lambda_.8}
  #allocation0 [shape = 'u32[]', space=smem, size = 0x4, offset = 0x4, fixed_abs, tag = 'smem constant byte address 0x4 - core index']
  #allocation1 [shape = 'u32[144,128]{1,0:T(1,128)}', space=vmem, size = 0x12000, scoped, tag = 'internal scratch']
  %s0 = inlined_call_operand.vmem [shape: bf16[8,768], index: 0, kind: input, shape index: {}]
  %s1 = inlined_call_operand.vmem [shape: bf16[768,512], index: 1, kind: input, shape index: {}]
  %s2 = inlined_call_operand.vmem [shape: f32[1,512], index: 2, kind: input, shape index: {}]
  %s3 = inlined_call_operand.vmem [shape: bf16[8,512], index: 3, kind: output, shape index: {}]
  %s4 = sld [smem:[#allocation0]]
  $region22: #{_lambda_.8} parent=0
    _
  %s6 = ssub.s32 1, %s4
  %s7 = scalar_select 0, %s6, %s4
  // Predicated region
  $region2: #{_lambda_.8} parent=0 // pred_check
    _
  $region3: #{_lambda_.8} parent=0 // pred_check_branch
    %9 = sbr.rel (0) target = $region5
  $region4: #{_lambda_.8} parent=0 // pred_region
    _
  $region5: #{_lambda_.8} parent=0 // pred_fallthru
    _
  // Predicated region
  $region6: #{_lambda_.8} parent=0 // pred_check
    _
  $region7: #{_lambda_.8} parent=0 // pred_check_branch
    %11 = sbr.rel (0) target = $region9
  $region8: #{_lambda_.8} parent=0 // pred_region
    _
  $region9: #{_lambda_.8} parent=0 // pred_fallthru
    _
  // Predicated region
  $region10: #{_lambda_.8} parent=0 // pred_check
    _
  $region11: #{_lambda_.8} parent=0 // pred_check_branch
    %13 = sbr.rel (0) target = $region13
  $region12: #{_lambda_.8} parent=0 // pred_region
    _
  $region13: #{_lambda_.8} parent=0 // pred_fallthru
    _
  %v14 = vld [vmem:[%s0] sm:$0xff]
  %v15 = vld [vmem:[%s0 + $0x8] sm:$0xff]
  %v16 = vld [vmem:[%s0 + $0x10] sm:$0xff]
  %v17 = vld [vmem:[%s1] sm:$0xff]
  %v18 = vld [vmem:[%s1 + $0x8] sm:$0xff]
  %v19 = vld [vmem:[%s1 + $0x10] sm:$0xff]
  %v20 = vld [vmem:[%s1 + $0x18] sm:$0xff]
  %v21 = vld [vmem:[%s1 + $0x20] sm:$0xff]
  %v22 = vld [vmem:[%s1 + $0x28] sm:$0xff]
  %v23 = vld [vmem:[%s1 + $0x30] sm:$0xff]
  %v24 = vld [vmem:[%s1 + $0x38] sm:$0xff]
  %v25 = vld [vmem:[%s1 + $0x40] sm:$0xff]
  %v26 = vld [vmem:[%s1 + $0x48] sm:$0xff]
  %v27 = vld [vmem:[%s1 + $0x50] sm:$0xff]
  %v28 = vld [vmem:[%s1 + $0x58] sm:$0xff]
  %v29 = vld [vmem:[%s1 + $0x60] sm:$0xff]
  %v30 = vld [vmem:[%s1 + $0x68] sm:$0xff]
  %v31 = vld [vmem:[%s1 + $0x70] sm:$0xff]
  %v32 = vld [vmem:[%s1 + $0x78] sm:$0xff]
  %v33 = vld [vmem:[%s1 + $0x80] sm:$0xff]
  %v34 = vld [vmem:[%s1 + $0x88] sm:$0xff]
  %v35 = vld [vmem:[%s1 + $0x90] sm:$0xff]
  %v36 = vld [vmem:[%s1 + $0x98] sm:$0xff]
  %v37 = vld [vmem:[%s1 + $0xa0] sm:$0xff]
  %v38 = vld [vmem:[%s1 + $0xa8] sm:$0xff]
  %v39 = vld [vmem:[%s1 + $0xb0] sm:$0xff]
  %v40 = vld [vmem:[%s1 + $0xb8] sm:$0xff]
  %v41 = vld [vmem:[%s1 + $0xc0] sm:$0xff]
  %v42 = vld [vmem:[%s1 + $0xc8] sm:$0xff]
  %v43 = vld [vmem:[%s1 + $0xd0] sm:$0xff]
  %v44 = vld [vmem:[%s1 + $0xd8] sm:$0xff]
  %v45 = vld [vmem:[%s1 + $0xe0] sm:$0xff]
  %v46 = vld [vmem:[%s1 + $0xe8] sm:$0xff]
  %v47 = vld [vmem:[%s1 + $0xf0] sm:$0xff]
  %v48 = vld [vmem:[%s1 + $0xf8] sm:$0xff]
  %v49 = vld [vmem:[%s1 + $0x100] sm:$0xff]
  %v50 = vld [vmem:[%s1 + $0x108] sm:$0xff]
  %v51 = vld [vmem:[%s1 + $0x110] sm:$0xff]
  %v52 = vld [vmem:[%s1 + $0x118] sm:$0xff]
  %v53 = vld [vmem:[%s1 + $0x120] sm:$0xff]
  %v54 = vld [vmem:[%s1 + $0x128] sm:$0xff]
  %v55 = vld [vmem:[%s1 + $0x130] sm:$0xff]
  %v56 = vld [vmem:[%s1 + $0x138] sm:$0xff]
  %v57 = vld [vmem:[%s1 + $0x140] sm:$0xff]
  %v58 = vld [vmem:[%s1 + $0x148] sm:$0xff]
  %v59 = vld [vmem:[%s1 + $0x150] sm:$0xff]
  %v60 = vld [vmem:[%s1 + $0x158] sm:$0xff]
  %v61 = vld [vmem:[%s1 + $0x160] sm:$0xff]
  %v62 = vld [vmem:[%s1 + $0x168] sm:$0xff]
  %v63 = vld [vmem:[%s1 + $0x170] sm:$0xff]
  %v64 = vld [vmem:[%s1 + $0x178] sm:$0xff]
  %v65 = vld [vmem:[%s1 + $0x180] sm:$0xff]
  %v66 = vld [vmem:[%s1 + $0x188] sm:$0xff]
  %v67 = vld [vmem:[%s1 + $0x190] sm:$0xff]
  %v68 = vld [vmem:[%s1 + $0x198] sm:$0xff]
  %v69 = vld [vmem:[%s1 + $0x1a0] sm:$0xff]
  %v70 = vld [vmem:[%s1 + $0x1a8] sm:$0xff]
  %v71 = vld [vmem:[%s1 + $0x1b0] sm:$0xff]
  %v72 = vld [vmem:[%s1 + $0x1b8] sm:$0xff]
  %v73 = vld [vmem:[%s1 + $0x1c0] sm:$0xff]
  %v74 = vld [vmem:[%s1 + $0x1c8] sm:$0xff]
  %v75 = vld [vmem:[%s1 + $0x1d0] sm:$0xff]
  %v76 = vld [vmem:[%s1 + $0x1d8] sm:$0xff]
  %v77 = vld [vmem:[%s1 + $0x1e0] sm:$0xff]
  %v78 = vld [vmem:[%s1 + $0x1e8] sm:$0xff]
  %v79 = vld [vmem:[%s1 + $0x1f0] sm:$0xff]
  %v80 = vld [vmem:[%s1 + $0x1f8] sm:$0xff]
  %v81 = vld [vmem:[%s1 + $0x200] sm:$0xff]
  %v82 = vld [vmem:[%s1 + $0x208] sm:$0xff]
  %v83 = vld [vmem:[%s1 + $0x210] sm:$0xff]
  %v84 = vld [vmem:[%s1 + $0x218] sm:$0xff]
  %v85 = vld [vmem:[%s1 + $0x220] sm:$0xff]
  %v86 = vld [vmem:[%s1 + $0x228] sm:$0xff]
  %v87 = vld [vmem:[%s1 + $0x230] sm:$0xff]
  %v88 = vld [vmem:[%s1 + $0x238] sm:$0xff]
  %v89 = vld [vmem:[%s1 + $0x240] sm:$0xff]
  %v90 = vld [vmem:[%s1 + $0x248] sm:$0xff]
  %v91 = vld [vmem:[%s1 + $0x250] sm:$0xff]
  %v92 = vld [vmem:[%s1 + $0x258] sm:$0xff]
  %v93 = vld [vmem:[%s1 + $0x260] sm:$0xff]
  %v94 = vld [vmem:[%s1 + $0x268] sm:$0xff]
  %v95 = vld [vmem:[%s1 + $0x270] sm:$0xff]
  %v96 = vld [vmem:[%s1 + $0x278] sm:$0xff]
  %v97 = vld [vmem:[%s1 + $0x280] sm:$0xff]
  %v98 = vld [vmem:[%s1 + $0x288] sm:$0xff]
  %v99 = vld [vmem:[%s1 + $0x290] sm:$0xff]
  %v100 = vld [vmem:[%s1 + $0x298] sm:$0xff]
  %v101 = vld [vmem:[%s1 + $0x2a0] sm:$0xff]
  %v102 = vld [vmem:[%s1 + $0x2a8] sm:$0xff]
  %v103 = vld [vmem:[%s1 + $0x2b0] sm:$0xff]
  %v104 = vld [vmem:[%s1 + $0x2b8] sm:$0xff]
  %v105 = vld [vmem:[%s1 + $0x2c0] sm:$0xff]
  %v106 = vld [vmem:[%s1 + $0x2c8] sm:$0xff]
  %v107 = vld [vmem:[%s1 + $0x2d0] sm:$0xff]
  %v108 = vld [vmem:[%s1 + $0x2d8] sm:$0xff]
  %v109 = vld [vmem:[%s1 + $0x2e0] sm:$0xff]
  %v110 = vld [vmem:[%s1 + $0x2e8] sm:$0xff]
  %v111 = vld [vmem:[%s1 + $0x2f0] sm:$0xff]
  %v112 = vld [vmem:[%s1 + $0x2f8] sm:$0xff]
  %v113 = vld [vmem:[%s1 + $0x300] sm:$0xff]
  %v114 = vld [vmem:[%s1 + $0x308] sm:$0xff]
  %v115 = vld [vmem:[%s1 + $0x310] sm:$0xff]
  %v116 = vld [vmem:[%s1 + $0x318] sm:$0xff]
  %v117 = vld [vmem:[%s1 + $0x320] sm:$0xff]
  %v118 = vld [vmem:[%s1 + $0x328] sm:$0xff]
  %v119 = vld [vmem:[%s1 + $0x330] sm:$0xff]
  %v120 = vld [vmem:[%s1 + $0x338] sm:$0xff]
  %v121 = vld [vmem:[%s1 + $0x340] sm:$0xff]
  %v122 = vld [vmem:[%s1 + $0x348] sm:$0xff]
  %v123 = vld [vmem:[%s1 + $0x350] sm:$0xff]
  %v124 = vld [vmem:[%s1 + $0x358] sm:$0xff]
  %v125 = vld [vmem:[%s1 + $0x360] sm:$0xff]
  %v126 = vld [vmem:[%s1 + $0x368] sm:$0xff]
  %v127 = vld [vmem:[%s1 + $0x370] sm:$0xff]
  %v128 = vld [vmem:[%s1 + $0x378] sm:$0xff]
  %v129 = vld [vmem:[%s1 + $0x380] sm:$0xff]
  %v130 = vld [vmem:[%s1 + $0x388] sm:$0xff]
  %v131 = vld [vmem:[%s1 + $0x390] sm:$0xff]
  %v132 = vld [vmem:[%s1 + $0x398] sm:$0xff]
  %v133 = vld [vmem:[%s1 + $0x3a0] sm:$0xff]
  %v134 = vld [vmem:[%s1 + $0x3a8] sm:$0xff]
  %v135 = vld [vmem:[%s1 + $0x3b0] sm:$0xff]
  %v136 = vld [vmem:[%s1 + $0x3b8] sm:$0xff]
  %v137 = vld [vmem:[%s1 + $0x3c0] sm:$0xff]
  %v138 = vld [vmem:[%s1 + $0x3c8] sm:$0xff]
  %v139 = vld [vmem:[%s1 + $0x3d0] sm:$0xff]
  %v140 = vld [vmem:[%s1 + $0x3d8] sm:$0xff]
  %v141 = vld [vmem:[%s1 + $0x3e0] sm:$0xff]
  %v142 = vld [vmem:[%s1 + $0x3e8] sm:$0xff]
  %v143 = vld [vmem:[%s1 + $0x3f0] sm:$0xff]
  %v144 = vld [vmem:[%s1 + $0x3f8] sm:$0xff]
  %v145 = vld [vmem:[%s1 + $0x400] sm:$0xff]
  %v146 = vld [vmem:[%s1 + $0x408] sm:$0xff]
  %v147 = vld [vmem:[%s1 + $0x410] sm:$0xff]
  %v148 = vld [vmem:[%s1 + $0x418] sm:$0xff]
  %v149 = vld [vmem:[%s1 + $0x420] sm:$0xff]
  %v150 = vld [vmem:[%s1 + $0x428] sm:$0xff]
  %v151 = vld [vmem:[%s1 + $0x430] sm:$0xff]
  %v152 = vld [vmem:[%s1 + $0x438] sm:$0xff]
  %v153 = vld [vmem:[%s1 + $0x440] sm:$0xff]
  %v154 = vld [vmem:[%s1 + $0x448] sm:$0xff]
  %v155 = vld [vmem:[%s1 + $0x450] sm:$0xff]
  %v156 = vld [vmem:[%s1 + $0x458] sm:$0xff]
  %v157 = vld [vmem:[%s1 + $0x460] sm:$0xff]
  %v158 = vld [vmem:[%s1 + $0x468] sm:$0xff]
  %v159 = vld [vmem:[%s1 + $0x470] sm:$0xff]
  %v160 = vld [vmem:[%s1 + $0x478] sm:$0xff]
  %v161 = vld [vmem:[%s1 + $0x480] sm:$0xff]
  %v162 = vld [vmem:[%s1 + $0x488] sm:$0xff]
  %v163 = vld [vmem:[%s1 + $0x490] sm:$0xff]
  %v164 = vld [vmem:[%s1 + $0x498] sm:$0xff]
  %v165 = vld [vmem:[%s1 + $0x4a0] sm:$0xff]
  %v166 = vld [vmem:[%s1 + $0x4a8] sm:$0xff]
  %v167 = vld [vmem:[%s1 + $0x4b0] sm:$0xff]
  %v168 = vld [vmem:[%s1 + $0x4b8] sm:$0xff]
  %v169 = vld [vmem:[%s1 + $0x4c0] sm:$0xff]
  %v170 = vld [vmem:[%s1 + $0x4c8] sm:$0xff]
  %v171 = vld [vmem:[%s1 + $0x4d0] sm:$0xff]
  %v172 = vld [vmem:[%s1 + $0x4d8] sm:$0xff]
  %v173 = vld [vmem:[%s1 + $0x4e0] sm:$0xff]
  %v174 = vld [vmem:[%s1 + $0x4e8] sm:$0xff]
  %v175 = vld [vmem:[%s1 + $0x4f0] sm:$0xff]
  %v176 = vld [vmem:[%s1 + $0x4f8] sm:$0xff]
  %v177 = vld [vmem:[%s1 + $0x500] sm:$0xff]
  %v178 = vld [vmem:[%s1 + $0x508] sm:$0xff]
  %v179 = vld [vmem:[%s1 + $0x510] sm:$0xff]
  %v180 = vld [vmem:[%s1 + $0x518] sm:$0xff]
  %v181 = vld [vmem:[%s1 + $0x520] sm:$0xff]
  %v182 = vld [vmem:[%s1 + $0x528] sm:$0xff]
  %v183 = vld [vmem:[%s1 + $0x530] sm:$0xff]
  %v184 = vld [vmem:[%s1 + $0x538] sm:$0xff]
  %v185 = vld [vmem:[%s1 + $0x540] sm:$0xff]
  %v186 = vld [vmem:[%s1 + $0x548] sm:$0xff]
  %v187 = vld [vmem:[%s1 + $0x550] sm:$0xff]
  %v188 = vld [vmem:[%s1 + $0x558] sm:$0xff]
  %v189 = vld [vmem:[%s1 + $0x560] sm:$0xff]
  %v190 = vld [vmem:[%s1 + $0x568] sm:$0xff]
  %v191 = vld [vmem:[%s1 + $0x570] sm:$0xff]
  %v192 = vld [vmem:[%s1 + $0x578] sm:$0xff]
  %v193 = vld [vmem:[%s1 + $0x580] sm:$0xff]
  %v194 = vld [vmem:[%s1 + $0x588] sm:$0xff]
  %v195 = vld [vmem:[%s1 + $0x590] sm:$0xff]
  %v196 = vld [vmem:[%s1 + $0x598] sm:$0xff]
  %v197 = vld [vmem:[%s1 + $0x5a0] sm:$0xff]
  %v198 = vld [vmem:[%s1 + $0x5a8] sm:$0xff]
  %v199 = vld [vmem:[%s1 + $0x5b0] sm:$0xff]
  %v200 = vld [vmem:[%s1 + $0x5b8] sm:$0xff]
  %v201 = vld [vmem:[%s1 + $0x5c0] sm:$0xff]
  %v202 = vld [vmem:[%s1 + $0x5c8] sm:$0xff]
  %v203 = vld [vmem:[%s1 + $0x5d0] sm:$0xff]
  %v204 = vld [vmem:[%s1 + $0x5d8] sm:$0xff]
  %v205 = vld [vmem:[%s1 + $0x5e0] sm:$0xff]
  %v206 = vld [vmem:[%s1 + $0x5e8] sm:$0xff]
  %v207 = vld [vmem:[%s1 + $0x5f0] sm:$0xff]
  %v208 = vld [vmem:[%s1 + $0x5f8] sm:$0xff]
  %v209 = vld [vmem:[%s2] sm:$0xf]
  %v211 = vlaneseq
  %v212 = vshrl.u32 %v211, 7
  %v213 = vsub.s32 0, %v212
  %v214 = vrot.slane %v209, %v213
  %v215 = vlaneseq
  %v216 = vshrl.u32 %v215, 7
  %v217 = vsub.s32 1, %v216
  %v218 = vrot.slane %v209, %v217
  %v219 = vlaneseq
  %v220 = vshrl.u32 %v219, 7
  %v221 = vsub.s32 2, %v220
  %v222 = vrot.slane %v209, %v221
  %v223 = vlaneseq
  %v224 = vshrl.u32 %v223, 7
  %v225 = vsub.s32 3, %v224
  %v226 = vrot.slane %v209, %v225
  %v234 = vunpack.c.l.b16 %v14
  %v235 = vunpack.c.h.b16 %v14
  %v236 = vunpack.c.l.b16 %v15
  %v237 = vunpack.c.h.b16 %v15
  %v238 = vunpack.c.l.b16 %v16
  %v239 = vunpack.c.h.b16 %v16
  %v240 = vpack.c.b16 %v234, %v234
  %v241 = vpack.c.b16 %v235, %v235
  %v242 = vpack.c.b16 %v236, %v236
  %v243 = vpack.c.b16 %v237, %v237
  %v244 = vpack.c.b16 %v238, %v238
  %v245 = vpack.c.b16 %v239, %v239
  %v444 = vunpack.c.l.b16 %v17
  %v445 = vunpack.c.h.b16 %v17
  %v446 = vunpack.c.l.b16 %v18
  %v447 = vunpack.c.h.b16 %v18
  %v448 = vunpack.c.l.b16 %v19
  %v449 = vunpack.c.h.b16 %v19
  %v450 = vunpack.c.l.b16 %v20
  %v451 = vunpack.c.h.b16 %v20
  %v452 = vunpack.c.l.b16 %v21
  %v453 = vunpack.c.h.b16 %v21
  %v454 = vunpack.c.l.b16 %v22
  %v455 = vunpack.c.h.b16 %v22
  %v456 = vunpack.c.l.b16 %v23
  %v457 = vunpack.c.h.b16 %v23
  %v458 = vunpack.c.l.b16 %v24
  %v459 = vunpack.c.h.b16 %v24
  %v460 = vunpack.c.l.b16 %v25
  %v461 = vunpack.c.h.b16 %v25
  %v462 = vunpack.c.l.b16 %v26
  %v463 = vunpack.c.h.b16 %v26
  %v464 = vunpack.c.l.b16 %v27
  %v465 = vunpack.c.h.b16 %v27
  %v466 = vunpack.c.l.b16 %v28
  %v467 = vunpack.c.h.b16 %v28
  %v468 = vunpack.c.l.b16 %v29
  %v469 = vunpack.c.h.b16 %v29
  %v470 = vunpack.c.l.b16 %v30
  %v471 = vunpack.c.h.b16 %v30
  %v472 = vunpack.c.l.b16 %v31
  %v473 = vunpack.c.h.b16 %v31
  %v474 = vunpack.c.l.b16 %v32
  %v475 = vunpack.c.h.b16 %v32
  %v476 = vunpack.c.l.b16 %v33
  %v477 = vunpack.c.h.b16 %v33
  %v478 = vunpack.c.l.b16 %v34
  %v479 = vunpack.c.h.b16 %v34
  %v480 = vunpack.c.l.b16 %v35
  %v481 = vunpack.c.h.b16 %v35
  %v482 = vunpack.c.l.b16 %v36
  %v483 = vunpack.c.h.b16 %v36
  %v484 = vunpack.c.l.b16 %v37
  %v485 = vunpack.c.h.b16 %v37
  %v486 = vunpack.c.l.b16 %v38
  %v487 = vunpack.c.h.b16 %v38
  %v488 = vunpack.c.l.b16 %v39
  %v489 = vunpack.c.h.b16 %v39
  %v490 = vunpack.c.l.b16 %v40
  %v491 = vunpack.c.h.b16 %v40
  %v492 = vunpack.c.l.b16 %v41
  %v493 = vunpack.c.h.b16 %v41
  %v494 = vunpack.c.l.b16 %v42
  %v495 = vunpack.c.h.b16 %v42
  %v496 = vunpack.c.l.b16 %v43
  %v497 = vunpack.c.h.b16 %v43
  %v498 = vunpack.c.l.b16 %v44
  %v499 = vunpack.c.h.b16 %v44
  %v500 = vunpack.c.l.b16 %v45
  %v501 = vunpack.c.h.b16 %v45
  %v502 = vunpack.c.l.b16 %v46
  %v503 = vunpack.c.h.b16 %v46
  %v504 = vunpack.c.l.b16 %v47
  %v505 = vunpack.c.h.b16 %v47
  %v506 = vunpack.c.l.b16 %v48
  %v507 = vunpack.c.h.b16 %v48
  %v508 = vunpack.c.l.b16 %v49
  %v509 = vunpack.c.h.b16 %v49
  %v510 = vunpack.c.l.b16 %v50
  %v511 = vunpack.c.h.b16 %v50
  %v512 = vunpack.c.l.b16 %v51
  %v513 = vunpack.c.h.b16 %v51
  %v514 = vunpack.c.l.b16 %v52
  %v515 = vunpack.c.h.b16 %v52
  %v516 = vunpack.c.l.b16 %v53
  %v517 = vunpack.c.h.b16 %v53
  %v518 = vunpack.c.l.b16 %v54
  %v519 = vunpack.c.h.b16 %v54
  %v520 = vunpack.c.l.b16 %v55
  %v521 = vunpack.c.h.b16 %v55
  %v522 = vunpack.c.l.b16 %v56
  %v523 = vunpack.c.h.b16 %v56
  %v524 = vunpack.c.l.b16 %v57
  %v525 = vunpack.c.h.b16 %v57
  %v526 = vunpack.c.l.b16 %v58
  %v527 = vunpack.c.h.b16 %v58
  %v528 = vunpack.c.l.b16 %v59
  %v529 = vunpack.c.h.b16 %v59
  %v530 = vunpack.c.l.b16 %v60
  %v531 = vunpack.c.h.b16 %v60
  %v532 = vunpack.c.l.b16 %v61
  %v533 = vunpack.c.h.b16 %v61
  %v534 = vunpack.c.l.b16 %v62
  %v535 = vunpack.c.h.b16 %v62
  %v536 = vunpack.c.l.b16 %v63
  %v537 = vunpack.c.h.b16 %v63
  %v538 = vunpack.c.l.b16 %v64
  %v539 = vunpack.c.h.b16 %v64
  %v540 = vunpack.c.l.b16 %v65
  %v541 = vunpack.c.h.b16 %v65
  %v542 = vunpack.c.l.b16 %v66
  %v543 = vunpack.c.h.b16 %v66
  %v544 = vunpack.c.l.b16 %v67
  %v545 = vunpack.c.h.b16 %v67
  %v546 = vunpack.c.l.b16 %v68
  %v547 = vunpack.c.h.b16 %v68
  %v548 = vunpack.c.l.b16 %v69
  %v549 = vunpack.c.h.b16 %v69
  %v550 = vunpack.c.l.b16 %v70
  %v551 = vunpack.c.h.b16 %v70
  %v552 = vunpack.c.l.b16 %v71
  %v553 = vunpack.c.h.b16 %v71
  %v554 = vunpack.c.l.b16 %v72
  %v555 = vunpack.c.h.b16 %v72
  %v556 = vunpack.c.l.b16 %v73
  %v557 = vunpack.c.h.b16 %v73
  %v558 = vunpack.c.l.b16 %v74
  %v559 = vunpack.c.h.b16 %v74
  %v560 = vunpack.c.l.b16 %v75
  %v561 = vunpack.c.h.b16 %v75
  %v562 = vunpack.c.l.b16 %v76
  %v563 = vunpack.c.h.b16 %v76
  %v564 = vunpack.c.l.b16 %v77
  %v565 = vunpack.c.h.b16 %v77
  %v566 = vunpack.c.l.b16 %v78
  %v567 = vunpack.c.h.b16 %v78
  %v568 = vunpack.c.l.b16 %v79
  %v569 = vunpack.c.h.b16 %v79
  %v570 = vunpack.c.l.b16 %v80
  %v571 = vunpack.c.h.b16 %v80
  %v572 = vunpack.c.l.b16 %v81
  %v573 = vunpack.c.h.b16 %v81
  %v574 = vunpack.c.l.b16 %v82
  %v575 = vunpack.c.h.b16 %v82
  %v576 = vunpack.c.l.b16 %v83
  %v577 = vunpack.c.h.b16 %v83
  %v578 = vunpack.c.l.b16 %v84
  %v579 = vunpack.c.h.b16 %v84
  %v580 = vunpack.c.l.b16 %v85
  %v581 = vunpack.c.h.b16 %v85
  %v582 = vunpack.c.l.b16 %v86
  %v583 = vunpack.c.h.b16 %v86
  %v584 = vunpack.c.l.b16 %v87
  %v585 = vunpack.c.h.b16 %v87
  %v586 = vunpack.c.l.b16 %v88
  %v587 = vunpack.c.h.b16 %v88
  %v588 = vunpack.c.l.b16 %v89
  %v589 = vunpack.c.h.b16 %v89
  %v590 = vunpack.c.l.b16 %v90
  %v591 = vunpack.c.h.b16 %v90
  %v592 = vunpack.c.l.b16 %v91
  %v593 = vunpack.c.h.b16 %v91
  %v594 = vunpack.c.l.b16 %v92
  %v595 = vunpack.c.h.b16 %v92
  %v596 = vunpack.c.l.b16 %v93
  %v597 = vunpack.c.h.b16 %v93
  %v598 = vunpack.c.l.b16 %v94
  %v599 = vunpack.c.h.b16 %v94
  %v600 = vunpack.c.l.b16 %v95
  %v601 = vunpack.c.h.b16 %v95
  %v602 = vunpack.c.l.b16 %v96
  %v603 = vunpack.c.h.b16 %v96
  %v604 = vunpack.c.l.b16 %v97
  %v605 = vunpack.c.h.b16 %v97
  %v606 = vunpack.c.l.b16 %v98
  %v607 = vunpack.c.h.b16 %v98
  %v608 = vunpack.c.l.b16 %v99
  %v609 = vunpack.c.h.b16 %v99
  %v610 = vunpack.c.l.b16 %v100
  %v611 = vunpack.c.h.b16 %v100
  %v612 = vunpack.c.l.b16 %v101
  %v613 = vunpack.c.h.b16 %v101
  %v614 = vunpack.c.l.b16 %v102
  %v615 = vunpack.c.h.b16 %v102
  %v616 = vunpack.c.l.b16 %v103
  %v617 = vunpack.c.h.b16 %v103
  %v618 = vunpack.c.l.b16 %v104
  %v619 = vunpack.c.h.b16 %v104
  %v620 = vunpack.c.l.b16 %v105
  %v621 = vunpack.c.h.b16 %v105
  %v622 = vunpack.c.l.b16 %v106
  %v623 = vunpack.c.h.b16 %v106
  %v624 = vunpack.c.l.b16 %v107
  %v625 = vunpack.c.h.b16 %v107
  %v626 = vunpack.c.l.b16 %v108
  %v627 = vunpack.c.h.b16 %v108
  %v628 = vunpack.c.l.b16 %v109
  %v629 = vunpack.c.h.b16 %v109
  %v630 = vunpack.c.l.b16 %v110
  %v631 = vunpack.c.h.b16 %v110
  %v632 = vunpack.c.l.b16 %v111
  %v633 = vunpack.c.h.b16 %v111
  %v634 = vunpack.c.l.b16 %v112
  %v635 = vunpack.c.h.b16 %v112
  %v636 = vunpack.c.l.b16 %v113
  %v637 = vunpack.c.h.b16 %v113
  %v638 = vunpack.c.l.b16 %v114
  %v639 = vunpack.c.h.b16 %v114
  %v640 = vunpack.c.l.b16 %v115
  %v641 = vunpack.c.h.b16 %v115
  %v642 = vunpack.c.l.b16 %v116
  %v643 = vunpack.c.h.b16 %v116
  %v644 = vunpack.c.l.b16 %v117
  %v645 = vunpack.c.h.b16 %v117
  %v646 = vunpack.c.l.b16 %v118
  %v647 = vunpack.c.h.b16 %v118
  %v648 = vunpack.c.l.b16 %v119
  %v649 = vunpack.c.h.b16 %v119
  %v650 = vunpack.c.l.b16 %v120
  %v651 = vunpack.c.h.b16 %v120
  %v652 = vunpack.c.l.b16 %v121
  %v653 = vunpack.c.h.b16 %v121
  %v654 = vunpack.c.l.b16 %v122
  %v655 = vunpack.c.h.b16 %v122
  %v656 = vunpack.c.l.b16 %v123
  %v657 = vunpack.c.h.b16 %v123
  %v658 = vunpack.c.l.b16 %v124
  %v659 = vunpack.c.h.b16 %v124
  %v660 = vunpack.c.l.b16 %v125
  %v661 = vunpack.c.h.b16 %v125
  %v662 = vunpack.c.l.b16 %v126
  %v663 = vunpack.c.h.b16 %v126
  %v664 = vunpack.c.l.b16 %v127
  %v665 = vunpack.c.h.b16 %v127
  %v666 = vunpack.c.l.b16 %v128
  %v667 = vunpack.c.h.b16 %v128
  %v668 = vunpack.c.l.b16 %v129
  %v669 = vunpack.c.h.b16 %v129
  %v670 = vunpack.c.l.b16 %v130
  %v671 = vunpack.c.h.b16 %v130
  %v672 = vunpack.c.l.b16 %v131
  %v673 = vunpack.c.h.b16 %v131
  %v674 = vunpack.c.l.b16 %v132
  %v675 = vunpack.c.h.b16 %v132
  %v676 = vunpack.c.l.b16 %v133
  %v677 = vunpack.c.h.b16 %v133
  %v678 = vunpack.c.l.b16 %v134
  %v679 = vunpack.c.h.b16 %v134
  %v680 = vunpack.c.l.b16 %v135
  %v681 = vunpack.c.h.b16 %v135
  %v682 = vunpack.c.l.b16 %v136
  %v683 = vunpack.c.h.b16 %v136
  %v684 = vunpack.c.l.b16 %v137
  %v685 = vunpack.c.h.b16 %v137
  %v686 = vunpack.c.l.b16 %v138
  %v687 = vunpack.c.h.b16 %v138
  %v688 = vunpack.c.l.b16 %v139
  %v689 = vunpack.c.h.b16 %v139
  %v690 = vunpack.c.l.b16 %v140
  %v691 = vunpack.c.h.b16 %v140
  %v692 = vunpack.c.l.b16 %v141
  %v693 = vunpack.c.h.b16 %v141
  %v694 = vunpack.c.l.b16 %v142
  %v695 = vunpack.c.h.b16 %v142
  %v696 = vunpack.c.l.b16 %v143
  %v697 = vunpack.c.h.b16 %v143
  %v698 = vunpack.c.l.b16 %v144
  %v699 = vunpack.c.h.b16 %v144
  %v700 = vunpack.c.l.b16 %v145
  %v701 = vunpack.c.h.b16 %v145
  %v702 = vunpack.c.l.b16 %v146
  %v703 = vunpack.c.h.b16 %v146
  %v704 = vunpack.c.l.b16 %v147
  %v705 = vunpack.c.h.b16 %v147
  %v706 = vunpack.c.l.b16 %v148
  %v707 = vunpack.c.h.b16 %v148
  %v708 = vunpack.c.l.b16 %v149
  %v709 = vunpack.c.h.b16 %v149
  %v710 = vunpack.c.l.b16 %v150
  %v711 = vunpack.c.h.b16 %v150
  %v712 = vunpack.c.l.b16 %v151
  %v713 = vunpack.c.h.b16 %v151
  %v714 = vunpack.c.l.b16 %v152
  %v715 = vunpack.c.h.b16 %v152
  %v716 = vunpack.c.l.b16 %v153
  %v717 = vunpack.c.h.b16 %v153
  %v718 = vunpack.c.l.b16 %v154
  %v719 = vunpack.c.h.b16 %v154
  %v720 = vunpack.c.l.b16 %v155
  %v721 = vunpack.c.h.b16 %v155
  %v722 = vunpack.c.l.b16 %v156
  %v723 = vunpack.c.h.b16 %v156
  %v724 = vunpack.c.l.b16 %v157
  %v725 = vunpack.c.h.b16 %v157
  %v726 = vunpack.c.l.b16 %v158
  %v727 = vunpack.c.h.b16 %v158
  %v728 = vunpack.c.l.b16 %v159
  %v729 = vunpack.c.h.b16 %v159
  %v730 = vunpack.c.l.b16 %v160
  %v731 = vunpack.c.h.b16 %v160
  %v732 = vunpack.c.l.b16 %v161
  %v733 = vunpack.c.h.b16 %v161
  %v734 = vunpack.c.l.b16 %v162
  %v735 = vunpack.c.h.b16 %v162
  %v736 = vunpack.c.l.b16 %v163
  %v737 = vunpack.c.h.b16 %v163
  %v738 = vunpack.c.l.b16 %v164
  %v739 = vunpack.c.h.b16 %v164
  %v740 = vunpack.c.l.b16 %v165
  %v741 = vunpack.c.h.b16 %v165
  %v742 = vunpack.c.l.b16 %v166
  %v743 = vunpack.c.h.b16 %v166
  %v744 = vunpack.c.l.b16 %v167
  %v745 = vunpack.c.h.b16 %v167
  %v746 = vunpack.c.l.b16 %v168
  %v747 = vunpack.c.h.b16 %v168
  %v748 = vunpack.c.l.b16 %v169
  %v749 = vunpack.c.h.b16 %v169
  %v750 = vunpack.c.l.b16 %v170
  %v751 = vunpack.c.h.b16 %v170
  %v752 = vunpack.c.l.b16 %v171
  %v753 = vunpack.c.h.b16 %v171
  %v754 = vunpack.c.l.b16 %v172
  %v755 = vunpack.c.h.b16 %v172
  %v756 = vunpack.c.l.b16 %v173
  %v757 = vunpack.c.h.b16 %v173
  %v758 = vunpack.c.l.b16 %v174
  %v759 = vunpack.c.h.b16 %v174
  %v760 = vunpack.c.l.b16 %v175
  %v761 = vunpack.c.h.b16 %v175
  %v762 = vunpack.c.l.b16 %v176
  %v763 = vunpack.c.h.b16 %v176
  %v764 = vunpack.c.l.b16 %v177
  %v765 = vunpack.c.h.b16 %v177
  %v766 = vunpack.c.l.b16 %v178
  %v767 = vunpack.c.h.b16 %v178
  %v768 = vunpack.c.l.b16 %v179
  %v769 = vunpack.c.h.b16 %v179
  %v770 = vunpack.c.l.b16 %v180
  %v771 = vunpack.c.h.b16 %v180
  %v772 = vunpack.c.l.b16 %v181
  %v773 = vunpack.c.h.b16 %v181
  %v774 = vunpack.c.l.b16 %v182
  %v775 = vunpack.c.h.b16 %v182
  %v776 = vunpack.c.l.b16 %v183
  %v777 = vunpack.c.h.b16 %v183
  %v778 = vunpack.c.l.b16 %v184
  %v779 = vunpack.c.h.b16 %v184
  %v780 = vunpack.c.l.b16 %v185
  %v781 = vunpack.c.h.b16 %v185
  %v782 = vunpack.c.l.b16 %v186
  %v783 = vunpack.c.h.b16 %v186
  %v784 = vunpack.c.l.b16 %v187
  %v785 = vunpack.c.h.b16 %v187
  %v786 = vunpack.c.l.b16 %v188
  %v787 = vunpack.c.h.b16 %v188
  %v788 = vunpack.c.l.b16 %v189
  %v789 = vunpack.c.h.b16 %v189
  %v790 = vunpack.c.l.b16 %v190
  %v791 = vunpack.c.h.b16 %v190
  %v792 = vunpack.c.l.b16 %v191
  %v793 = vunpack.c.h.b16 %v191
  %v794 = vunpack.c.l.b16 %v192
  %v795 = vunpack.c.h.b16 %v192
  %v796 = vunpack.c.l.b16 %v193
  %v797 = vunpack.c.h.b16 %v193
  %v798 = vunpack.c.l.b16 %v194
  %v799 = vunpack.c.h.b16 %v194
  %v800 = vunpack.c.l.b16 %v195
  %v801 = vunpack.c.h.b16 %v195
  %v802 = vunpack.c.l.b16 %v196
  %v803 = vunpack.c.h.b16 %v196
  %v804 = vunpack.c.l.b16 %v197
  %v805 = vunpack.c.h.b16 %v197
  %v806 = vunpack.c.l.b16 %v198
  %v807 = vunpack.c.h.b16 %v198
  %v808 = vunpack.c.l.b16 %v199
  %v809 = vunpack.c.h.b16 %v199
  %v810 = vunpack.c.l.b16 %v200
  %v811 = vunpack.c.h.b16 %v200
  %v812 = vunpack.c.l.b16 %v201
  %v813 = vunpack.c.h.b16 %v201
  %v814 = vunpack.c.l.b16 %v202
  %v815 = vunpack.c.h.b16 %v202
  %v816 = vunpack.c.l.b16 %v203
  %v817 = vunpack.c.h.b16 %v203
  %v818 = vunpack.c.l.b16 %v204
  %v819 = vunpack.c.h.b16 %v204
  %v820 = vunpack.c.l.b16 %v205
  %v821 = vunpack.c.h.b16 %v205
  %v822 = vunpack.c.l.b16 %v206
  %v823 = vunpack.c.h.b16 %v206
  %v824 = vunpack.c.l.b16 %v207
  %v825 = vunpack.c.h.b16 %v207
  %v826 = vunpack.c.l.b16 %v208
  %v827 = vunpack.c.h.b16 %v208
  %v828 = vpack.c.b16 %v448, %v444
  %v829 = vpack.c.b16 %v449, %v445
  %v830 = vpack.c.b16 %v450, %v446
  %v831 = vpack.c.b16 %v451, %v447
  %v832 = vpack.c.b16 %v456, %v452
  %v833 = vpack.c.b16 %v457, %v453
  %v834 = vpack.c.b16 %v458, %v454
  %v835 = vpack.c.b16 %v459, %v455
  %v836 = vpack.c.b16 %v464, %v460
  %v837 = vpack.c.b16 %v465, %v461
  %v838 = vpack.c.b16 %v466, %v462
  %v839 = vpack.c.b16 %v467, %v463
  %v840 = vpack.c.b16 %v472, %v468
  %v841 = vpack.c.b16 %v473, %v469
  %v842 = vpack.c.b16 %v474, %v470
  %v843 = vpack.c.b16 %v475, %v471
  %v844 = vpack.c.b16 %v480, %v476
  %v845 = vpack.c.b16 %v481, %v477
  %v846 = vpack.c.b16 %v482, %v478
  %v847 = vpack.c.b16 %v483, %v479
  %v848 = vpack.c.b16 %v488, %v484
  %v849 = vpack.c.b16 %v489, %v485
  %v850 = vpack.c.b16 %v490, %v486
  %v851 = vpack.c.b16 %v491, %v487
  %v852 = vpack.c.b16 %v496, %v492
  %v853 = vpack.c.b16 %v497, %v493
  %v854 = vpack.c.b16 %v498, %v494
  %v855 = vpack.c.b16 %v499, %v495
  %v856 = vpack.c.b16 %v504, %v500
  %v857 = vpack.c.b16 %v505, %v501
  %v858 = vpack.c.b16 %v506, %v502
  %v859 = vpack.c.b16 %v507, %v503
  %v860 = vpack.c.b16 %v512, %v508
  %v861 = vpack.c.b16 %v513, %v509
  %v862 = vpack.c.b16 %v514, %v510
  %v863 = vpack.c.b16 %v515, %v511
  %v864 = vpack.c.b16 %v520, %v516
  %v865 = vpack.c.b16 %v521, %v517
  %v866 = vpack.c.b16 %v522, %v518
  %v867 = vpack.c.b16 %v523, %v519
  %v868 = vpack.c.b16 %v528, %v524
  %v869 = vpack.c.b16 %v529, %v525
  %v870 = vpack.c.b16 %v530, %v526
  %v871 = vpack.c.b16 %v531, %v527
  %v872 = vpack.c.b16 %v536, %v532
  %v873 = vpack.c.b16 %v537, %v533
  %v874 = vpack.c.b16 %v538, %v534
  %v875 = vpack.c.b16 %v539, %v535
  %v876 = vpack.c.b16 %v544, %v540
  %v877 = vpack.c.b16 %v545, %v541
  %v878 = vpack.c.b16 %v546, %v542
  %v879 = vpack.c.b16 %v547, %v543
  %v880 = vpack.c.b16 %v552, %v548
  %v881 = vpack.c.b16 %v553, %v549
  %v882 = vpack.c.b16 %v554, %v550
  %v883 = vpack.c.b16 %v555, %v551
  %v884 = vpack.c.b16 %v560, %v556
  %v885 = vpack.c.b16 %v561, %v557
  %v886 = vpack.c.b16 %v562, %v558
  %v887 = vpack.c.b16 %v563, %v559
  %v888 = vpack.c.b16 %v568, %v564
  %v889 = vpack.c.b16 %v569, %v565
  %v890 = vpack.c.b16 %v570, %v566
  %v891 = vpack.c.b16 %v571, %v567
  %v892 = vpack.c.b16 %v576, %v572
  %v893 = vpack.c.b16 %v577, %v573
  %v894 = vpack.c.b16 %v578, %v574
  %v895 = vpack.c.b16 %v579, %v575
  %v896 = vpack.c.b16 %v584, %v580
  %v897 = vpack.c.b16 %v585, %v581
  %v898 = vpack.c.b16 %v586, %v582
  %v899 = vpack.c.b16 %v587, %v583
  %v900 = vpack.c.b16 %v592, %v588
  %v901 = vpack.c.b16 %v593, %v589
  %v902 = vpack.c.b16 %v594, %v590
  %v903 = vpack.c.b16 %v595, %v591
  %v904 = vpack.c.b16 %v600, %v596
  %v905 = vpack.c.b16 %v601, %v597
  %v906 = vpack.c.b16 %v602, %v598
  %v907 = vpack.c.b16 %v603, %v599
  %v908 = vpack.c.b16 %v608, %v604
  %v909 = vpack.c.b16 %v609, %v605
  %v910 = vpack.c.b16 %v610, %v606
  %v911 = vpack.c.b16 %v611, %v607
  %v912 = vpack.c.b16 %v616, %v612
  %v913 = vpack.c.b16 %v617, %v613
  %v914 = vpack.c.b16 %v618, %v614
  %v915 = vpack.c.b16 %v619, %v615
  %v916 = vpack.c.b16 %v624, %v620
  %v917 = vpack.c.b16 %v625, %v621
  %v918 = vpack.c.b16 %v626, %v622
  %v919 = vpack.c.b16 %v627, %v623
  %v920 = vpack.c.b16 %v632, %v628
  %v921 = vpack.c.b16 %v633, %v629
  %v922 = vpack.c.b16 %v634, %v630
  %v923 = vpack.c.b16 %v635, %v631
  %v924 = vpack.c.b16 %v640, %v636
  %v925 = vpack.c.b16 %v641, %v637
  %v926 = vpack.c.b16 %v642, %v638
  %v927 = vpack.c.b16 %v643, %v639
  %v928 = vpack.c.b16 %v648, %v644
  %v929 = vpack.c.b16 %v649, %v645
  %v930 = vpack.c.b16 %v650, %v646
  %v931 = vpack.c.b16 %v651, %v647
  %v932 = vpack.c.b16 %v656, %v652
  %v933 = vpack.c.b16 %v657, %v653
  %v934 = vpack.c.b16 %v658, %v654
  %v935 = vpack.c.b16 %v659, %v655
  %v936 = vpack.c.b16 %v664, %v660
  %v937 = vpack.c.b16 %v665, %v661
  %v938 = vpack.c.b16 %v666, %v662
  %v939 = vpack.c.b16 %v667, %v663
  %v940 = vpack.c.b16 %v672, %v668
  %v941 = vpack.c.b16 %v673, %v669
  %v942 = vpack.c.b16 %v674, %v670
  %v943 = vpack.c.b16 %v675, %v671
  %v944 = vpack.c.b16 %v680, %v676
  %v945 = vpack.c.b16 %v681, %v677
  %v946 = vpack.c.b16 %v682, %v678
  %v947 = vpack.c.b16 %v683, %v679
  %v948 = vpack.c.b16 %v688, %v684
  %v949 = vpack.c.b16 %v689, %v685
  %v950 = vpack.c.b16 %v690, %v686
  %v951 = vpack.c.b16 %v691, %v687
  %v952 = vpack.c.b16 %v696, %v692
  %v953 = vpack.c.b16 %v697, %v693
  %v954 = vpack.c.b16 %v698, %v694
  %v955 = vpack.c.b16 %v699, %v695
  %v956 = vpack.c.b16 %v704, %v700
  %v957 = vpack.c.b16 %v705, %v701
  %v958 = vpack.c.b16 %v706, %v702
  %v959 = vpack.c.b16 %v707, %v703
  %v960 = vpack.c.b16 %v712, %v708
  %v961 = vpack.c.b16 %v713, %v709
  %v962 = vpack.c.b16 %v714, %v710
  %v963 = vpack.c.b16 %v715, %v711
  %v964 = vpack.c.b16 %v720, %v716
  %v965 = vpack.c.b16 %v721, %v717
  %v966 = vpack.c.b16 %v722, %v718
  %v967 = vpack.c.b16 %v723, %v719
  %v968 = vpack.c.b16 %v728, %v724
  %v969 = vpack.c.b16 %v729, %v725
  %v970 = vpack.c.b16 %v730, %v726
  %v971 = vpack.c.b16 %v731, %v727
  %v972 = vpack.c.b16 %v736, %v732
  %v973 = vpack.c.b16 %v737, %v733
  %v974 = vpack.c.b16 %v738, %v734
  %v975 = vpack.c.b16 %v739, %v735
  %v976 = vpack.c.b16 %v744, %v740
  %v977 = vpack.c.b16 %v745, %v741
  %v978 = vpack.c.b16 %v746, %v742
  %v979 = vpack.c.b16 %v747, %v743
  %v980 = vpack.c.b16 %v752, %v748
  %v981 = vpack.c.b16 %v753, %v749
  %v982 = vpack.c.b16 %v754, %v750
  %v983 = vpack.c.b16 %v755, %v751
  %v984 = vpack.c.b16 %v760, %v756
  %v985 = vpack.c.b16 %v761, %v757
  %v986 = vpack.c.b16 %v762, %v758
  %v987 = vpack.c.b16 %v763, %v759
  %v988 = vpack.c.b16 %v768, %v764
  %v989 = vpack.c.b16 %v769, %v765
  %v990 = vpack.c.b16 %v770, %v766
  %v991 = vpack.c.b16 %v771, %v767
  %v992 = vpack.c.b16 %v776, %v772
  %v993 = vpack.c.b16 %v777, %v773
  %v994 = vpack.c.b16 %v778, %v774
  %v995 = vpack.c.b16 %v779, %v775
  %v996 = vpack.c.b16 %v784, %v780
  %v997 = vpack.c.b16 %v785, %v781
  %v998 = vpack.c.b16 %v786, %v782
  %v999 = vpack.c.b16 %v787, %v783
  %v1000 = vpack.c.b16 %v792, %v788
  %v1001 = vpack.c.b16 %v793, %v789
  %v1002 = vpack.c.b16 %v794, %v790
  %v1003 = vpack.c.b16 %v795, %v791
  %v1004 = vpack.c.b16 %v800, %v796
  %v1005 = vpack.c.b16 %v801, %v797
  %v1006 = vpack.c.b16 %v802, %v798
  %v1007 = vpack.c.b16 %v803, %v799
  %v1008 = vpack.c.b16 %v808, %v804
  %v1009 = vpack.c.b16 %v809, %v805
  %v1010 = vpack.c.b16 %v810, %v806
  %v1011 = vpack.c.b16 %v811, %v807
  %v1012 = vpack.c.b16 %v816, %v812
  %v1013 = vpack.c.b16 %v817, %v813
  %v1014 = vpack.c.b16 %v818, %v814
  %v1015 = vpack.c.b16 %v819, %v815
  %v1016 = vpack.c.b16 %v824, %v820
  %v1017 = vpack.c.b16 %v825, %v821
  %v1018 = vpack.c.b16 %v826, %v822
  %v1019 = vpack.c.b16 %v827, %v823
  %1212 = vmatprep.subr.bf16.mxu0 %v829
  %1213 = vmatpush1.bf16.msra.mxu0 %v828
  %1214 = vmatprep.subr.bf16.mxu0 %v833
  %1215 = vmatpush1.bf16.msra.mxu0 %v832
  %1216 = vmatprep.subr.bf16.mxu0 %v837
  %1217 = vmatpush1.bf16.msra.mxu0 %v836
  %1218 = vmatprep.subr.bf16.mxu0 %v841
  %1219 = vmatpush1.bf16.msra.mxu0 %v840
  %1220 = vmatprep.subr.bf16.mxu0 %v845
  %1221 = vmatpush1.bf16.msra.mxu0 %v844
  %1222 = vmatprep.subr.bf16.mxu0 %v849
  %1223 = vmatpush1.bf16.msra.mxu0 %v848
  %1224 = vmatprep.subr.bf16.mxu0 %v853
  %1225 = vmatpush1.bf16.msra.mxu0 %v852
  %1226 = vmatprep.subr.bf16.mxu0 %v857
  %1227 = vmatpush1.bf16.msra.mxu0 %v856
  %1228 = vmatprep.subr.bf16.mxu0 %v861
  %1229 = vmatpush1.bf16.msra.mxu0 %v860
  %1230 = vmatprep.subr.bf16.mxu0 %v865
  %1231 = vmatpush1.bf16.msra.mxu0 %v864
  %1232 = vmatprep.subr.bf16.mxu0 %v869
  %1233 = vmatpush1.bf16.msra.mxu0 %v868
  %1234 = vmatprep.subr.bf16.mxu0 %v873
  %1235 = vmatpush1.bf16.msra.mxu0 %v872
  %1236 = vmatprep.subr.bf16.mxu0 %v877
  %1237 = vmatpush1.bf16.msra.mxu0 %v876
  %1238 = vmatprep.subr.bf16.mxu0 %v881
  %1239 = vmatpush1.bf16.msra.mxu0 %v880
  %1240 = vmatprep.subr.bf16.mxu0 %v885
  %1241 = vmatpush1.bf16.msra.mxu0 %v884
  %1242 = vmatprep.subr.bf16.mxu0 %v889
  %1243 = vmatpush1.bf16.msra.mxu0 %v888
  %1244 = vmatprep.mubr.bf16.mxu0 %v241
  %1245 = vmatmul.mubr.bf16.gmra.mrb[0].mxu0 %v240
  %v1246 = vpop.f32.mrb[0].mxu0
  %v1247 = vadd.f32 %v214, %v1246
  %v1248 = vpop.f32.mrb[0].mxu0
  %v1249 = vadd.f32 %v218, %v1248
  %v1250 = vpop.f32.mrb[0].mxu0
  %v1251 = vpop.f32.mrb[0].mxu0
  %1252 = vdwg.mxu0
  %1253 = vmatprep.subr.bf16.mxu0 %v893
  %1254 = vmatpush1.bf16.msra.mxu0 %v892
  %1255 = vmatprep.subr.bf16.mxu0 %v897
  %1256 = vmatpush1.bf16.msra.mxu0 %v896
  %1257 = vmatprep.subr.bf16.mxu0 %v901
  %1258 = vmatpush1.bf16.msra.mxu0 %v900
  %1259 = vmatprep.subr.bf16.mxu0 %v905
  %1260 = vmatpush1.bf16.msra.mxu0 %v904
  %1261 = vmatprep.subr.bf16.mxu0 %v909
  %1262 = vmatpush1.bf16.msra.mxu0 %v908
  %1263 = vmatprep.subr.bf16.mxu0 %v913
  %1264 = vmatpush1.bf16.msra.mxu0 %v912
  %1265 = vmatprep.subr.bf16.mxu0 %v917
  %1266 = vmatpush1.bf16.msra.mxu0 %v916
  %1267 = vmatprep.subr.bf16.mxu0 %v921
  %1268 = vmatpush1.bf16.msra.mxu0 %v920
  %1269 = vmatprep.subr.bf16.mxu0 %v925
  %1270 = vmatpush1.bf16.msra.mxu0 %v924
  %1271 = vmatprep.subr.bf16.mxu0 %v929
  %1272 = vmatpush1.bf16.msra.mxu0 %v928
  %1273 = vmatprep.subr.bf16.mxu0 %v933
  %1274 = vmatpush1.bf16.msra.mxu0 %v932
  %1275 = vmatprep.subr.bf16.mxu0 %v937
  %1276 = vmatpush1.bf16.msra.mxu0 %v936
  %1277 = vmatprep.subr.bf16.mxu0 %v941
  %1278 = vmatpush1.bf16.msra.mxu0 %v940
  %1279 = vmatprep.subr.bf16.mxu0 %v945
  %1280 = vmatpush1.bf16.msra.mxu0 %v944
  %1281 = vmatprep.subr.bf16.mxu0 %v949
  %1282 = vmatpush1.bf16.msra.mxu0 %v948
  %1283 = vmatprep.subr.bf16.mxu0 %v953
  %1284 = vmatpush1.bf16.msra.mxu0 %v952
  %1285 = vmatprep.mubr.bf16.mxu0 %v243
  %1286 = vmatmul.mubr.bf16.gmra.mrb[0].mxu0 %v242
  %v1287 = vpop.f32.mrb[0].mxu0
  %v1288 = vadd.f32 %v1247, %v1287
  %v1289 = vpop.f32.mrb[0].mxu0
  %v1290 = vadd.f32 %v1249, %v1289
  %v1291 = vpop.f32.mrb[0].mxu0
  %v1292 = vpop.f32.mrb[0].mxu0
  %1293 = vdwg.mxu0
  %1294 = vmatprep.subr.bf16.mxu0 %v957
  %1295 = vmatpush1.bf16.msra.mxu0 %v956
  %1296 = vmatprep.subr.bf16.mxu0 %v961
  %1297 = vmatpush1.bf16.msra.mxu0 %v960
  %1298 = vmatprep.subr.bf16.mxu0 %v965
  %1299 = vmatpush1.bf16.msra.mxu0 %v964
  %1300 = vmatprep.subr.bf16.mxu0 %v969
  %1301 = vmatpush1.bf16.msra.mxu0 %v968
  %1302 = vmatprep.subr.bf16.mxu0 %v973
  %1303 = vmatpush1.bf16.msra.mxu0 %v972
  %1304 = vmatprep.subr.bf16.mxu0 %v977
  %1305 = vmatpush1.bf16.msra.mxu0 %v976
  %1306 = vmatprep.subr.bf16.mxu0 %v981
  %1307 = vmatpush1.bf16.msra.mxu0 %v980
  %1308 = vmatprep.subr.bf16.mxu0 %v985
  %1309 = vmatpush1.bf16.msra.mxu0 %v984
  %1310 = vmatprep.subr.bf16.mxu0 %v989
  %1311 = vmatpush1.bf16.msra.mxu0 %v988
  %1312 = vmatprep.subr.bf16.mxu0 %v993
  %1313 = vmatpush1.bf16.msra.mxu0 %v992
  %1314 = vmatprep.subr.bf16.mxu0 %v997
  %1315 = vmatpush1.bf16.msra.mxu0 %v996
  %1316 = vmatprep.subr.bf16.mxu0 %v1001
  %1317 = vmatpush1.bf16.msra.mxu0 %v1000
  %1318 = vmatprep.subr.bf16.mxu0 %v1005
  %1319 = vmatpush1.bf16.msra.mxu0 %v1004
  %1320 = vmatprep.subr.bf16.mxu0 %v1009
  %1321 = vmatpush1.bf16.msra.mxu0 %v1008
  %1322 = vmatprep.subr.bf16.mxu0 %v1013
  %1323 = vmatpush1.bf16.msra.mxu0 %v1012
  %1324 = vmatprep.subr.bf16.mxu0 %v1017
  %1325 = vmatpush1.bf16.msra.mxu0 %v1016
  %1326 = vmatprep.mubr.bf16.mxu0 %v245
  %1327 = vmatmul.mubr.bf16.gmra.mrb[0].mxu0 %v244
  %v1328 = vpop.f32.mrb[0].mxu0
  %v1329 = vadd.f32 %v1288, %v1328
  %v1330 = vpop.f32.mrb[0].mxu0
  %v1331 = vadd.f32 %v1290, %v1330
  %v1332 = vpop.f32.mrb[0].mxu0
  %v1333 = vpop.f32.mrb[0].mxu0
  %1334 = vdwg.mxu0
  %1335 = vmatprep.subr.bf16.mxu0 %v831
  %1336 = vmatpush1.bf16.msra.mxu0 %v830
  %1337 = vmatprep.subr.bf16.mxu0 %v835
  %1338 = vmatpush1.bf16.msra.mxu0 %v834
  %1339 = vmatprep.subr.bf16.mxu0 %v839
  %1340 = vmatpush1.bf16.msra.mxu0 %v838
  %1341 = vmatprep.subr.bf16.mxu0 %v843
  %1342 = vmatpush1.bf16.msra.mxu0 %v842
  %1343 = vmatprep.subr.bf16.mxu0 %v847
  %1344 = vmatpush1.bf16.msra.mxu0 %v846
  %1345 = vmatprep.subr.bf16.mxu0 %v851
  %1346 = vmatpush1.bf16.msra.mxu0 %v850
  %1347 = vmatprep.subr.bf16.mxu0 %v855
  %1348 = vmatpush1.bf16.msra.mxu0 %v854
  %1349 = vmatprep.subr.bf16.mxu0 %v859
  %1350 = vmatpush1.bf16.msra.mxu0 %v858
  %1351 = vmatprep.subr.bf16.mxu0 %v863
  %1352 = vmatpush1.bf16.msra.mxu0 %v862
  %1353 = vmatprep.subr.bf16.mxu0 %v867
  %1354 = vmatpush1.bf16.msra.mxu0 %v866
  %1355 = vmatprep.subr.bf16.mxu0 %v871
  %1356 = vmatpush1.bf16.msra.mxu0 %v870
  %1357 = vmatprep.subr.bf16.mxu0 %v875
  %1358 = vmatpush1.bf16.msra.mxu0 %v874
  %1359 = vmatprep.subr.bf16.mxu0 %v879
  %1360 = vmatpush1.bf16.msra.mxu0 %v878
  %1361 = vmatprep.subr.bf16.mxu0 %v883
  %1362 = vmatpush1.bf16.msra.mxu0 %v882
  %1363 = vmatprep.subr.bf16.mxu0 %v887
  %1364 = vmatpush1.bf16.msra.mxu0 %v886
  %1365 = vmatprep.subr.bf16.mxu0 %v891
  %1366 = vmatpush1.bf16.msra.mxu0 %v890
  %1367 = vmatprep.mubr.bf16.mxu0 %v241
  %1368 = vmatmul.mubr.bf16.gmra.mrb[0].mxu0 %v240
  %v1369 = vpop.f32.mrb[0].mxu0
  %v1370 = vadd.f32 %v222, %v1369
  %v1371 = vpop.f32.mrb[0].mxu0
  %v1372 = vadd.f32 %v226, %v1371
  %v1373 = vpop.f32.mrb[0].mxu0
  %v1374 = vpop.f32.mrb[0].mxu0
  %1375 = vdwg.mxu0
  %1376 = vmatprep.subr.bf16.mxu0 %v895
  %1377 = vmatpush1.bf16.msra.mxu0 %v894
  %1378 = vmatprep.subr.bf16.mxu0 %v899
  %1379 = vmatpush1.bf16.msra.mxu0 %v898
  %1380 = vmatprep.subr.bf16.mxu0 %v903
  %1381 = vmatpush1.bf16.msra.mxu0 %v902
  %1382 = vmatprep.subr.bf16.mxu0 %v907
  %1383 = vmatpush1.bf16.msra.mxu0 %v906
  %1384 = vmatprep.subr.bf16.mxu0 %v911
  %1385 = vmatpush1.bf16.msra.mxu0 %v910
  %1386 = vmatprep.subr.bf16.mxu0 %v915
  %1387 = vmatpush1.bf16.msra.mxu0 %v914
  %1388 = vmatprep.subr.bf16.mxu0 %v919
  %1389 = vmatpush1.bf16.msra.mxu0 %v918
  %1390 = vmatprep.subr.bf16.mxu0 %v923
  %1391 = vmatpush1.bf16.msra.mxu0 %v922
  %1392 = vmatprep.subr.bf16.mxu0 %v927
  %1393 = vmatpush1.bf16.msra.mxu0 %v926
  %1394 = vmatprep.subr.bf16.mxu0 %v931
  %1395 = vmatpush1.bf16.msra.mxu0 %v930
  %1396 = vmatprep.subr.bf16.mxu0 %v935
  %1397 = vmatpush1.bf16.msra.mxu0 %v934
  %1398 = vmatprep.subr.bf16.mxu0 %v939
  %1399 = vmatpush1.bf16.msra.mxu0 %v938
  %1400 = vmatprep.subr.bf16.mxu0 %v943
  %1401 = vmatpush1.bf16.msra.mxu0 %v942
  %1402 = vmatprep.subr.bf16.mxu0 %v947
  %1403 = vmatpush1.bf16.msra.mxu0 %v946
  %1404 = vmatprep.subr.bf16.mxu0 %v951
  %1405 = vmatpush1.bf16.msra.mxu0 %v950
  %1406 = vmatprep.subr.bf16.mxu0 %v955
  %1407 = vmatpush1.bf16.msra.mxu0 %v954
  %1408 = vmatprep.mubr.bf16.mxu0 %v243
  %1409 = vmatmul.mubr.bf16.gmra.mrb[0].mxu0 %v242
  %v1410 = vpop.f32.mrb[0].mxu0
  %v1411 = vadd.f32 %v1370, %v1410
  %v1412 = vpop.f32.mrb[0].mxu0
  %v1413 = vadd.f32 %v1372, %v1412
  %v1414 = vpop.f32.mrb[0].mxu0
  %v1415 = vpop.f32.mrb[0].mxu0
  %1416 = vdwg.mxu0
  %1417 = vmatprep.subr.bf16.mxu0 %v959
  %1418 = vmatpush1.bf16.msra.mxu0 %v958
  %1419 = vmatprep.subr.bf16.mxu0 %v963
  %1420 = vmatpush1.bf16.msra.mxu0 %v962
  %1421 = vmatprep.subr.bf16.mxu0 %v967
  %1422 = vmatpush1.bf16.msra.mxu0 %v966
  %1423 = vmatprep.subr.bf16.mxu0 %v971
  %1424 = vmatpush1.bf16.msra.mxu0 %v970
  %1425 = vmatprep.subr.bf16.mxu0 %v975
  %1426 = vmatpush1.bf16.msra.mxu0 %v974
  %1427 = vmatprep.subr.bf16.mxu0 %v979
  %1428 = vmatpush1.bf16.msra.mxu0 %v978
  %1429 = vmatprep.subr.bf16.mxu0 %v983
  %1430 = vmatpush1.bf16.msra.mxu0 %v982
  %1431 = vmatprep.subr.bf16.mxu0 %v987
  %1432 = vmatpush1.bf16.msra.mxu0 %v986
  %1433 = vmatprep.subr.bf16.mxu0 %v991
  %1434 = vmatpush1.bf16.msra.mxu0 %v990
  %1435 = vmatprep.subr.bf16.mxu0 %v995
  %1436 = vmatpush1.bf16.msra.mxu0 %v994
  %1437 = vmatprep.subr.bf16.mxu0 %v999
  %1438 = vmatpush1.bf16.msra.mxu0 %v998
  %1439 = vmatprep.subr.bf16.mxu0 %v1003
  %1440 = vmatpush1.bf16.msra.mxu0 %v1002
  %1441 = vmatprep.subr.bf16.mxu0 %v1007
  %1442 = vmatpush1.bf16.msra.mxu0 %v1006
  %1443 = vmatprep.subr.bf16.mxu0 %v1011
  %1444 = vmatpush1.bf16.msra.mxu0 %v1010
  %1445 = vmatprep.subr.bf16.mxu0 %v1015
  %1446 = vmatpush1.bf16.msra.mxu0 %v1014
  %1447 = vmatprep.subr.bf16.mxu0 %v1019
  %1448 = vmatpush1.bf16.msra.mxu0 %v1018
  %1449 = vmatprep.mubr.bf16.mxu0 %v245
  %1450 = vmatmul.mubr.bf16.gmra.mrb[0].mxu0 %v244
  %v1451 = vpop.f32.mrb[0].mxu0
  %v1452 = vadd.f32 %v1411, %v1451
  %v1453 = vpop.f32.mrb[0].mxu0
  %v1454 = vadd.f32 %v1413, %v1453
  %v1455 = vpop.f32.mrb[0].mxu0
  %v1456 = vpop.f32.mrb[0].mxu0
  %1457 = vdwg.mxu0
  %v1458 = vmax.f32 %v1329, 0.0
  %v1459 = vmax.f32 %v1331, 0.0
  %v1460 = vmax.f32 %v1452, 0.0
  %v1461 = vmax.f32 %v1454, 0.0
  %v1462 = vpack.c.bf16 %v1458, %v1458
  %v1463 = vpack.c.bf16 %v1459, %v1459
  %v1464 = vpack.c.bf16 %v1460, %v1460
  %v1465 = vpack.c.bf16 %v1461, %v1461
  %v1470 = vunpack.c.l.b16 %v1462
  %v1471 = vunpack.c.l.b16 %v1463
  %v1472 = vunpack.c.l.b16 %v1464
  %v1473 = vunpack.c.l.b16 %v1465
  %v1474 = vpack.c.b16 %v1471, %v1470
  %v1475 = vpack.c.b16 %v1473, %v1472
  %1478 = vst [vmem:[%s3] sm:$0xff] %v1474
  %1479 = vst [vmem:[%s3 + $0x8] sm:$0xff] %v1475
  // Predicated region
  $region14: #{_lambda_.8} parent=0 // pred_check
    _
  $region15: #{_lambda_.8} parent=0 // pred_check_branch
    %1481 = sbr.rel (0) target = $region17
  $region16: #{_lambda_.8} parent=0 // pred_region
    _
  $region17: #{_lambda_.8} parent=0 // pred_fallthru
    _
  // Predicated region
  $region18: #{_lambda_.8} parent=0 // pred_check
    _
  $region19: #{_lambda_.8} parent=0 // pred_check_branch
    %1483 = sbr.rel (0) target = $region21
  $region20: #{_lambda_.8} parent=0 // pred_region
    _
  $region21: #{_lambda_.8} parent=0 // pred_fallthru
    _

</llo_original>
